<compile_context>
chip_gen: v6e
topology: v6e:2x2x1
jax: 0.10.0
libtpu: 0.0.40
codegen_flags: <defaults>
</compile_context>

<pallas_src>
import functools

import jax
import jax.numpy as jnp
from jax.experimental import pallas as pl
from jax.experimental.pallas import tpu as pltpu

CH = 128          # hidden conv channels (fixed by the module)
_PAD_COL0 = 8     # sublane-aligned column offset of the activation inside the
                  # padded VMEM scratch (keeps the interior store unmasked)


def _round_up(x, m):
    return (x + m - 1) // m * m


# ----------------------------------------------------------------------------
# Fused kernel: one grid step == one image.
# ----------------------------------------------------------------------------
def _value_fused_kernel(xcol1_ref, w1_ref, b1_ref, w2_ref, b2_ref,
                        w3_ref, b3_ref, w4_ref, b4_ref, fcw_ref, fcb_ref,
                        out_ref, pad_ref, *, h, w):
    hw = h * w
    c0 = _PAD_COL0

    # ---- Conv2d(Cin,128,3,pad=1) + ReLU : single matmul, K pre-padded to 128.
    x1 = xcol1_ref[0]                                        # (HW, K1P) bf16
    a = jnp.dot(x1, w1_ref[...], preferred_element_type=jnp.float32)
    a = jnp.maximum(a + b1_ref[...], 0.0)                    # (HW, 128) f32

    # ---- Conv2d(128,128,1) + ReLU.
    a = jnp.dot(a.astype(w2_ref.dtype), w2_ref[...],
                preferred_element_type=jnp.float32)
    a = jnp.maximum(a + b2_ref[...], 0.0)                    # (HW, 128) f32

    # ---- Conv2d(128,128,3,pad=1) + ReLU.
    # Write the activation into a zero-padded VMEM scratch, build the nine
    # shifted taps in-VMEM, concatenate along K -> one K=9*128 matmul.
    pad_ref[...] = jnp.zeros_like(pad_ref)
    pad_ref[1:h + 1, c0:c0 + w, :] = a.reshape(h, w, CH)     # aligned store
    taps = []
    for dy in range(3):
        for dx in range(3):
            col = c0 - 1 + dx
            tap = pad_ref[dy:dy + h, col:col + w, :].reshape(hw, CH)
            taps.append(tap.astype(w3_ref.dtype))
    xcol3 = jnp.concatenate(taps, axis=-1)                   # (HW, 1152) bf16
    a = jnp.dot(xcol3, w3_ref[...], preferred_element_type=jnp.float32)
    a = jnp.maximum(a + b3_ref[...], 0.0)                    # (HW, 128) f32

    # ---- Conv2d(128,1,1) + ReLU, fused with Linear(H*W, 1).
    t = jnp.sum(a * w4_ref[...], axis=-1, keepdims=True)     # (HW, 1)
    y = jnp.maximum(t + b4_ref[...], 0.0)                    # (HW, 1)
    val = jnp.sum(y * fcw_ref[...], axis=0, keepdims=True) + fcb_ref[...]
    out_ref[...] = val.reshape(1, 1, 1)


# ----------------------------------------------------------------------------
# Parameter construction (deterministic, PyTorch-default-style uniform init).
# Conv weights are stored pre-reshaped for the kernel:
#   w1: (K1P, 128)   rows ordered (dy, dx, cin), zero-padded rows above 9*Cin
#   w2: (128, 128)
#   w3: (9*128, 128) rows ordered (dy, dx, cin)
#   w4: (1, 128)     (the 128->1 1x1 conv as a row vector)
#   fc_w: (H*W, 1)
# ----------------------------------------------------------------------------
def init_params(key, in_channel, in_size):
    def uniform(k, shape, fan_in):
        bound = 1.0 / jnp.sqrt(jnp.float32(fan_in))
        return jax.random.uniform(k, shape, jnp.float32, -bound, bound)

    hw = in_size * in_size
    k1 = 9 * in_channel
    k1p = max(128, _round_up(k1, 128))
    ks = jax.random.split(key, 10)
    p = {}
    w1 = uniform(ks[0], (k1, CH), k1)
    p["w1"] = jnp.pad(w1, ((0, k1p - k1), (0, 0))).astype(jnp.bfloat16)
    p["b1"] = uniform(ks[1], (1, CH), k1)
    p["w2"] = uniform(ks[2], (CH, CH), CH).astype(jnp.bfloat16)
    p["b2"] = uniform(ks[3], (1, CH), CH)
    p["w3"] = uniform(ks[4], (9 * CH, CH), 9 * CH).astype(jnp.bfloat16)
    p["b3"] = uniform(ks[5], (1, CH), 9 * CH)
    p["w4"] = uniform(ks[6], (1, CH), CH)
    p["b4"] = uniform(ks[7], (1, 1), CH)
    p["fc_w"] = uniform(ks[8], (hw, 1), hw)
    p["fc_b"] = uniform(ks[9], (1, 1), hw)
    return p


# ----------------------------------------------------------------------------
# Forward pass of Value (conv struct).
# ----------------------------------------------------------------------------
def value_forward(x, params, in_size):
    bs = x.shape[0]
    h = w = in_size
    hw = h * w
    k1p = params["w1"].shape[0]

    # JAX glue (tiny, Cin-channel only): NCHW -> NHWC, spatial pad, and the
    # layer-1 im2col (9*Cin columns) zero-padded to a lane-aligned K.
    xr = x.reshape(bs, -1, h, w).astype(jnp.float32)
    cin = xr.shape[1]
    xh = jnp.transpose(xr, (0, 2, 3, 1))                     # (bs, H, W, Cin)
    xp = jnp.pad(xh, ((0, 0), (1, 1), (1, 1), (0, 0)))
    taps = [xp[:, dy:dy + h, dx:dx + w, :]
            for dy in range(3) for dx in range(3)]
    xcol1 = jnp.concatenate(taps, axis=-1).reshape(bs, hw, 9 * cin)
    xcol1 = jnp.pad(xcol1, ((0, 0), (0, 0), (0, k1p - 9 * cin)))
    xcol1 = xcol1.astype(jnp.bfloat16)                       # (bs, HW, K1P)

    kernel = functools.partial(_value_fused_kernel, h=h, w=w)
    out = pl.pallas_call(
        kernel,
        out_shape=jax.ShapeDtypeStruct((bs, 1, 1), jnp.float32),
        grid=(bs,),
        in_specs=[
            pl.BlockSpec((1, hw, k1p), lambda b: (b, 0, 0)),   # xcol1 (per image)
            pl.BlockSpec((k1p, CH), lambda b: (0, 0)),         # w1 (loaded once)
            pl.BlockSpec((1, CH), lambda b: (0, 0)),           # b1
            pl.BlockSpec((CH, CH), lambda b: (0, 0)),          # w2
            pl.BlockSpec((1, CH), lambda b: (0, 0)),           # b2
            pl.BlockSpec((9 * CH, CH), lambda b: (0, 0)),      # w3
            pl.BlockSpec((1, CH), lambda b: (0, 0)),           # b3
            pl.BlockSpec((1, CH), lambda b: (0, 0)),           # w4
            pl.BlockSpec((1, 1), lambda b: (0, 0)),            # b4
            pl.BlockSpec((hw, 1), lambda b: (0, 0)),           # fc_w
            pl.BlockSpec((1, 1), lambda b: (0, 0)),            # fc_b
        ],
        out_specs=pl.BlockSpec((1, 1, 1), lambda b: (b, 0, 0)),
        scratch_shapes=[
            # zero-padded activation for the second 3x3 conv, resident in VMEM
            pltpu.VMEM((h + 2, w + _PAD_COL0 + 1, CH), jnp.float32),
        ],
        compiler_params=pltpu.CompilerParams(
            dimension_semantics=("parallel",)),
    )(xcol1, params["w1"], params["b1"], params["w2"], params["b2"],
      params["w3"], params["b3"], params["w4"], params["b4"],
      params["fc_w"], params["fc_b"])
    return out.reshape(bs, 1)


if __name__ == "__main__":
    BATCH, IN_CHANNEL, IN_SIZE = 2, 4, 16

    key = jax.random.PRNGKey(0)
    k_x, k_p = jax.random.split(key)
    x = jax.random.normal(k_x, (BATCH, IN_CHANNEL, IN_SIZE, IN_SIZE),
                          jnp.float32)
    params = init_params(k_p, IN_CHANNEL, IN_SIZE)

    fwd = jax.jit(functools.partial(value_forward, in_size=IN_SIZE))
    value = fwd(x, params)
    value = jax.block_until_ready(value)

    assert value.shape == (BATCH, 1), value.shape
    assert value.dtype == jnp.float32
    assert bool(jnp.all(jnp.isfinite(value)))
    print("KERNEL_OK")
</pallas_src>

<mosaic_0001>
module attributes {stable_mosaic.version = 11 : i64} {
  func.func @_value_fused_kernel(%arg0: i32, %arg1: memref<1x256x128xbf16, #tpu.memory_space<vmem>>, %arg2: memref<128x128xbf16, #tpu.memory_space<vmem>>, %arg3: memref<1x128xf32, #tpu.memory_space<vmem>>, %arg4: memref<128x128xbf16, #tpu.memory_space<vmem>>, %arg5: memref<1x128xf32, #tpu.memory_space<vmem>>, %arg6: memref<1152x128xbf16, #tpu.memory_space<vmem>>, %arg7: memref<1x128xf32, #tpu.memory_space<vmem>>, %arg8: memref<1x128xf32, #tpu.memory_space<vmem>>, %arg9: memref<1x1xf32, #tpu.memory_space<vmem>>, %arg10: memref<256x1xf32, #tpu.memory_space<vmem>>, %arg11: memref<1x1xf32, #tpu.memory_space<vmem>>, %arg12: memref<1x1x1xf32, #tpu.memory_space<vmem>>, %arg13: memref<18x25x128xf32, #tpu.memory_space<vmem>>) attributes {dimension_semantics = [#tpu.dimension_semantics<parallel>], iteration_bounds = array<i64: 2>, scalar_prefetch = 0 : i64, scratch_operands = 1 : i64, tpu.core_type = #tpu.core_type<tc>, window_params = [{transform_indices = @transform_0, window_bounds = array<i64: 1, 256, 128>}, {pipeline_mode = #tpu.pipeline_mode<synchronous>, transform_indices = @transform_1, window_bounds = array<i64: 128, 128>}, {pipeline_mode = #tpu.pipeline_mode<synchronous>, transform_indices = @transform_2, window_bounds = array<i64: 1, 128>}, {pipeline_mode = #tpu.pipeline_mode<synchronous>, transform_indices = @transform_3, window_bounds = array<i64: 128, 128>}, {pipeline_mode = #tpu.pipeline_mode<synchronous>, transform_indices = @transform_4, window_bounds = array<i64: 1, 128>}, {pipeline_mode = #tpu.pipeline_mode<synchronous>, transform_indices = @transform_5, window_bounds = array<i64: 1152, 128>}, {pipeline_mode = #tpu.pipeline_mode<synchronous>, transform_indices = @transform_6, window_bounds = array<i64: 1, 128>}, {pipeline_mode = #tpu.pipeline_mode<synchronous>, transform_indices = @transform_7, window_bounds = array<i64: 1, 128>}, {pipeline_mode = #tpu.pipeline_mode<synchronous>, transform_indices = @transform_8, window_bounds = array<i64: 1, 1>}, {pipeline_mode = #tpu.pipeline_mode<synchronous>, transform_indices = @transform_9, window_bounds = array<i64: 256, 1>}, {pipeline_mode = #tpu.pipeline_mode<synchronous>, transform_indices = @transform_10, window_bounds = array<i64: 1, 1>}, {transform_indices = @transform_11, window_bounds = array<i64: 1, 1, 1>}]} {
    %c0 = arith.constant 0 : index
    %c0_0 = arith.constant 0 : index
    %c0_1 = arith.constant 0 : index
    %0 = vector.load %arg1[%c0, %c0_0, %c0_1] : memref<1x256x128xbf16, #tpu.memory_space<vmem>>, vector<1x256x128xbf16>
    %1 = vector.shape_cast %0 : vector<1x256x128xbf16> to vector<256x128xbf16>
    %c0_2 = arith.constant 0 : index
    %c0_3 = arith.constant 0 : index
    %2 = vector.load %arg2[%c0_2, %c0_3] : memref<128x128xbf16, #tpu.memory_space<vmem>>, vector<128x128xbf16>
    %cst = arith.constant dense<0.000000e+00> : vector<256x128xf32>
    %3 = tpu.matmul %1, %2, %cst {dimension_numbers = #tpu.dot_dimension_numbers<[1], [0], [0], [1], [0, 0, 1, 1], [], []>} : vector<256x128xbf16>, vector<128x128xbf16>, vector<256x128xf32> -> vector<256x128xf32>
    %c0_4 = arith.constant 0 : index
    %c0_5 = arith.constant 0 : index
    %4 = vector.load %arg3[%c0_4, %c0_5] : memref<1x128xf32, #tpu.memory_space<vmem>>, vector<1x128xf32>
    %5 = vector.broadcast %4 : vector<1x128xf32> to vector<256x128xf32>
    %6 = arith.addf %3, %5 : vector<256x128xf32>
    %cst_6 = arith.constant 0.000000e+00 : f32
    %7 = vector.broadcast %cst_6 : f32 to vector<256x128xf32>
    %8 = arith.maximumf %6, %7 : vector<256x128xf32>
    %9 = arith.truncf %8 : vector<256x128xf32> to vector<256x128xbf16>
    %c0_7 = arith.constant 0 : index
    %c0_8 = arith.constant 0 : index
    %10 = vector.load %arg4[%c0_7, %c0_8] : memref<128x128xbf16, #tpu.memory_space<vmem>>, vector<128x128xbf16>
    %cst_9 = arith.constant dense<0.000000e+00> : vector<256x128xf32>
    %11 = tpu.matmul %9, %10, %cst_9 {dimension_numbers = #tpu.dot_dimension_numbers<[1], [0], [0], [1], [0, 0, 1, 1], [], []>} : vector<256x128xbf16>, vector<128x128xbf16>, vector<256x128xf32> -> vector<256x128xf32>
    %c0_10 = arith.constant 0 : index
    %c0_11 = arith.constant 0 : index
    %12 = vector.load %arg5[%c0_10, %c0_11] : memref<1x128xf32, #tpu.memory_space<vmem>>, vector<1x128xf32>
    %13 = vector.broadcast %12 : vector<1x128xf32> to vector<256x128xf32>
    %14 = arith.addf %11, %13 : vector<256x128xf32>
    %cst_12 = arith.constant 0.000000e+00 : f32
    %15 = vector.broadcast %cst_12 : f32 to vector<256x128xf32>
    %16 = arith.maximumf %14, %15 : vector<256x128xf32>
    %cst_13 = arith.constant 0.000000e+00 : f32
    %17 = vector.broadcast %cst_13 : f32 to vector<18x25x128xf32>
    %c0_14 = arith.constant 0 : index
    %c0_15 = arith.constant 0 : index
    %c0_16 = arith.constant 0 : index
    %18 = vector.load %arg13[%c0_14, %c0_15, %c0_16] : memref<18x25x128xf32, #tpu.memory_space<vmem>>, vector<18x25x128xf32>
    tpu.vector_store %arg13[%c0_14, %c0_15, %c0_16], %17 {strides = array<i32>} : memref<18x25x128xf32, #tpu.memory_space<vmem>>, vector<18x25x128xf32>,
    %19 = vector.shape_cast %16 : vector<256x128xf32> to vector<16x16x128xf32>
    %c1 = arith.constant 1 : index
    %c8 = arith.constant 8 : index
    %c0_17 = arith.constant 0 : index
    %20 = vector.load %arg13[%c1, %c8, %c0_17] : memref<18x25x128xf32, #tpu.memory_space<vmem>>, vector<16x16x128xf32>
    tpu.vector_store %arg13[%c1, %c8, %c0_17], %19 {strides = array<i32>} : memref<18x25x128xf32, #tpu.memory_space<vmem>>, vector<16x16x128xf32>,
    %c0_18 = arith.constant 0 : index
    %c7 = arith.constant 7 : index
    %c0_19 = arith.constant 0 : index
    %21 = vector.load %arg13[%c0_18, %c7, %c0_19] : memref<18x25x128xf32, #tpu.memory_space<vmem>>, vector<16x16x128xf32>
    %22 = vector.shape_cast %21 : vector<16x16x128xf32> to vector<256x128xf32>
    %23 = arith.truncf %22 : vector<256x128xf32> to vector<256x128xbf16>
    %c0_20 = arith.constant 0 : index
    %c8_21 = arith.constant 8 : index
    %c0_22 = arith.constant 0 : index
    %24 = vector.load %arg13[%c0_20, %c8_21, %c0_22] : memref<18x25x128xf32, #tpu.memory_space<vmem>>, vector<16x16x128xf32>
    %25 = vector.shape_cast %24 : vector<16x16x128xf32> to vector<256x128xf32>
    %26 = arith.truncf %25 : vector<256x128xf32> to vector<256x128xbf16>
    %c0_23 = arith.constant 0 : index
    %c9 = arith.constant 9 : index
    %c0_24 = arith.constant 0 : index
    %27 = vector.load %arg13[%c0_23, %c9, %c0_24] : memref<18x25x128xf32, #tpu.memory_space<vmem>>, vector<16x16x128xf32>
    %28 = vector.shape_cast %27 : vector<16x16x128xf32> to vector<256x128xf32>
    %29 = arith.truncf %28 : vector<256x128xf32> to vector<256x128xbf16>
    %c1_25 = arith.constant 1 : index
    %c7_26 = arith.constant 7 : index
    %c0_27 = arith.constant 0 : index
    %30 = vector.load %arg13[%c1_25, %c7_26, %c0_27] : memref<18x25x128xf32, #tpu.memory_space<vmem>>, vector<16x16x128xf32>
    %31 = vector.shape_cast %30 : vector<16x16x128xf32> to vector<256x128xf32>
    %32 = arith.truncf %31 : vector<256x128xf32> to vector<256x128xbf16>
    %c1_28 = arith.constant 1 : index
    %c8_29 = arith.constant 8 : index
    %c0_30 = arith.constant 0 : index
    %33 = vector.load %arg13[%c1_28, %c8_29, %c0_30] : memref<18x25x128xf32, #tpu.memory_space<vmem>>, vector<16x16x128xf32>
    %34 = vector.shape_cast %33 : vector<16x16x128xf32> to vector<256x128xf32>
    %35 = arith.truncf %34 : vector<256x128xf32> to vector<256x128xbf16>
    %c1_31 = arith.constant 1 : index
    %c9_32 = arith.constant 9 : index
    %c0_33 = arith.constant 0 : index
    %36 = vector.load %arg13[%c1_31, %c9_32, %c0_33] : memref<18x25x128xf32, #tpu.memory_space<vmem>>, vector<16x16x128xf32>
    %37 = vector.shape_cast %36 : vector<16x16x128xf32> to vector<256x128xf32>
    %38 = arith.truncf %37 : vector<256x128xf32> to vector<256x128xbf16>
    %c2 = arith.constant 2 : index
    %c7_34 = arith.constant 7 : index
    %c0_35 = arith.constant 0 : index
    %39 = vector.load %arg13[%c2, %c7_34, %c0_35] : memref<18x25x128xf32, #tpu.memory_space<vmem>>, vector<16x16x128xf32>
    %40 = vector.shape_cast %39 : vector<16x16x128xf32> to vector<256x128xf32>
    %41 = arith.truncf %40 : vector<256x128xf32> to vector<256x128xbf16>
    %c2_36 = arith.constant 2 : index
    %c8_37 = arith.constant 8 : index
    %c0_38 = arith.constant 0 : index
    %42 = vector.load %arg13[%c2_36, %c8_37, %c0_38] : memref<18x25x128xf32, #tpu.memory_space<vmem>>, vector<16x16x128xf32>
    %43 = vector.shape_cast %42 : vector<16x16x128xf32> to vector<256x128xf32>
    %44 = arith.truncf %43 : vector<256x128xf32> to vector<256x128xbf16>
    %c2_39 = arith.constant 2 : index
    %c9_40 = arith.constant 9 : index
    %c0_41 = arith.constant 0 : index
    %45 = vector.load %arg13[%c2_39, %c9_40, %c0_41] : memref<18x25x128xf32, #tpu.memory_space<vmem>>, vector<16x16x128xf32>
    %46 = vector.shape_cast %45 : vector<16x16x128xf32> to vector<256x128xf32>
    %47 = arith.truncf %46 : vector<256x128xf32> to vector<256x128xbf16>
    %48 = tpu.concatenate %23, %26, %29, %32, %35, %38, %41, %44, %47 in 1 : vector<256x128xbf16>, vector<256x128xbf16>, vector<256x128xbf16>, vector<256x128xbf16>, vector<256x128xbf16>, vector<256x128xbf16>, vector<256x128xbf16>, vector<256x128xbf16>, vector<256x128xbf16> -> vector<256x1152xbf16>
    %c0_42 = arith.constant 0 : index
    %c0_43 = arith.constant 0 : index
    %49 = vector.load %arg6[%c0_42, %c0_43] : memref<1152x128xbf16, #tpu.memory_space<vmem>>, vector<1152x128xbf16>
    %cst_44 = arith.constant dense<0.000000e+00> : vector<256x128xf32>
    %50 = tpu.matmul %48, %49, %cst_44 {dimension_numbers = #tpu.dot_dimension_numbers<[1], [0], [0], [1], [0, 0, 1, 1], [], []>} : vector<256x1152xbf16>, vector<1152x128xbf16>, vector<256x128xf32> -> vector<256x128xf32>
    %c0_45 = arith.constant 0 : index
    %c0_46 = arith.constant 0 : index
    %51 = vector.load %arg7[%c0_45, %c0_46] : memref<1x128xf32, #tpu.memory_space<vmem>>, vector<1x128xf32>
    %52 = vector.broadcast %51 : vector<1x128xf32> to vector<256x128xf32>
    %53 = arith.addf %50, %52 : vector<256x128xf32>
    %cst_47 = arith.constant 0.000000e+00 : f32
    %54 = vector.broadcast %cst_47 : f32 to vector<256x128xf32>
    %55 = arith.maximumf %53, %54 : vector<256x128xf32>
    %c0_48 = arith.constant 0 : index
    %c0_49 = arith.constant 0 : index
    %56 = vector.load %arg8[%c0_48, %c0_49] : memref<1x128xf32, #tpu.memory_space<vmem>>, vector<1x128xf32>
    %57 = vector.broadcast %56 : vector<1x128xf32> to vector<256x128xf32>
    %58 = arith.mulf %55, %57 : vector<256x128xf32>
    %cst_50 = arith.constant dense<0.000000e+00> : vector<256xf32>
    %59 = vector.multi_reduction <add>, %58, %cst_50 [1] : vector<256x128xf32> to vector<256xf32>
    %60 = vector.shape_cast %59 : vector<256xf32> to vector<256x1xf32>
    %c0_51 = arith.constant 0 : index
    %c0_52 = arith.constant 0 : index
    %61 = vector.load %arg9[%c0_51, %c0_52] : memref<1x1xf32, #tpu.memory_space<vmem>>, vector<1x1xf32>
    %62 = vector.broadcast %61 : vector<1x1xf32> to vector<256x1xf32>
    %63 = arith.addf %60, %62 : vector<256x1xf32>
    %cst_53 = arith.constant 0.000000e+00 : f32
    %64 = vector.broadcast %cst_53 : f32 to vector<256x1xf32>
    %65 = arith.maximumf %63, %64 : vector<256x1xf32>
    %c0_54 = arith.constant 0 : index
    %c0_55 = arith.constant 0 : index
    %66 = vector.load %arg10[%c0_54, %c0_55] : memref<256x1xf32, #tpu.memory_space<vmem>>, vector<256x1xf32>
    %67 = arith.mulf %65, %66 : vector<256x1xf32>
    %cst_56 = arith.constant dense<0.000000e+00> : vector<1xf32>
    %68 = vector.multi_reduction <add>, %67, %cst_56 [0] : vector<256x1xf32> to vector<1xf32>
    %69 = vector.shape_cast %68 : vector<1xf32> to vector<1x1xf32>
    %c0_57 = arith.constant 0 : index
    %c0_58 = arith.constant 0 : index
    %70 = vector.load %arg11[%c0_57, %c0_58] : memref<1x1xf32, #tpu.memory_space<vmem>>, vector<1x1xf32>
    %71 = arith.addf %69, %70 : vector<1x1xf32>
    %72 = vector.shape_cast %71 : vector<1x1xf32> to vector<1x1x1xf32>
    %c0_59 = arith.constant 0 : index
    %c0_60 = arith.constant 0 : index
    %c0_61 = arith.constant 0 : index
    %73 = vector.load %arg12[%c0_59, %c0_60, %c0_61] : memref<1x1x1xf32, #tpu.memory_space<vmem>>, vector<1x1x1xf32>
    tpu.vector_store %arg12[%c0_59, %c0_60, %c0_61], %72 {strides = array<i32>} : memref<1x1x1xf32, #tpu.memory_space<vmem>>, vector<1x1x1xf32>,
    return
  }
  func.func @transform_0(%arg0: i32) -> (i32, i32, i32) {
    %c0_i32 = arith.constant 0 : i32
    %c0_i32_0 = arith.constant 0 : i32
    %c0_i32_1 = arith.constant 0 : i32
    return %arg0, %c0_i32, %c0_i32_0 : i32, i32, i32
  }
  func.func @transform_1(%arg0: i32) -> (i32, i32) {
    %c0_i32 = arith.constant 0 : i32
    %c0_i32_0 = arith.constant 0 : i32
    %c0_i32_1 = arith.constant 0 : i32
    return %c0_i32, %c0_i32_0 : i32, i32
  }
  func.func @transform_2(%arg0: i32) -> (i32, i32) {
    %c0_i32 = arith.constant 0 : i32
    %c0_i32_0 = arith.constant 0 : i32
    %c0_i32_1 = arith.constant 0 : i32
    return %c0_i32, %c0_i32_0 : i32, i32
  }
  func.func @transform_3(%arg0: i32) -> (i32, i32) {
    %c0_i32 = arith.constant 0 : i32
    %c0_i32_0 = arith.constant 0 : i32
    %c0_i32_1 = arith.constant 0 : i32
    return %c0_i32, %c0_i32_0 : i32, i32
  }
  func.func @transform_4(%arg0: i32) -> (i32, i32) {
    %c0_i32 = arith.constant 0 : i32
    %c0_i32_0 = arith.constant 0 : i32
    %c0_i32_1 = arith.constant 0 : i32
    return %c0_i32, %c0_i32_0 : i32, i32
  }
  func.func @transform_5(%arg0: i32) -> (i32, i32) {
    %c0_i32 = arith.constant 0 : i32
    %c0_i32_0 = arith.constant 0 : i32
    %c0_i32_1 = arith.constant 0 : i32
    return %c0_i32, %c0_i32_0 : i32, i32
  }
  func.func @transform_6(%arg0: i32) -> (i32, i32) {
    %c0_i32 = arith.constant 0 : i32
    %c0_i32_0 = arith.constant 0 : i32
    %c0_i32_1 = arith.constant 0 : i32
    return %c0_i32, %c0_i32_0 : i32, i32
  }
  func.func @transform_7(%arg0: i32) -> (i32, i32) {
    %c0_i32 = arith.constant 0 : i32
    %c0_i32_0 = arith.constant 0 : i32
    %c0_i32_1 = arith.constant 0 : i32
    return %c0_i32, %c0_i32_0 : i32, i32
  }
  func.func @transform_8(%arg0: i32) -> (i32, i32) {
    %c0_i32 = arith.constant 0 : i32
    %c0_i32_0 = arith.constant 0 : i32
    %c0_i32_1 = arith.constant 0 : i32
    return %c0_i32, %c0_i32_0 : i32, i32
  }
  func.func @transform_9(%arg0: i32) -> (i32, i32) {
    %c0_i32 = arith.constant 0 : i32
    %c0_i32_0 = arith.constant 0 : i32
    %c0_i32_1 = arith.constant 0 : i32
    return %c0_i32, %c0_i32_0 : i32, i32
  }
  func.func @transform_10(%arg0: i32) -> (i32, i32) {
    %c0_i32 = arith.constant 0 : i32
    %c0_i32_0 = arith.constant 0 : i32
    %c0_i32_1 = arith.constant 0 : i32
    return %c0_i32, %c0_i32_0 : i32, i32
  }
  func.func @transform_11(%arg0: i32) -> (i32, i32, i32) {
    %c0_i32 = arith.constant 0 : i32
    %c0_i32_0 = arith.constant 0 : i32
    %c0_i32_1 = arith.constant 0 : i32
    return %arg0, %c0_i32, %c0_i32_0 : i32, i32, i32
  }
}

</mosaic_0001>

<llo_original>
// kernel: value_forward.1
$region0: #{value_forward.1}
  #allocation0 [shape = 'u32[]', space=smem, size = 0x4, offset = 0x4, fixed_abs, tag = 'smem constant byte address 0x4 - core index']
  #allocation1 [shape = 'u32[144,128]{1,0:T(1,128)}', space=vmem, size = 0x12000, scoped, tag = 'internal scratch']
  #allocation2 [shape = 'f32[18,25,128]{2,1,0:T(8,128)}', space=vmem, size = 0x48000, scoped, tag = 'scratch operand']
  #allocation3 [shape = 'f32[1,1]{1,0:T(1,128)S(1)}', space=vmem, size = 0x200, scoped, tag = 'scoped memory for value_forward.1']
  #allocation4 [shape = 'f32[1,1]{1,0:T(1,128)S(1)}', space=vmem, size = 0x200, scoped, tag = 'scoped memory for value_forward.1']
  %s0 = inlined_call_operand.vmem [shape: bf16[2,256,128], index: 0, kind: input, shape index: {}]
  %s1 = inlined_call_operand.vmem [shape: bf16[128,128], index: 1, kind: input, shape index: {}]
  %s2 = inlined_call_operand.vmem [shape: f32[1,128], index: 2, kind: input, shape index: {}]
  %s3 = inlined_call_operand.vmem [shape: bf16[128,128], index: 3, kind: input, shape index: {}]
  %s4 = inlined_call_operand.vmem [shape: f32[1,128], index: 4, kind: input, shape index: {}]
  %s5 = inlined_call_operand.vmem [shape: bf16[1152,128], index: 5, kind: input, shape index: {}]
  %s6 = inlined_call_operand.vmem [shape: f32[1,128], index: 6, kind: input, shape index: {}]
  %s7 = inlined_call_operand.vmem [shape: f32[1,128], index: 7, kind: input, shape index: {}]
  %s8 = inlined_call_operand.<no memory space> [shape: f32[1,1], index: 8, kind: input, shape index: {}]
  %s9 = inlined_call_operand.vmem [shape: f32[256,1], index: 9, kind: input, shape index: {}]
  %s10 = inlined_call_operand.<no memory space> [shape: f32[1,1], index: 10, kind: input, shape index: {}]
  %s11 = inlined_call_operand.vmem [shape: f32[2,1,1], index: 11, kind: output, shape index: {}]
  %s12 = sld [smem:[#allocation0]]
  $region77: #{value_forward.1} parent=0
    _
  %s14 = ssub.s32 1, %s12
  %s15 = scalar_select 0, %s14, %s12
  %v16 = vstv %s8
  %17 = vst [vmem:[#allocation3] sm:$0x1] %v16
  %v18 = vstv %s10
  %19 = vst [vmem:[#allocation4] sm:$0x1] %v18
  loop: start=0, step=1, limit=4
  $region2: #{value_forward.1} parent=0 // loop_pre_header
    _
  $region3: #{value_forward.1} parent=0 // loop_header
    %s21 = sphi 0, %s25
    %p22 = scmp.ge.s32.totalorder %s21, 4
    %s31 = sphi 0, %s33
    %s34 = sphi 0, %s31
    %s35 = sphi 0, %s34
    %s51 = sphi 0, %s35
    %s55 = sphi 0, %s55
    %s57 = sphi 0, %s55
    %s58 = sphi 0, %s57
    %s72 = sphi 0, %s58
    %s76 = sphi 0, %s76
    %s78 = sphi 0, %s76
    %s79 = sphi 0, %s78
    %s93 = sphi 0, %s79
    %s97 = sphi 0, %s97
    %s99 = sphi 0, %s97
    %s100 = sphi 0, %s99
    %s114 = sphi 0, %s100
    %s118 = sphi 0, %s118
    %s120 = sphi 0, %s118
    %s121 = sphi 0, %s120
    %s135 = sphi 0, %s121
    %s139 = sphi 0, %s139
    %s141 = sphi 0, %s139
    %s142 = sphi 0, %s141
    %s156 = sphi 0, %s142
    %s160 = sphi 0, %s160
    %s162 = sphi 0, %s160
    %s163 = sphi 0, %s162
    %s177 = sphi 0, %s163
    %s181 = sphi 0, %s181
    %s183 = sphi 0, %s181
    %s184 = sphi 0, %s183
    %s198 = sphi 0, %s184
    %s202 = sphi 0, %s202
    %s204 = sphi 0, %s202
    %s205 = sphi 0, %s204
    %s219 = sphi 0, %s205
    %s223 = sphi 0, %s223
    %s225 = sphi 0, %s223
    %s226 = sphi 0, %s225
    %s240 = sphi 0, %s226
    %s244 = sphi 0, %s244
    %s246 = sphi 0, %s244
    %s247 = sphi 0, %s246
    %s261 = sphi 0, %s247
    %s267 = sphi 0, %s269
    %s270 = sphi 0, %s267
    %s271 = sphi 0, %s270
    %s287 = sphi 0, %s271
  $region4: #{value_forward.1} parent=0 // loop_header_branch
    %24 = sbr.rel (%p22) target = $region8
  $region5: #{value_forward.1} parent=0 // loop_body
    %s26 = ssub.s32 %s21, 1
    %s27 = ssub.s32 %s21, 2
    %s28 = sadd.s32 %s21, 1
    %s29 = ssub.s32 %s21, %s28
    %p30 = scmp.eq.s32.totalorder %s29, 0
    %s32 = sadd.s32 %s31, 1
    %s33 = scalar_select %p30, %s31, %s32
    %p36 = pneg %p30
    %p37 = scmp.eq.s32.totalorder %s21, 1
    %p38 = por %p36, %p37
    %p39 = scmp.ne.s32.totalorder %s31, %s34
    %p40 = scmp.eq.s32.totalorder %s21, 0
    %p41 = por %p39, %p40
    %p42 = scmp.ne.s32.totalorder %s31, %s34
    %p43 = scmp.eq.s32.totalorder %s26, 1
    %p44 = por %p42, %p43
    %p45 = scmp.ne.s32.totalorder %s34, %s35
    %p46 = scmp.eq.s32.totalorder %s26, 0
    %p47 = por %p45, %p46
    %p48 = scmp.ne.s32.totalorder %s34, %s35
    %p49 = scmp.eq.s32.totalorder %s27, 1
    %p50 = por %p48, %p49
    %p52 = scmp.ne.s32.totalorder %s35, %s51
    %p53 = scmp.eq.s32.totalorder %s27, 0
    %p54 = por %p52, %p53
    %s56 = sadd.s32 %s55, 1
    %p59 = scmp.eq.s32.totalorder %s21, 1
    %p60 = scmp.ne.s32.totalorder %s55, %s57
    %p61 = scmp.eq.s32.totalorder %s21, 0
    %p62 = por %p60, %p61
    %p63 = scmp.ne.s32.totalorder %s55, %s57
    %p64 = scmp.eq.s32.totalorder %s26, 1
    %p65 = por %p63, %p64
    %p66 = scmp.ne.s32.totalorder %s57, %s58
    %p67 = scmp.eq.s32.totalorder %s26, 0
    %p68 = por %p66, %p67
    %p69 = scmp.ne.s32.totalorder %s57, %s58
    %p70 = scmp.eq.s32.totalorder %s27, 1
    %p71 = por %p69, %p70
    %p73 = scmp.ne.s32.totalorder %s58, %s72
    %p74 = scmp.eq.s32.totalorder %s27, 0
    %p75 = por %p73, %p74
    %s77 = sadd.s32 %s76, 1
    %p80 = scmp.eq.s32.totalorder %s21, 1
    %p81 = scmp.ne.s32.totalorder %s76, %s78
    %p82 = scmp.eq.s32.totalorder %s21, 0
    %p83 = por %p81, %p82
    %p84 = scmp.ne.s32.totalorder %s76, %s78
    %p85 = scmp.eq.s32.totalorder %s26, 1
    %p86 = por %p84, %p85
    %p87 = scmp.ne.s32.totalorder %s78, %s79
    %p88 = scmp.eq.s32.totalorder %s26, 0
    %p89 = por %p87, %p88
    %p90 = scmp.ne.s32.totalorder %s78, %s79
    %p91 = scmp.eq.s32.totalorder %s27, 1
    %p92 = por %p90, %p91
    %p94 = scmp.ne.s32.totalorder %s79, %s93
    %p95 = scmp.eq.s32.totalorder %s27, 0
    %p96 = por %p94, %p95
    %s98 = sadd.s32 %s97, 1
    %p101 = scmp.eq.s32.totalorder %s21, 1
    %p102 = scmp.ne.s32.totalorder %s97, %s99
    %p103 = scmp.eq.s32.totalorder %s21, 0
    %p104 = por %p102, %p103
    %p105 = scmp.ne.s32.totalorder %s97, %s99
    %p106 = scmp.eq.s32.totalorder %s26, 1
    %p107 = por %p105, %p106
    %p108 = scmp.ne.s32.totalorder %s99, %s100
    %p109 = scmp.eq.s32.totalorder %s26, 0
    %p110 = por %p108, %p109
    %p111 = scmp.ne.s32.totalorder %s99, %s100
    %p112 = scmp.eq.s32.totalorder %s27, 1
    %p113 = por %p111, %p112
    %p115 = scmp.ne.s32.totalorder %s100, %s114
    %p116 = scmp.eq.s32.totalorder %s27, 0
    %p117 = por %p115, %p116
    %s119 = sadd.s32 %s118, 1
    %p122 = scmp.eq.s32.totalorder %s21, 1
    %p123 = scmp.ne.s32.totalorder %s118, %s120
    %p124 = scmp.eq.s32.totalorder %s21, 0
    %p125 = por %p123, %p124
    %p126 = scmp.ne.s32.totalorder %s118, %s120
    %p127 = scmp.eq.s32.totalorder %s26, 1
    %p128 = por %p126, %p127
    %p129 = scmp.ne.s32.totalorder %s120, %s121
    %p130 = scmp.eq.s32.totalorder %s26, 0
    %p131 = por %p129, %p130
    %p132 = scmp.ne.s32.totalorder %s120, %s121
    %p133 = scmp.eq.s32.totalorder %s27, 1
    %p134 = por %p132, %p133
    %p136 = scmp.ne.s32.totalorder %s121, %s135
    %p137 = scmp.eq.s32.totalorder %s27, 0
    %p138 = por %p136, %p137
    %s140 = sadd.s32 %s139, 1
    %p143 = scmp.eq.s32.totalorder %s21, 1
    %p144 = scmp.ne.s32.totalorder %s139, %s141
    %p145 = scmp.eq.s32.totalorder %s21, 0
    %p146 = por %p144, %p145
    %p147 = scmp.ne.s32.totalorder %s139, %s141
    %p148 = scmp.eq.s32.totalorder %s26, 1
    %p149 = por %p147, %p148
    %p150 = scmp.ne.s32.totalorder %s141, %s142
    %p151 = scmp.eq.s32.totalorder %s26, 0
    %p152 = por %p150, %p151
    %p153 = scmp.ne.s32.totalorder %s141, %s142
    %p154 = scmp.eq.s32.totalorder %s27, 1
    %p155 = por %p153, %p154
    %p157 = scmp.ne.s32.totalorder %s142, %s156
    %p158 = scmp.eq.s32.totalorder %s27, 0
    %p159 = por %p157, %p158
    %s161 = sadd.s32 %s160, 1
    %p164 = scmp.eq.s32.totalorder %s21, 1
    %p165 = scmp.ne.s32.totalorder %s160, %s162
    %p166 = scmp.eq.s32.totalorder %s21, 0
    %p167 = por %p165, %p166
    %p168 = scmp.ne.s32.totalorder %s160, %s162
    %p169 = scmp.eq.s32.totalorder %s26, 1
    %p170 = por %p168, %p169
    %p171 = scmp.ne.s32.totalorder %s162, %s163
    %p172 = scmp.eq.s32.totalorder %s26, 0
    %p173 = por %p171, %p172
    %p174 = scmp.ne.s32.totalorder %s162, %s163
    %p175 = scmp.eq.s32.totalorder %s27, 1
    %p176 = por %p174, %p175
    %p178 = scmp.ne.s32.totalorder %s163, %s177
    %p179 = scmp.eq.s32.totalorder %s27, 0
    %p180 = por %p178, %p179
    %s182 = sadd.s32 %s181, 1
    %p185 = scmp.eq.s32.totalorder %s21, 1
    %p186 = scmp.ne.s32.totalorder %s181, %s183
    %p187 = scmp.eq.s32.totalorder %s21, 0
    %p188 = por %p186, %p187
    %p189 = scmp.ne.s32.totalorder %s181, %s183
    %p190 = scmp.eq.s32.totalorder %s26, 1
    %p191 = por %p189, %p190
    %p192 = scmp.ne.s32.totalorder %s183, %s184
    %p193 = scmp.eq.s32.totalorder %s26, 0
    %p194 = por %p192, %p193
    %p195 = scmp.ne.s32.totalorder %s183, %s184
    %p196 = scmp.eq.s32.totalorder %s27, 1
    %p197 = por %p195, %p196
    %p199 = scmp.ne.s32.totalorder %s184, %s198
    %p200 = scmp.eq.s32.totalorder %s27, 0
    %p201 = por %p199, %p200
    %s203 = sadd.s32 %s202, 1
    %p206 = scmp.eq.s32.totalorder %s21, 1
    %p207 = scmp.ne.s32.totalorder %s202, %s204
    %p208 = scmp.eq.s32.totalorder %s21, 0
    %p209 = por %p207, %p208
    %p210 = scmp.ne.s32.totalorder %s202, %s204
    %p211 = scmp.eq.s32.totalorder %s26, 1
    %p212 = por %p210, %p211
    %p213 = scmp.ne.s32.totalorder %s204, %s205
    %p214 = scmp.eq.s32.totalorder %s26, 0
    %p215 = por %p213, %p214
    %p216 = scmp.ne.s32.totalorder %s204, %s205
    %p217 = scmp.eq.s32.totalorder %s27, 1
    %p218 = por %p216, %p217
    %p220 = scmp.ne.s32.totalorder %s205, %s219
    %p221 = scmp.eq.s32.totalorder %s27, 0
    %p222 = por %p220, %p221
    %s224 = sadd.s32 %s223, 1
    %p227 = scmp.eq.s32.totalorder %s21, 1
    %p228 = scmp.ne.s32.totalorder %s223, %s225
    %p229 = scmp.eq.s32.totalorder %s21, 0
    %p230 = por %p228, %p229
    %p231 = scmp.ne.s32.totalorder %s223, %s225
    %p232 = scmp.eq.s32.totalorder %s26, 1
    %p233 = por %p231, %p232
    %p234 = scmp.ne.s32.totalorder %s225, %s226
    %p235 = scmp.eq.s32.totalorder %s26, 0
    %p236 = por %p234, %p235
    %p237 = scmp.ne.s32.totalorder %s225, %s226
    %p238 = scmp.eq.s32.totalorder %s27, 1
    %p239 = por %p237, %p238
    %p241 = scmp.ne.s32.totalorder %s226, %s240
    %p242 = scmp.eq.s32.totalorder %s27, 0
    %p243 = por %p241, %p242
    %s245 = sadd.s32 %s244, 1
    %p248 = scmp.eq.s32.totalorder %s21, 1
    %p249 = scmp.ne.s32.totalorder %s244, %s246
    %p250 = scmp.eq.s32.totalorder %s21, 0
    %p251 = por %p249, %p250
    %p252 = scmp.ne.s32.totalorder %s244, %s246
    %p253 = scmp.eq.s32.totalorder %s26, 1
    %p254 = por %p252, %p253
    %p255 = scmp.ne.s32.totalorder %s246, %s247
    %p256 = scmp.eq.s32.totalorder %s26, 0
    %p257 = por %p255, %p256
    %p258 = scmp.ne.s32.totalorder %s246, %s247
    %p259 = scmp.eq.s32.totalorder %s27, 1
    %p260 = por %p258, %p259
    %p262 = scmp.ne.s32.totalorder %s247, %s261
    %p263 = scmp.eq.s32.totalorder %s27, 0
    %p264 = por %p262, %p263
    %s265 = ssub.s32 %s21, %s28
    %p266 = scmp.eq.s32.totalorder %s265, 0
    %s268 = sadd.s32 %s267, 1
    %s269 = scalar_select %p266, %s267, %s268
    %p272 = pneg %p266
    %p273 = scmp.eq.s32.totalorder %s21, 1
    %p274 = por %p272, %p273
    %p275 = scmp.ne.s32.totalorder %s267, %s270
    %p276 = scmp.eq.s32.totalorder %s21, 0
    %p277 = por %p275, %p276
    %p278 = scmp.ne.s32.totalorder %s267, %s270
    %p279 = scmp.eq.s32.totalorder %s26, 1
    %p280 = por %p278, %p279
    %p281 = scmp.ne.s32.totalorder %s270, %s271
    %p282 = scmp.eq.s32.totalorder %s26, 0
    %p283 = por %p281, %p282
    %p284 = scmp.ne.s32.totalorder %s270, %s271
    %p285 = scmp.eq.s32.totalorder %s27, 1
    %p286 = por %p284, %p285
    %p288 = scmp.ne.s32.totalorder %s271, %s287
    %p289 = scmp.eq.s32.totalorder %s27, 0
    %p290 = por %p288, %p289
    %p291 = scmp.le.s32.totalorder 1, %s21
    %p292 = scmp.lt.s32.totalorder %s21, 3
    %p293 = pnand %p291, %p292
    %p294 = pneg %p293
    // Predicated region
    $region9: #{value_forward.1} parent=5 // pred_check
      _
    $region10: #{value_forward.1} parent=5 // pred_check_branch
      %296 = sbr.rel (%p293) target = $region12
    $region11: #{value_forward.1} parent=5 // pred_region
      %s297 = ssub.s32 %s21, 1
      // Predicated region
      $region13: #{value_forward.1} parent=11 // pred_check
        %p298 = pneg %p68
      $region14: #{value_forward.1} parent=11 // pred_check_branch
        %300 = sbr.rel (%p298) target = $region16
      $region15: #{value_forward.1} parent=11 // pred_region
        _
      $region16: #{value_forward.1} parent=11 // pred_fallthru
        _
      // Predicated region
      $region17: #{value_forward.1} parent=11 // pred_check
        %p301 = pneg %p89
      $region18: #{value_forward.1} parent=11 // pred_check_branch
        %303 = sbr.rel (%p301) target = $region20
      $region19: #{value_forward.1} parent=11 // pred_region
        _
      $region20: #{value_forward.1} parent=11 // pred_fallthru
        _
      // Predicated region
      $region21: #{value_forward.1} parent=11 // pred_check
        %p304 = pneg %p110
      $region22: #{value_forward.1} parent=11 // pred_check_branch
        %306 = sbr.rel (%p304) target = $region24
      $region23: #{value_forward.1} parent=11 // pred_region
        _
      $region24: #{value_forward.1} parent=11 // pred_fallthru
        _
      // Predicated region
      $region25: #{value_forward.1} parent=11 // pred_check
        %p307 = pneg %p131
      $region26: #{value_forward.1} parent=11 // pred_check_branch
        %309 = sbr.rel (%p307) target = $region28
      $region27: #{value_forward.1} parent=11 // pred_region
        _
      $region28: #{value_forward.1} parent=11 // pred_fallthru
        _
      // Predicated region
      $region29: #{value_forward.1} parent=11 // pred_check
        %p310 = pneg %p152
      $region30: #{value_forward.1} parent=11 // pred_check_branch
        %312 = sbr.rel (%p310) target = $region32
      $region31: #{value_forward.1} parent=11 // pred_region
        _
      $region32: #{value_forward.1} parent=11 // pred_fallthru
        _
      // Predicated region
      $region33: #{value_forward.1} parent=11 // pred_check
        %p313 = pneg %p173
      $region34: #{value_forward.1} parent=11 // pred_check_branch
        %315 = sbr.rel (%p313) target = $region36
      $region35: #{value_forward.1} parent=11 // pred_region
        _
      $region36: #{value_forward.1} parent=11 // pred_fallthru
        _
      // Predicated region
      $region37: #{value_forward.1} parent=11 // pred_check
        %p316 = pneg %p194
      $region38: #{value_forward.1} parent=11 // pred_check_branch
        %318 = sbr.rel (%p316) target = $region40
      $region39: #{value_forward.1} parent=11 // pred_region
        _
      $region40: #{value_forward.1} parent=11 // pred_fallthru
        _
      // Predicated region
      $region41: #{value_forward.1} parent=11 // pred_check
        %p319 = pneg %p215
      $region42: #{value_forward.1} parent=11 // pred_check_branch
        %321 = sbr.rel (%p319) target = $region44
      $region43: #{value_forward.1} parent=11 // pred_region
        _
      $region44: #{value_forward.1} parent=11 // pred_fallthru
        _
      // Predicated region
      $region45: #{value_forward.1} parent=11 // pred_check
        %p322 = pneg %p236
      $region46: #{value_forward.1} parent=11 // pred_check_branch
        %324 = sbr.rel (%p322) target = $region48
      $region47: #{value_forward.1} parent=11 // pred_region
        _
      $region48: #{value_forward.1} parent=11 // pred_fallthru
        _
      // Predicated region
      $region49: #{value_forward.1} parent=11 // pred_check
        %p325 = pneg %p257
      $region50: #{value_forward.1} parent=11 // pred_check_branch
        %327 = sbr.rel (%p325) target = $region52
      $region51: #{value_forward.1} parent=11 // pred_region
        _
      $region52: #{value_forward.1} parent=11 // pred_fallthru
        _
    $region12: #{value_forward.1} parent=5 // pred_fallthru
      _
    %p328 = scmp.lt.s32.totalorder %s21, 2
    // Predicated region
    $region53: #{value_forward.1} parent=5 // pred_check
      %p329 = pneg %p328
    $region54: #{value_forward.1} parent=5 // pred_check_branch
      %331 = sbr.rel (%p329) target = $region56
    $region55: #{value_forward.1} parent=5 // pred_region
      // Predicated region
      $region57: #{value_forward.1} parent=55 // pred_check
        %p332 = pneg %p41
      $region58: #{value_forward.1} parent=55 // pred_check_branch
        %334 = sbr.rel (%p332) target = $region60
      $region59: #{value_forward.1} parent=55 // pred_region
        %p335 = scmp.lt.s32.totalorder %s21, 1
        %s336 = scalar_select %p335, %s21, 1
        %s337 = smul.addr %s336, 32
        %s338 = smul.addr %s337, 4
        %s339 = scalar_lea.vmem %s0, %s338
      $region60: #{value_forward.1} parent=55 // pred_fallthru
        _
    $region56: #{value_forward.1} parent=5 // pred_fallthru
      _
    %p340 = scmp.le.s32.totalorder 1, %s21
    %p341 = scmp.lt.s32.totalorder %s21, 3
    %p342 = pnand %p340, %p341
    %p343 = pneg %p342
    // Predicated region
    $region61: #{value_forward.1} parent=5 // pred_check
      _
    $region62: #{value_forward.1} parent=5 // pred_check_branch
      %345 = sbr.rel (%p342) target = $region64
    $region63: #{value_forward.1} parent=5 // pred_region
      %s346 = ssub.s32 %s21, 1
      %p347 = scmp.lt.s32.totalorder %s26, 1
      %s348 = scalar_select %p347, %s26, 1
      %s349 = smul.addr %s348, 32
      %s350 = smul.addr %s349, 4
      %s351 = scalar_lea.vmem %s0, %s350
      %p352 = pneg %p47
      %p353 = pneg %p44
      %p354 = pneg %p68
      %p355 = pneg %p65
      %p356 = pneg %p89
      %p357 = pneg %p86
      %p358 = pneg %p110
      %p359 = pneg %p107
      %p360 = pneg %p131
      %p361 = pneg %p128
      %p362 = pneg %p152
      %p363 = pneg %p149
      %p364 = pneg %p173
      %p365 = pneg %p170
      %p366 = pneg %p194
      %p367 = pneg %p191
      %p368 = pneg %p215
      %p369 = pneg %p212
      %p370 = pneg %p236
      %p371 = pneg %p233
      %p372 = pneg %p257
      %p373 = pneg %p254
      %p374 = pneg %p283
      %p375 = pneg %p280
      %p376 = scmp.lt.s32.totalorder %s26, 1
      %s377 = scalar_select %p376, %s26, 1
      %s378 = scalar_lea.vmem %s11, %s377
      %p379 = scmp.lt.s32.totalorder %s26, 1
      %s380 = scalar_select %p379, %s26, 1
      %s381 = smul.addr %s380, 32
      %s382 = smul.addr %s381, 4
      %s383 = scalar_lea.vmem %s0, %s382
      %p384 = scmp.lt.s32.totalorder %s26, 1
      %s385 = scalar_select %p384, %s26, 1
      %s386 = scalar_lea.vmem %s11, %s385
      %v388 = vld [vmem:[%s383] sm:$0xf]
      %v389 = vld [vmem:[%s383 + $0x4] sm:$0xf]
      %v390 = vld [vmem:[%s383 + $0x8] sm:$0xf]
      %v391 = vld [vmem:[%s383 + $0xc] sm:$0xf]
      %v392 = vld [vmem:[%s383 + $0x10] sm:$0xf]
      %v393 = vld [vmem:[%s383 + $0x14] sm:$0xf]
      %v394 = vld [vmem:[%s383 + $0x18] sm:$0xf]
      %v395 = vld [vmem:[%s383 + $0x1c] sm:$0xf]
      %v396 = vld [vmem:[%s383 + $0x20] sm:$0xf]
      %v397 = vld [vmem:[%s383 + $0x24] sm:$0xf]
      %v398 = vld [vmem:[%s383 + $0x28] sm:$0xf]
      %v399 = vld [vmem:[%s383 + $0x2c] sm:$0xf]
      %v400 = vld [vmem:[%s383 + $0x30] sm:$0xf]
      %v401 = vld [vmem:[%s383 + $0x34] sm:$0xf]
      %v402 = vld [vmem:[%s383 + $0x38] sm:$0xf]
      %v403 = vld [vmem:[%s383 + $0x3c] sm:$0xf]
      %v404 = vld [vmem:[%s383 + $0x40] sm:$0xf]
      %v405 = vld [vmem:[%s383 + $0x44] sm:$0xf]
      %v406 = vld [vmem:[%s383 + $0x48] sm:$0xf]
      %v407 = vld [vmem:[%s383 + $0x4c] sm:$0xf]
      %v408 = vld [vmem:[%s383 + $0x50] sm:$0xf]
      %v409 = vld [vmem:[%s383 + $0x54] sm:$0xf]
      %v410 = vld [vmem:[%s383 + $0x58] sm:$0xf]
      %v411 = vld [vmem:[%s383 + $0x5c] sm:$0xf]
      %v412 = vld [vmem:[%s383 + $0x60] sm:$0xf]
      %v413 = vld [vmem:[%s383 + $0x64] sm:$0xf]
      %v414 = vld [vmem:[%s383 + $0x68] sm:$0xf]
      %v415 = vld [vmem:[%s383 + $0x6c] sm:$0xf]
      %v416 = vld [vmem:[%s383 + $0x70] sm:$0xf]
      %v417 = vld [vmem:[%s383 + $0x74] sm:$0xf]
      %v418 = vld [vmem:[%s383 + $0x78] sm:$0xf]
      %v419 = vld [vmem:[%s383 + $0x7c] sm:$0xf]
      %v420 = vld [vmem:[%s1] sm:$0xf]
      %v421 = vld [vmem:[%s1 + $0x4] sm:$0xf]
      %v422 = vld [vmem:[%s1 + $0x8] sm:$0xf]
      %v423 = vld [vmem:[%s1 + $0xc] sm:$0xf]
      %v424 = vld [vmem:[%s1 + $0x10] sm:$0xf]
      %v425 = vld [vmem:[%s1 + $0x14] sm:$0xf]
      %v426 = vld [vmem:[%s1 + $0x18] sm:$0xf]
      %v427 = vld [vmem:[%s1 + $0x1c] sm:$0xf]
      %v428 = vld [vmem:[%s1 + $0x20] sm:$0xf]
      %v429 = vld [vmem:[%s1 + $0x24] sm:$0xf]
      %v430 = vld [vmem:[%s1 + $0x28] sm:$0xf]
      %v431 = vld [vmem:[%s1 + $0x2c] sm:$0xf]
      %v432 = vld [vmem:[%s1 + $0x30] sm:$0xf]
      %v433 = vld [vmem:[%s1 + $0x34] sm:$0xf]
      %v434 = vld [vmem:[%s1 + $0x38] sm:$0xf]
      %v435 = vld [vmem:[%s1 + $0x3c] sm:$0xf]
      %v436 = vld [vmem:[%s2] sm:$0x1]
      %v438 = vlaneseq
      %v439 = vshrl.u32 %v438, 7
      %v440 = vsub.s32 0, %v439
      %v441 = vrot.slane %v436, %v440
      %v475 = vunpack.c.l.b16 %v388
      %v476 = vunpack.c.l.b16 %v389
      %v477 = vunpack.c.l.b16 %v390
      %v478 = vunpack.c.l.b16 %v391
      %v479 = vunpack.c.l.b16 %v392
      %v480 = vunpack.c.l.b16 %v393
      %v481 = vunpack.c.l.b16 %v394
      %v482 = vunpack.c.l.b16 %v395
      %v483 = vunpack.c.l.b16 %v396
      %v484 = vunpack.c.l.b16 %v397
      %v485 = vunpack.c.l.b16 %v398
      %v486 = vunpack.c.l.b16 %v399
      %v487 = vunpack.c.l.b16 %v400
      %v488 = vunpack.c.l.b16 %v401
      %v489 = vunpack.c.l.b16 %v402
      %v490 = vunpack.c.l.b16 %v403
      %v491 = vunpack.c.l.b16 %v404
      %v492 = vunpack.c.l.b16 %v405
      %v493 = vunpack.c.l.b16 %v406
      %v494 = vunpack.c.l.b16 %v407
      %v495 = vunpack.c.l.b16 %v408
      %v496 = vunpack.c.l.b16 %v409
      %v497 = vunpack.c.l.b16 %v410
      %v498 = vunpack.c.l.b16 %v411
      %v499 = vunpack.c.l.b16 %v412
      %v500 = vunpack.c.l.b16 %v413
      %v501 = vunpack.c.l.b16 %v414
      %v502 = vunpack.c.l.b16 %v415
      %v503 = vunpack.c.l.b16 %v416
      %v504 = vunpack.c.l.b16 %v417
      %v505 = vunpack.c.l.b16 %v418
      %v506 = vunpack.c.l.b16 %v419
      %v507 = vpack.c.b16 %v476, %v475
      %v508 = vpack.c.b16 %v478, %v477
      %v509 = vpack.c.b16 %v480, %v479
      %v510 = vpack.c.b16 %v482, %v481
      %v511 = vpack.c.b16 %v484, %v483
      %v512 = vpack.c.b16 %v486, %v485
      %v513 = vpack.c.b16 %v488, %v487
      %v514 = vpack.c.b16 %v490, %v489
      %v515 = vpack.c.b16 %v492, %v491
      %v516 = vpack.c.b16 %v494, %v493
      %v517 = vpack.c.b16 %v496, %v495
      %v518 = vpack.c.b16 %v498, %v497
      %v519 = vpack.c.b16 %v500, %v499
      %v520 = vpack.c.b16 %v502, %v501
      %v521 = vpack.c.b16 %v504, %v503
      %v522 = vpack.c.b16 %v506, %v505
      %v555 = vunpack.c.l.b16 %v420
      %v556 = vunpack.c.l.b16 %v421
      %v557 = vunpack.c.l.b16 %v422
      %v558 = vunpack.c.l.b16 %v423
      %v559 = vunpack.c.l.b16 %v424
      %v560 = vunpack.c.l.b16 %v425
      %v561 = vunpack.c.l.b16 %v426
      %v562 = vunpack.c.l.b16 %v427
      %v563 = vunpack.c.l.b16 %v428
      %v564 = vunpack.c.l.b16 %v429
      %v565 = vunpack.c.l.b16 %v430
      %v566 = vunpack.c.l.b16 %v431
      %v567 = vunpack.c.l.b16 %v432
      %v568 = vunpack.c.l.b16 %v433
      %v569 = vunpack.c.l.b16 %v434
      %v570 = vunpack.c.l.b16 %v435
      %v571 = vpack.c.b16 %v556, %v555
      %v572 = vpack.c.b16 %v558, %v557
      %v573 = vpack.c.b16 %v560, %v559
      %v574 = vpack.c.b16 %v562, %v561
      %v575 = vpack.c.b16 %v564, %v563
      %v576 = vpack.c.b16 %v566, %v565
      %v577 = vpack.c.b16 %v568, %v567
      %v578 = vpack.c.b16 %v570, %v569
      %587 = vmatprep.subr.bf16.mxu0 0
      %588 = vmatpush1.bf16.msra.mxu0 %v578
      %589 = vmatprep.subr.bf16.mxu0 0
      %590 = vmatpush1.bf16.msra.mxu0 %v577
      %591 = vmatprep.subr.bf16.mxu0 0
      %592 = vmatpush1.bf16.msra.mxu0 %v576
      %593 = vmatprep.subr.bf16.mxu0 0
      %594 = vmatpush1.bf16.msra.mxu0 %v575
      %595 = vmatprep.subr.bf16.mxu0 0
      %596 = vmatpush1.bf16.msra.mxu0 %v574
      %597 = vmatprep.subr.bf16.mxu0 0
      %598 = vmatpush1.bf16.msra.mxu0 %v573
      %599 = vmatprep.subr.bf16.mxu0 0
      %600 = vmatpush1.bf16.msra.mxu0 %v572
      %601 = vmatprep.subr.bf16.mxu0 0
      %602 = vmatpush1.bf16.msra.mxu0 %v571
      %603 = vmatprep.subr.bf16.mxu0 0
      %604 = vmatpush2.bf16.msra.mxu0 0
      %605 = vmatprep.subr.bf16.mxu0 0
      %606 = vmatpush2.bf16.msra.mxu0 0
      %607 = vmatprep.subr.bf16.mxu0 0
      %608 = vmatpush2.bf16.msra.mxu0 0
      %609 = vmatprep.subr.bf16.mxu0 0
      %610 = vmatpush2.bf16.msra.mxu0 0
      %611 = vmatprep.subr.bf16.mxu0 0
      %612 = vmatpush2.bf16.msra.mxu0 0
      %613 = vmatprep.subr.bf16.mxu0 0
      %614 = vmatpush2.bf16.msra.mxu0 0
      %615 = vmatprep.subr.bf16.mxu0 0
      %616 = vmatpush2.bf16.msra.mxu0 0
      %617 = vmatprep.subr.bf16.mxu0 0
      %618 = vmatpush2.bf16.msra.mxu0 0
      %619 = vmatprep.mubr.bf16.mxu0 0
      %620 = vmatmul.mubr.bf16.gmra.mxu0 %v507
      %v621 = vpop.f32.mrf.mxu0
      %v622 = vadd.f32 %v441, %v621
      %v623 = vpop.f32.mrf.mxu0
      %v624 = vpop.f32.mrf.mxu0
      %v625 = vadd.f32 %v441, %v624
      %v626 = vpop.f32.mrf.mxu0
      %627 = vmatprep.mubr.bf16.mxu0 0
      %628 = vmatmul.mubr.bf16.gmra.mxu0 %v508
      %v629 = vpop.f32.mrf.mxu0
      %v630 = vadd.f32 %v441, %v629
      %v631 = vpop.f32.mrf.mxu0
      %v632 = vpop.f32.mrf.mxu0
      %v633 = vadd.f32 %v441, %v632
      %v634 = vpop.f32.mrf.mxu0
      %635 = vmatprep.mubr.bf16.mxu0 0
      %636 = vmatmul.mubr.bf16.gmra.mxu0 %v509
      %v637 = vpop.f32.mrf.mxu0
      %v638 = vadd.f32 %v441, %v637
      %v639 = vpop.f32.mrf.mxu0
      %v640 = vpop.f32.mrf.mxu0
      %v641 = vadd.f32 %v441, %v640
      %v642 = vpop.f32.mrf.mxu0
      %643 = vmatprep.mubr.bf16.mxu0 0
      %644 = vmatmul.mubr.bf16.gmra.mxu0 %v510
      %v645 = vpop.f32.mrf.mxu0
      %v646 = vadd.f32 %v441, %v645
      %v647 = vpop.f32.mrf.mxu0
      %v648 = vpop.f32.mrf.mxu0
      %v649 = vadd.f32 %v441, %v648
      %v650 = vpop.f32.mrf.mxu0
      %651 = vmatprep.mubr.bf16.mxu0 0
      %652 = vmatmul.mubr.bf16.gmra.mxu0 %v511
      %v653 = vpop.f32.mrf.mxu0
      %v654 = vadd.f32 %v441, %v653
      %v655 = vpop.f32.mrf.mxu0
      %v656 = vpop.f32.mrf.mxu0
      %v657 = vadd.f32 %v441, %v656
      %v658 = vpop.f32.mrf.mxu0
      %659 = vmatprep.mubr.bf16.mxu0 0
      %660 = vmatmul.mubr.bf16.gmra.mxu0 %v512
      %v661 = vpop.f32.mrf.mxu0
      %v662 = vadd.f32 %v441, %v661
      %v663 = vpop.f32.mrf.mxu0
      %v664 = vpop.f32.mrf.mxu0
      %v665 = vadd.f32 %v441, %v664
      %v666 = vpop.f32.mrf.mxu0
      %667 = vmatprep.mubr.bf16.mxu0 0
      %668 = vmatmul.mubr.bf16.gmra.mxu0 %v513
      %v669 = vpop.f32.mrf.mxu0
      %v670 = vadd.f32 %v441, %v669
      %v671 = vpop.f32.mrf.mxu0
      %v672 = vpop.f32.mrf.mxu0
      %v673 = vadd.f32 %v441, %v672
      %v674 = vpop.f32.mrf.mxu0
      %675 = vmatprep.mubr.bf16.mxu0 0
      %676 = vmatmul.mubr.bf16.gmra.mxu0 %v514
      %v677 = vpop.f32.mrf.mxu0
      %v678 = vadd.f32 %v441, %v677
      %v679 = vpop.f32.mrf.mxu0
      %v680 = vpop.f32.mrf.mxu0
      %v681 = vadd.f32 %v441, %v680
      %v682 = vpop.f32.mrf.mxu0
      %683 = vmatprep.mubr.bf16.mxu0 0
      %684 = vmatmul.mubr.bf16.gmra.mxu0 %v515
      %v685 = vpop.f32.mrf.mxu0
      %v686 = vadd.f32 %v441, %v685
      %v687 = vpop.f32.mrf.mxu0
      %v688 = vpop.f32.mrf.mxu0
      %v689 = vadd.f32 %v441, %v688
      %v690 = vpop.f32.mrf.mxu0
      %691 = vmatprep.mubr.bf16.mxu0 0
      %692 = vmatmul.mubr.bf16.gmra.mxu0 %v516
      %v693 = vpop.f32.mrf.mxu0
      %v694 = vadd.f32 %v441, %v693
      %v695 = vpop.f32.mrf.mxu0
      %v696 = vpop.f32.mrf.mxu0
      %v697 = vadd.f32 %v441, %v696
      %v698 = vpop.f32.mrf.mxu0
      %699 = vmatprep.mubr.bf16.mxu0 0
      %700 = vmatmul.mubr.bf16.gmra.mxu0 %v517
      %v701 = vpop.f32.mrf.mxu0
      %v702 = vadd.f32 %v441, %v701
      %v703 = vpop.f32.mrf.mxu0
      %v704 = vpop.f32.mrf.mxu0
      %v705 = vadd.f32 %v441, %v704
      %v706 = vpop.f32.mrf.mxu0
      %707 = vmatprep.mubr.bf16.mxu0 0
      %708 = vmatmul.mubr.bf16.gmra.mxu0 %v518
      %v709 = vpop.f32.mrf.mxu0
      %v710 = vadd.f32 %v441, %v709
      %v711 = vpop.f32.mrf.mxu0
      %v712 = vpop.f32.mrf.mxu0
      %v713 = vadd.f32 %v441, %v712
      %v714 = vpop.f32.mrf.mxu0
      %715 = vmatprep.mubr.bf16.mxu0 0
      %716 = vmatmul.mubr.bf16.gmra.mxu0 %v519
      %v717 = vpop.f32.mrf.mxu0
      %v718 = vadd.f32 %v441, %v717
      %v719 = vpop.f32.mrf.mxu0
      %v720 = vpop.f32.mrf.mxu0
      %v721 = vadd.f32 %v441, %v720
      %v722 = vpop.f32.mrf.mxu0
      %723 = vmatprep.mubr.bf16.mxu0 0
      %724 = vmatmul.mubr.bf16.gmra.mxu0 %v520
      %v725 = vpop.f32.mrf.mxu0
      %v726 = vadd.f32 %v441, %v725
      %v727 = vpop.f32.mrf.mxu0
      %v728 = vpop.f32.mrf.mxu0
      %v729 = vadd.f32 %v441, %v728
      %v730 = vpop.f32.mrf.mxu0
      %731 = vmatprep.mubr.bf16.mxu0 0
      %732 = vmatmul.mubr.bf16.gmra.mxu0 %v521
      %v733 = vpop.f32.mrf.mxu0
      %v734 = vadd.f32 %v441, %v733
      %v735 = vpop.f32.mrf.mxu0
      %v736 = vpop.f32.mrf.mxu0
      %v737 = vadd.f32 %v441, %v736
      %v738 = vpop.f32.mrf.mxu0
      %739 = vmatprep.mubr.bf16.mxu0 0
      %740 = vmatmul.mubr.bf16.gmra.mxu0 %v522
      %v741 = vpop.f32.mrf.mxu0
      %v742 = vadd.f32 %v441, %v741
      %v743 = vpop.f32.mrf.mxu0
      %v744 = vpop.f32.mrf.mxu0
      %v745 = vadd.f32 %v441, %v744
      %v746 = vpop.f32.mrf.mxu0
      %747 = vdwg.mxu0
      %v748 = vmax.f32 %v622, 0.0
      %v749 = vmax.f32 %v625, 0.0
      %v750 = vmax.f32 %v630, 0.0
      %v751 = vmax.f32 %v633, 0.0
      %v752 = vmax.f32 %v638, 0.0
      %v753 = vmax.f32 %v641, 0.0
      %v754 = vmax.f32 %v646, 0.0
      %v755 = vmax.f32 %v649, 0.0
      %v756 = vmax.f32 %v654, 0.0
      %v757 = vmax.f32 %v657, 0.0
      %v758 = vmax.f32 %v662, 0.0
      %v759 = vmax.f32 %v665, 0.0
      %v760 = vmax.f32 %v670, 0.0
      %v761 = vmax.f32 %v673, 0.0
      %v762 = vmax.f32 %v678, 0.0
      %v763 = vmax.f32 %v681, 0.0
      %v764 = vmax.f32 %v686, 0.0
      %v765 = vmax.f32 %v689, 0.0
      %v766 = vmax.f32 %v694, 0.0
      %v767 = vmax.f32 %v697, 0.0
      %v768 = vmax.f32 %v702, 0.0
      %v769 = vmax.f32 %v705, 0.0
      %v770 = vmax.f32 %v710, 0.0
      %v771 = vmax.f32 %v713, 0.0
      %v772 = vmax.f32 %v718, 0.0
      %v773 = vmax.f32 %v721, 0.0
      %v774 = vmax.f32 %v726, 0.0
      %v775 = vmax.f32 %v729, 0.0
      %v776 = vmax.f32 %v734, 0.0
      %v777 = vmax.f32 %v737, 0.0
      %v778 = vmax.f32 %v742, 0.0
      %v779 = vmax.f32 %v745, 0.0
      %v780 = vpack.c.bf16 %v749, %v748
      %v781 = vpack.c.bf16 %v751, %v750
      %v782 = vpack.c.bf16 %v753, %v752
      %v783 = vpack.c.bf16 %v755, %v754
      %v784 = vpack.c.bf16 %v757, %v756
      %v785 = vpack.c.bf16 %v759, %v758
      %v786 = vpack.c.bf16 %v761, %v760
      %v787 = vpack.c.bf16 %v763, %v762
      %v788 = vpack.c.bf16 %v765, %v764
      %v789 = vpack.c.bf16 %v767, %v766
      %v790 = vpack.c.bf16 %v769, %v768
      %v791 = vpack.c.bf16 %v771, %v770
      %v792 = vpack.c.bf16 %v773, %v772
      %v793 = vpack.c.bf16 %v775, %v774
      %v794 = vpack.c.bf16 %v777, %v776
      %v795 = vpack.c.bf16 %v779, %v778
      %v796 = vld [vmem:[%s3] sm:$0xf]
      %v797 = vld [vmem:[%s3 + $0x4] sm:$0xf]
      %v798 = vld [vmem:[%s3 + $0x8] sm:$0xf]
      %v799 = vld [vmem:[%s3 + $0xc] sm:$0xf]
      %v800 = vld [vmem:[%s3 + $0x10] sm:$0xf]
      %v801 = vld [vmem:[%s3 + $0x14] sm:$0xf]
      %v802 = vld [vmem:[%s3 + $0x18] sm:$0xf]
      %v803 = vld [vmem:[%s3 + $0x1c] sm:$0xf]
      %v804 = vld [vmem:[%s3 + $0x20] sm:$0xf]
      %v805 = vld [vmem:[%s3 + $0x24] sm:$0xf]
      %v806 = vld [vmem:[%s3 + $0x28] sm:$0xf]
      %v807 = vld [vmem:[%s3 + $0x2c] sm:$0xf]
      %v808 = vld [vmem:[%s3 + $0x30] sm:$0xf]
      %v809 = vld [vmem:[%s3 + $0x34] sm:$0xf]
      %v810 = vld [vmem:[%s3 + $0x38] sm:$0xf]
      %v811 = vld [vmem:[%s3 + $0x3c] sm:$0xf]
      %v812 = vld [vmem:[%s4] sm:$0x1]
      %v814 = vlaneseq
      %v815 = vshrl.u32 %v814, 7
      %v816 = vsub.s32 0, %v815
      %v817 = vrot.slane %v812, %v816
      %v835 = vunpack.c.l.b16 %v796
      %v836 = vunpack.c.l.b16 %v797
      %v837 = vunpack.c.l.b16 %v798
      %v838 = vunpack.c.l.b16 %v799
      %v839 = vunpack.c.l.b16 %v800
      %v840 = vunpack.c.l.b16 %v801
      %v841 = vunpack.c.l.b16 %v802
      %v842 = vunpack.c.l.b16 %v803
      %v843 = vunpack.c.l.b16 %v804
      %v844 = vunpack.c.l.b16 %v805
      %v845 = vunpack.c.l.b16 %v806
      %v846 = vunpack.c.l.b16 %v807
      %v847 = vunpack.c.l.b16 %v808
      %v848 = vunpack.c.l.b16 %v809
      %v849 = vunpack.c.l.b16 %v810
      %v850 = vunpack.c.l.b16 %v811
      %v851 = vpack.c.b16 %v836, %v835
      %v852 = vpack.c.b16 %v838, %v837
      %v853 = vpack.c.b16 %v840, %v839
      %v854 = vpack.c.b16 %v842, %v841
      %v855 = vpack.c.b16 %v844, %v843
      %v856 = vpack.c.b16 %v846, %v845
      %v857 = vpack.c.b16 %v848, %v847
      %v858 = vpack.c.b16 %v850, %v849
      %867 = vmatprep.subr.bf16.mxu0 0
      %868 = vmatpush1.bf16.msra.mxu0 %v858
      %869 = vmatprep.subr.bf16.mxu0 0
      %870 = vmatpush1.bf16.msra.mxu0 %v857
      %871 = vmatprep.subr.bf16.mxu0 0
      %872 = vmatpush1.bf16.msra.mxu0 %v856
      %873 = vmatprep.subr.bf16.mxu0 0
      %874 = vmatpush1.bf16.msra.mxu0 %v855
      %875 = vmatprep.subr.bf16.mxu0 0
      %876 = vmatpush1.bf16.msra.mxu0 %v854
      %877 = vmatprep.subr.bf16.mxu0 0
      %878 = vmatpush1.bf16.msra.mxu0 %v853
      %879 = vmatprep.subr.bf16.mxu0 0
      %880 = vmatpush1.bf16.msra.mxu0 %v852
      %881 = vmatprep.subr.bf16.mxu0 0
      %882 = vmatpush1.bf16.msra.mxu0 %v851
      %883 = vmatprep.subr.bf16.mxu0 0
      %884 = vmatpush2.bf16.msra.mxu0 0
      %885 = vmatprep.subr.bf16.mxu0 0
      %886 = vmatpush2.bf16.msra.mxu0 0
      %887 = vmatprep.subr.bf16.mxu0 0
      %888 = vmatpush2.bf16.msra.mxu0 0
      %889 = vmatprep.subr.bf16.mxu0 0
      %890 = vmatpush2.bf16.msra.mxu0 0
      %891 = vmatprep.subr.bf16.mxu0 0
      %892 = vmatpush2.bf16.msra.mxu0 0
      %893 = vmatprep.subr.bf16.mxu0 0
      %894 = vmatpush2.bf16.msra.mxu0 0
      %895 = vmatprep.subr.bf16.mxu0 0
      %896 = vmatpush2.bf16.msra.mxu0 0
      %897 = vmatprep.subr.bf16.mxu0 0
      %898 = vmatpush2.bf16.msra.mxu0 0
      %899 = vmatprep.mubr.bf16.mxu0 0
      %900 = vmatmul.mubr.bf16.gmra.mxu0 %v780
      %v901 = vpop.f32.mrf.mxu0
      %v902 = vadd.f32 %v817, %v901
      %v903 = vpop.f32.mrf.mxu0
      %v904 = vpop.f32.mrf.mxu0
      %v905 = vadd.f32 %v817, %v904
      %v906 = vpop.f32.mrf.mxu0
      %907 = vmatprep.mubr.bf16.mxu0 0
      %908 = vmatmul.mubr.bf16.gmra.mxu0 %v781
      %v909 = vpop.f32.mrf.mxu0
      %v910 = vadd.f32 %v817, %v909
      %v911 = vpop.f32.mrf.mxu0
      %v912 = vpop.f32.mrf.mxu0
      %v913 = vadd.f32 %v817, %v912
      %v914 = vpop.f32.mrf.mxu0
      %915 = vmatprep.mubr.bf16.mxu0 0
      %916 = vmatmul.mubr.bf16.gmra.mxu0 %v782
      %v917 = vpop.f32.mrf.mxu0
      %v918 = vadd.f32 %v817, %v917
      %v919 = vpop.f32.mrf.mxu0
      %v920 = vpop.f32.mrf.mxu0
      %v921 = vadd.f32 %v817, %v920
      %v922 = vpop.f32.mrf.mxu0
      %923 = vmatprep.mubr.bf16.mxu0 0
      %924 = vmatmul.mubr.bf16.gmra.mxu0 %v783
      %v925 = vpop.f32.mrf.mxu0
      %v926 = vadd.f32 %v817, %v925
      %v927 = vpop.f32.mrf.mxu0
      %v928 = vpop.f32.mrf.mxu0
      %v929 = vadd.f32 %v817, %v928
      %v930 = vpop.f32.mrf.mxu0
      %931 = vmatprep.mubr.bf16.mxu0 0
      %932 = vmatmul.mubr.bf16.gmra.mxu0 %v784
      %v933 = vpop.f32.mrf.mxu0
      %v934 = vadd.f32 %v817, %v933
      %v935 = vpop.f32.mrf.mxu0
      %v936 = vpop.f32.mrf.mxu0
      %v937 = vadd.f32 %v817, %v936
      %v938 = vpop.f32.mrf.mxu0
      %939 = vmatprep.mubr.bf16.mxu0 0
      %940 = vmatmul.mubr.bf16.gmra.mxu0 %v785
      %v941 = vpop.f32.mrf.mxu0
      %v942 = vadd.f32 %v817, %v941
      %v943 = vpop.f32.mrf.mxu0
      %v944 = vpop.f32.mrf.mxu0
      %v945 = vadd.f32 %v817, %v944
      %v946 = vpop.f32.mrf.mxu0
      %947 = vmatprep.mubr.bf16.mxu0 0
      %948 = vmatmul.mubr.bf16.gmra.mxu0 %v786
      %v949 = vpop.f32.mrf.mxu0
      %v950 = vadd.f32 %v817, %v949
      %v951 = vpop.f32.mrf.mxu0
      %v952 = vpop.f32.mrf.mxu0
      %v953 = vadd.f32 %v817, %v952
      %v954 = vpop.f32.mrf.mxu0
      %955 = vmatprep.mubr.bf16.mxu0 0
      %956 = vmatmul.mubr.bf16.gmra.mxu0 %v787
      %v957 = vpop.f32.mrf.mxu0
      %v958 = vadd.f32 %v817, %v957
      %v959 = vpop.f32.mrf.mxu0
      %v960 = vpop.f32.mrf.mxu0
      %v961 = vadd.f32 %v817, %v960
      %v962 = vpop.f32.mrf.mxu0
      %963 = vmatprep.mubr.bf16.mxu0 0
      %964 = vmatmul.mubr.bf16.gmra.mxu0 %v788
      %v965 = vpop.f32.mrf.mxu0
      %v966 = vadd.f32 %v817, %v965
      %v967 = vpop.f32.mrf.mxu0
      %v968 = vpop.f32.mrf.mxu0
      %v969 = vadd.f32 %v817, %v968
      %v970 = vpop.f32.mrf.mxu0
      %971 = vmatprep.mubr.bf16.mxu0 0
      %972 = vmatmul.mubr.bf16.gmra.mxu0 %v789
      %v973 = vpop.f32.mrf.mxu0
      %v974 = vadd.f32 %v817, %v973
      %v975 = vpop.f32.mrf.mxu0
      %v976 = vpop.f32.mrf.mxu0
      %v977 = vadd.f32 %v817, %v976
      %v978 = vpop.f32.mrf.mxu0
      %979 = vmatprep.mubr.bf16.mxu0 0
      %980 = vmatmul.mubr.bf16.gmra.mxu0 %v790
      %v981 = vpop.f32.mrf.mxu0
      %v982 = vadd.f32 %v817, %v981
      %v983 = vpop.f32.mrf.mxu0
      %v984 = vpop.f32.mrf.mxu0
      %v985 = vadd.f32 %v817, %v984
      %v986 = vpop.f32.mrf.mxu0
      %987 = vmatprep.mubr.bf16.mxu0 0
      %988 = vmatmul.mubr.bf16.gmra.mxu0 %v791
      %v989 = vpop.f32.mrf.mxu0
      %v990 = vadd.f32 %v817, %v989
      %v991 = vpop.f32.mrf.mxu0
      %v992 = vpop.f32.mrf.mxu0
      %v993 = vadd.f32 %v817, %v992
      %v994 = vpop.f32.mrf.mxu0
      %995 = vmatprep.mubr.bf16.mxu0 0
      %996 = vmatmul.mubr.bf16.gmra.mxu0 %v792
      %v997 = vpop.f32.mrf.mxu0
      %v998 = vadd.f32 %v817, %v997
      %v999 = vpop.f32.mrf.mxu0
      %v1000 = vpop.f32.mrf.mxu0
      %v1001 = vadd.f32 %v817, %v1000
      %v1002 = vpop.f32.mrf.mxu0
      %1003 = vmatprep.mubr.bf16.mxu0 0
      %1004 = vmatmul.mubr.bf16.gmra.mxu0 %v793
      %v1005 = vpop.f32.mrf.mxu0
      %v1006 = vadd.f32 %v817, %v1005
      %v1007 = vpop.f32.mrf.mxu0
      %v1008 = vpop.f32.mrf.mxu0
      %v1009 = vadd.f32 %v817, %v1008
      %v1010 = vpop.f32.mrf.mxu0
      %1011 = vmatprep.mubr.bf16.mxu0 0
      %1012 = vmatmul.mubr.bf16.gmra.mxu0 %v794
      %v1013 = vpop.f32.mrf.mxu0
      %v1014 = vadd.f32 %v817, %v1013
      %v1015 = vpop.f32.mrf.mxu0
      %v1016 = vpop.f32.mrf.mxu0
      %v1017 = vadd.f32 %v817, %v1016
      %v1018 = vpop.f32.mrf.mxu0
      %1019 = vmatprep.mubr.bf16.mxu0 0
      %1020 = vmatmul.mubr.bf16.gmra.mxu0 %v795
      %v1021 = vpop.f32.mrf.mxu0
      %v1022 = vadd.f32 %v817, %v1021
      %v1023 = vpop.f32.mrf.mxu0
      %v1024 = vpop.f32.mrf.mxu0
      %v1025 = vadd.f32 %v817, %v1024
      %v1026 = vpop.f32.mrf.mxu0
      %1027 = vdwg.mxu0
      %v1028 = vmax.f32 %v902, 0.0
      %v1029 = vmax.f32 %v905, 0.0
      %v1030 = vmax.f32 %v910, 0.0
      %v1031 = vmax.f32 %v913, 0.0
      %v1032 = vmax.f32 %v918, 0.0
      %v1033 = vmax.f32 %v921, 0.0
      %v1034 = vmax.f32 %v926, 0.0
      %v1035 = vmax.f32 %v929, 0.0
      %v1036 = vmax.f32 %v934, 0.0
      %v1037 = vmax.f32 %v937, 0.0
      %v1038 = vmax.f32 %v942, 0.0
      %v1039 = vmax.f32 %v945, 0.0
      %v1040 = vmax.f32 %v950, 0.0
      %v1041 = vmax.f32 %v953, 0.0
      %v1042 = vmax.f32 %v958, 0.0
      %v1043 = vmax.f32 %v961, 0.0
      %v1044 = vmax.f32 %v966, 0.0
      %v1045 = vmax.f32 %v969, 0.0
      %v1046 = vmax.f32 %v974, 0.0
      %v1047 = vmax.f32 %v977, 0.0
      %v1048 = vmax.f32 %v982, 0.0
      %v1049 = vmax.f32 %v985, 0.0
      %v1050 = vmax.f32 %v990, 0.0
      %v1051 = vmax.f32 %v993, 0.0
      %v1052 = vmax.f32 %v998, 0.0
      %v1053 = vmax.f32 %v1001, 0.0
      %v1054 = vmax.f32 %v1006, 0.0
      %v1055 = vmax.f32 %v1009, 0.0
      %v1056 = vmax.f32 %v1014, 0.0
      %v1057 = vmax.f32 %v1017, 0.0
      %v1058 = vmax.f32 %v1022, 0.0
      %v1059 = vmax.f32 %v1025, 0.0
      %1060 = vst [vmem:[#allocation2] sm:$0xff] 0.0
      %1061 = vst [vmem:[#allocation2 + $0x8] sm:$0xff] 0.0
      %1062 = vst [vmem:[#allocation2 + $0x10] sm:$0xff] 0.0
      %1063 = vst [vmem:[#allocation2 + $0x18] sm:$0x1] 0.0
      %1064 = vst [vmem:[#allocation2 + $0x20] sm:$0xff] 0.0
      %1065 = vst [vmem:[#allocation2 + $0x28] sm:$0xff] 0.0
      %1066 = vst [vmem:[#allocation2 + $0x30] sm:$0xff] 0.0
      %1067 = vst [vmem:[#allocation2 + $0x38] sm:$0x1] 0.0
      %1068 = vst [vmem:[#allocation2 + $0x40] sm:$0xff] 0.0
      %1069 = vst [vmem:[#allocation2 + $0x48] sm:$0xff] 0.0
      %1070 = vst [vmem:[#allocation2 + $0x50] sm:$0xff] 0.0
      %1071 = vst [vmem:[#allocation2 + $0x58] sm:$0x1] 0.0
      %1072 = vst [vmem:[#allocation2 + $0x60] sm:$0xff] 0.0
      %1073 = vst [vmem:[#allocation2 + $0x68] sm:$0xff] 0.0
      %1074 = vst [vmem:[#allocation2 + $0x70] sm:$0xff] 0.0
      %1075 = vst [vmem:[#allocation2 + $0x78] sm:$0x1] 0.0
      %1076 = vst [vmem:[#allocation2 + $0x80] sm:$0xff] 0.0
      %1077 = vst [vmem:[#allocation2 + $0x88] sm:$0xff] 0.0
      %1078 = vst [vmem:[#allocation2 + $0x90] sm:$0xff] 0.0
      %1079 = vst [vmem:[#allocation2 + $0x98] sm:$0x1] 0.0
      %1080 = vst [vmem:[#allocation2 + $0xa0] sm:$0xff] 0.0
      %1081 = vst [vmem:[#allocation2 + $0xa8] sm:$0xff] 0.0
      %1082 = vst [vmem:[#allocation2 + $0xb0] sm:$0xff] 0.0
      %1083 = vst [vmem:[#allocation2 + $0xb8] sm:$0x1] 0.0
      %1084 = vst [vmem:[#allocation2 + $0xc0] sm:$0xff] 0.0
      %1085 = vst [vmem:[#allocation2 + $0xc8] sm:$0xff] 0.0
      %1086 = vst [vmem:[#allocation2 + $0xd0] sm:$0xff] 0.0
      %1087 = vst [vmem:[#allocation2 + $0xd8] sm:$0x1] 0.0
      %1088 = vst [vmem:[#allocation2 + $0xe0] sm:$0xff] 0.0
      %1089 = vst [vmem:[#allocation2 + $0xe8] sm:$0xff] 0.0
      %1090 = vst [vmem:[#allocation2 + $0xf0] sm:$0xff] 0.0
      %1091 = vst [vmem:[#allocation2 + $0xf8] sm:$0x1] 0.0
      %1092 = vst [vmem:[#allocation2 + $0x100] sm:$0xff] 0.0
      %1093 = vst [vmem:[#allocation2 + $0x108] sm:$0xff] 0.0
      %1094 = vst [vmem:[#allocation2 + $0x110] sm:$0xff] 0.0
      %1095 = vst [vmem:[#allocation2 + $0x118] sm:$0x1] 0.0
      %1096 = vst [vmem:[#allocation2 + $0x120] sm:$0xff] 0.0
      %1097 = vst [vmem:[#allocation2 + $0x128] sm:$0xff] 0.0
      %1098 = vst [vmem:[#allocation2 + $0x130] sm:$0xff] 0.0
      %1099 = vst [vmem:[#allocation2 + $0x138] sm:$0x1] 0.0
      %1100 = vst [vmem:[#allocation2 + $0x140] sm:$0xff] 0.0
      %1101 = vst [vmem:[#allocation2 + $0x148] sm:$0xff] 0.0
      %1102 = vst [vmem:[#allocation2 + $0x150] sm:$0xff] 0.0
      %1103 = vst [vmem:[#allocation2 + $0x158] sm:$0x1] 0.0
      %1104 = vst [vmem:[#allocation2 + $0x160] sm:$0xff] 0.0
      %1105 = vst [vmem:[#allocation2 + $0x168] sm:$0xff] 0.0
      %1106 = vst [vmem:[#allocation2 + $0x170] sm:$0xff] 0.0
      %1107 = vst [vmem:[#allocation2 + $0x178] sm:$0x1] 0.0
      %1108 = vst [vmem:[#allocation2 + $0x180] sm:$0xff] 0.0
      %1109 = vst [vmem:[#allocation2 + $0x188] sm:$0xff] 0.0
      %1110 = vst [vmem:[#allocation2 + $0x190] sm:$0xff] 0.0
      %1111 = vst [vmem:[#allocation2 + $0x198] sm:$0x1] 0.0
      %1112 = vst [vmem:[#allocation2 + $0x1a0] sm:$0xff] 0.0
      %1113 = vst [vmem:[#allocation2 + $0x1a8] sm:$0xff] 0.0
      %1114 = vst [vmem:[#allocation2 + $0x1b0] sm:$0xff] 0.0
      %1115 = vst [vmem:[#allocation2 + $0x1b8] sm:$0x1] 0.0
      %1116 = vst [vmem:[#allocation2 + $0x1c0] sm:$0xff] 0.0
      %1117 = vst [vmem:[#allocation2 + $0x1c8] sm:$0xff] 0.0
      %1118 = vst [vmem:[#allocation2 + $0x1d0] sm:$0xff] 0.0
      %1119 = vst [vmem:[#allocation2 + $0x1d8] sm:$0x1] 0.0
      %1120 = vst [vmem:[#allocation2 + $0x1e0] sm:$0xff] 0.0
      %1121 = vst [vmem:[#allocation2 + $0x1e8] sm:$0xff] 0.0
      %1122 = vst [vmem:[#allocation2 + $0x1f0] sm:$0xff] 0.0
      %1123 = vst [vmem:[#allocation2 + $0x1f8] sm:$0x1] 0.0
      %1124 = vst [vmem:[#allocation2 + $0x200] sm:$0xff] 0.0
      %1125 = vst [vmem:[#allocation2 + $0x208] sm:$0xff] 0.0
      %1126 = vst [vmem:[#allocation2 + $0x210] sm:$0xff] 0.0
      %1127 = vst [vmem:[#allocation2 + $0x218] sm:$0x1] 0.0
      %1128 = vst [vmem:[#allocation2 + $0x220] sm:$0xff] 0.0
      %1129 = vst [vmem:[#allocation2 + $0x228] sm:$0xff] 0.0
      %1130 = vst [vmem:[#allocation2 + $0x230] sm:$0xff] 0.0
      %1131 = vst [vmem:[#allocation2 + $0x238] sm:$0x1] 0.0
      %s1132 = scalar_lea.vmem [#allocation2], 32
      %1133 = vst [vmem:[%s1132 + $0x8] sm:$0xff] %v1028
      %1134 = vst [vmem:[%s1132 + $0x10] sm:$0xff] %v1029
      %1135 = vst [vmem:[%s1132 + $0x28] sm:$0xff] %v1030
      %1136 = vst [vmem:[%s1132 + $0x30] sm:$0xff] %v1031
      %1137 = vst [vmem:[%s1132 + $0x48] sm:$0xff] %v1032
      %1138 = vst [vmem:[%s1132 + $0x50] sm:$0xff] %v1033
      %1139 = vst [vmem:[%s1132 + $0x68] sm:$0xff] %v1034
      %1140 = vst [vmem:[%s1132 + $0x70] sm:$0xff] %v1035
      %1141 = vst [vmem:[%s1132 + $0x88] sm:$0xff] %v1036
      %1142 = vst [vmem:[%s1132 + $0x90] sm:$0xff] %v1037
      %1143 = vst [vmem:[%s1132 + $0xa8] sm:$0xff] %v1038
      %1144 = vst [vmem:[%s1132 + $0xb0] sm:$0xff] %v1039
      %1145 = vst [vmem:[%s1132 + $0xc8] sm:$0xff] %v1040
      %1146 = vst [vmem:[%s1132 + $0xd0] sm:$0xff] %v1041
      %1147 = vst [vmem:[%s1132 + $0xe8] sm:$0xff] %v1042
      %1148 = vst [vmem:[%s1132 + $0xf0] sm:$0xff] %v1043
      %1149 = vst [vmem:[%s1132 + $0x108] sm:$0xff] %v1044
      %1150 = vst [vmem:[%s1132 + $0x110] sm:$0xff] %v1045
      %1151 = vst [vmem:[%s1132 + $0x128] sm:$0xff] %v1046
      %1152 = vst [vmem:[%s1132 + $0x130] sm:$0xff] %v1047
      %1153 = vst [vmem:[%s1132 + $0x148] sm:$0xff] %v1048
      %1154 = vst [vmem:[%s1132 + $0x150] sm:$0xff] %v1049
      %1155 = vst [vmem:[%s1132 + $0x168] sm:$0xff] %v1050
      %1156 = vst [vmem:[%s1132 + $0x170] sm:$0xff] %v1051
      %1157 = vst [vmem:[%s1132 + $0x188] sm:$0xff] %v1052
      %1158 = vst [vmem:[%s1132 + $0x190] sm:$0xff] %v1053
      %1159 = vst [vmem:[%s1132 + $0x1a8] sm:$0xff] %v1054
      %1160 = vst [vmem:[%s1132 + $0x1b0] sm:$0xff] %v1055
      %1161 = vst [vmem:[%s1132 + $0x1c8] sm:$0xff] %v1056
      %1162 = vst [vmem:[%s1132 + $0x1d0] sm:$0xff] %v1057
      %1163 = vst [vmem:[%s1132 + $0x1e8] sm:$0xff] %v1058
      %1164 = vst [vmem:[%s1132 + $0x1f0] sm:$0xff] %v1059
      %v1165 = vld [vmem:[#allocation2 + $0x7] sm:$0xff]
      %v1166 = vld [vmem:[#allocation2 + $0xf] sm:$0xff]
      %v1167 = vld [vmem:[#allocation2 + $0x27] sm:$0xff]
      %v1168 = vld [vmem:[#allocation2 + $0x2f] sm:$0xff]
      %v1169 = vld [vmem:[#allocation2 + $0x47] sm:$0xff]
      %v1170 = vld [vmem:[#allocation2 + $0x4f] sm:$0xff]
      %v1171 = vld [vmem:[#allocation2 + $0x67] sm:$0xff]
      %v1172 = vld [vmem:[#allocation2 + $0x6f] sm:$0xff]
      %v1173 = vld [vmem:[#allocation2 + $0x87] sm:$0xff]
      %v1174 = vld [vmem:[#allocation2 + $0x8f] sm:$0xff]
      %v1175 = vld [vmem:[#allocation2 + $0xa7] sm:$0xff]
      %v1176 = vld [vmem:[#allocation2 + $0xaf] sm:$0xff]
      %v1177 = vld [vmem:[#allocation2 + $0xc7] sm:$0xff]
      %v1178 = vld [vmem:[#allocation2 + $0xcf] sm:$0xff]
      %v1179 = vld [vmem:[#allocation2 + $0xe7] sm:$0xff]
      %v1180 = vld [vmem:[#allocation2 + $0xef] sm:$0xff]
      %v1181 = vld [vmem:[#allocation2 + $0x107] sm:$0xff]
      %v1182 = vld [vmem:[#allocation2 + $0x10f] sm:$0xff]
      %v1183 = vld [vmem:[#allocation2 + $0x127] sm:$0xff]
      %v1184 = vld [vmem:[#allocation2 + $0x12f] sm:$0xff]
      %v1185 = vld [vmem:[#allocation2 + $0x147] sm:$0xff]
      %v1186 = vld [vmem:[#allocation2 + $0x14f] sm:$0xff]
      %v1187 = vld [vmem:[#allocation2 + $0x167] sm:$0xff]
      %v1188 = vld [vmem:[#allocation2 + $0x16f] sm:$0xff]
      %v1189 = vld [vmem:[#allocation2 + $0x187] sm:$0xff]
      %v1190 = vld [vmem:[#allocation2 + $0x18f] sm:$0xff]
      %v1191 = vld [vmem:[#allocation2 + $0x1a7] sm:$0xff]
      %v1192 = vld [vmem:[#allocation2 + $0x1af] sm:$0xff]
      %v1193 = vld [vmem:[#allocation2 + $0x1c7] sm:$0xff]
      %v1194 = vld [vmem:[#allocation2 + $0x1cf] sm:$0xff]
      %v1195 = vld [vmem:[#allocation2 + $0x1e7] sm:$0xff]
      %v1196 = vld [vmem:[#allocation2 + $0x1ef] sm:$0xff]
      %v1197 = vpack.c.bf16 %v1166, %v1165
      %v1198 = vpack.c.bf16 %v1168, %v1167
      %v1199 = vpack.c.bf16 %v1170, %v1169
      %v1200 = vpack.c.bf16 %v1172, %v1171
      %v1201 = vpack.c.bf16 %v1174, %v1173
      %v1202 = vpack.c.bf16 %v1176, %v1175
      %v1203 = vpack.c.bf16 %v1178, %v1177
      %v1204 = vpack.c.bf16 %v1180, %v1179
      %v1205 = vpack.c.bf16 %v1182, %v1181
      %v1206 = vpack.c.bf16 %v1184, %v1183
      %v1207 = vpack.c.bf16 %v1186, %v1185
      %v1208 = vpack.c.bf16 %v1188, %v1187
      %v1209 = vpack.c.bf16 %v1190, %v1189
      %v1210 = vpack.c.bf16 %v1192, %v1191
      %v1211 = vpack.c.bf16 %v1194, %v1193
      %v1212 = vpack.c.bf16 %v1196, %v1195
      %v1213 = vld [vmem:[#allocation2 + $0x8] sm:$0xff]
      %v1214 = vld [vmem:[#allocation2 + $0x10] sm:$0xff]
      %v1215 = vld [vmem:[#allocation2 + $0x28] sm:$0xff]
      %v1216 = vld [vmem:[#allocation2 + $0x30] sm:$0xff]
      %v1217 = vld [vmem:[#allocation2 + $0x48] sm:$0xff]
      %v1218 = vld [vmem:[#allocation2 + $0x50] sm:$0xff]
      %v1219 = vld [vmem:[#allocation2 + $0x68] sm:$0xff]
      %v1220 = vld [vmem:[#allocation2 + $0x70] sm:$0xff]
      %v1221 = vld [vmem:[#allocation2 + $0x88] sm:$0xff]
      %v1222 = vld [vmem:[#allocation2 + $0x90] sm:$0xff]
      %v1223 = vld [vmem:[#allocation2 + $0xa8] sm:$0xff]
      %v1224 = vld [vmem:[#allocation2 + $0xb0] sm:$0xff]
      %v1225 = vld [vmem:[#allocation2 + $0xc8] sm:$0xff]
      %v1226 = vld [vmem:[#allocation2 + $0xd0] sm:$0xff]
      %v1227 = vld [vmem:[#allocation2 + $0xe8] sm:$0xff]
      %v1228 = vld [vmem:[#allocation2 + $0xf0] sm:$0xff]
      %v1229 = vld [vmem:[#allocation2 + $0x108] sm:$0xff]
      %v1230 = vld [vmem:[#allocation2 + $0x110] sm:$0xff]
      %v1231 = vld [vmem:[#allocation2 + $0x128] sm:$0xff]
      %v1232 = vld [vmem:[#allocation2 + $0x130] sm:$0xff]
      %v1233 = vld [vmem:[#allocation2 + $0x148] sm:$0xff]
      %v1234 = vld [vmem:[#allocation2 + $0x150] sm:$0xff]
      %v1235 = vld [vmem:[#allocation2 + $0x168] sm:$0xff]
      %v1236 = vld [vmem:[#allocation2 + $0x170] sm:$0xff]
      %v1237 = vld [vmem:[#allocation2 + $0x188] sm:$0xff]
      %v1238 = vld [vmem:[#allocation2 + $0x190] sm:$0xff]
      %v1239 = vld [vmem:[#allocation2 + $0x1a8] sm:$0xff]
      %v1240 = vld [vmem:[#allocation2 + $0x1b0] sm:$0xff]
      %v1241 = vld [vmem:[#allocation2 + $0x1c8] sm:$0xff]
      %v1242 = vld [vmem:[#allocation2 + $0x1d0] sm:$0xff]
      %v1243 = vld [vmem:[#allocation2 + $0x1e8] sm:$0xff]
      %v1244 = vld [vmem:[#allocation2 + $0x1f0] sm:$0xff]
      %v1245 = vpack.c.bf16 %v1214, %v1213
      %v1246 = vpack.c.bf16 %v1216, %v1215
      %v1247 = vpack.c.bf16 %v1218, %v1217
      %v1248 = vpack.c.bf16 %v1220, %v1219
      %v1249 = vpack.c.bf16 %v1222, %v1221
      %v1250 = vpack.c.bf16 %v1224, %v1223
      %v1251 = vpack.c.bf16 %v1226, %v1225
      %v1252 = vpack.c.bf16 %v1228, %v1227
      %v1253 = vpack.c.bf16 %v1230, %v1229
      %v1254 = vpack.c.bf16 %v1232, %v1231
      %v1255 = vpack.c.bf16 %v1234, %v1233
      %v1256 = vpack.c.bf16 %v1236, %v1235
      %v1257 = vpack.c.bf16 %v1238, %v1237
      %v1258 = vpack.c.bf16 %v1240, %v1239
      %v1259 = vpack.c.bf16 %v1242, %v1241
      %v1260 = vpack.c.bf16 %v1244, %v1243
      %v1261 = vld [vmem:[#allocation2 + $0x9] sm:$0xff]
      %v1262 = vld [vmem:[#allocation2 + $0x11] sm:$0xff]
      %v1263 = vld [vmem:[#allocation2 + $0x29] sm:$0xff]
      %v1264 = vld [vmem:[#allocation2 + $0x31] sm:$0xff]
      %v1265 = vld [vmem:[#allocation2 + $0x49] sm:$0xff]
      %v1266 = vld [vmem:[#allocation2 + $0x51] sm:$0xff]
      %v1267 = vld [vmem:[#allocation2 + $0x69] sm:$0xff]
      %v1268 = vld [vmem:[#allocation2 + $0x71] sm:$0xff]
      %v1269 = vld [vmem:[#allocation2 + $0x89] sm:$0xff]
      %v1270 = vld [vmem:[#allocation2 + $0x91] sm:$0xff]
      %v1271 = vld [vmem:[#allocation2 + $0xa9] sm:$0xff]
      %v1272 = vld [vmem:[#allocation2 + $0xb1] sm:$0xff]
      %v1273 = vld [vmem:[#allocation2 + $0xc9] sm:$0xff]
      %v1274 = vld [vmem:[#allocation2 + $0xd1] sm:$0xff]
      %v1275 = vld [vmem:[#allocation2 + $0xe9] sm:$0xff]
      %v1276 = vld [vmem:[#allocation2 + $0xf1] sm:$0xff]
      %v1277 = vld [vmem:[#allocation2 + $0x109] sm:$0xff]
      %v1278 = vld [vmem:[#allocation2 + $0x111] sm:$0xff]
      %v1279 = vld [vmem:[#allocation2 + $0x129] sm:$0xff]
      %v1280 = vld [vmem:[#allocation2 + $0x131] sm:$0xff]
      %v1281 = vld [vmem:[#allocation2 + $0x149] sm:$0xff]
      %v1282 = vld [vmem:[#allocation2 + $0x151] sm:$0xff]
      %v1283 = vld [vmem:[#allocation2 + $0x169] sm:$0xff]
      %v1284 = vld [vmem:[#allocation2 + $0x171] sm:$0xff]
      %v1285 = vld [vmem:[#allocation2 + $0x189] sm:$0xff]
      %v1286 = vld [vmem:[#allocation2 + $0x191] sm:$0xff]
      %v1287 = vld [vmem:[#allocation2 + $0x1a9] sm:$0xff]
      %v1288 = vld [vmem:[#allocation2 + $0x1b1] sm:$0xff]
      %v1289 = vld [vmem:[#allocation2 + $0x1c9] sm:$0xff]
      %v1290 = vld [vmem:[#allocation2 + $0x1d1] sm:$0xff]
      %v1291 = vld [vmem:[#allocation2 + $0x1e9] sm:$0xff]
      %v1292 = vld [vmem:[#allocation2 + $0x1f1] sm:$0xff]
      %v1293 = vpack.c.bf16 %v1262, %v1261
      %v1294 = vpack.c.bf16 %v1264, %v1263
      %v1295 = vpack.c.bf16 %v1266, %v1265
      %v1296 = vpack.c.bf16 %v1268, %v1267
      %v1297 = vpack.c.bf16 %v1270, %v1269
      %v1298 = vpack.c.bf16 %v1272, %v1271
      %v1299 = vpack.c.bf16 %v1274, %v1273
      %v1300 = vpack.c.bf16 %v1276, %v1275
      %v1301 = vpack.c.bf16 %v1278, %v1277
      %v1302 = vpack.c.bf16 %v1280, %v1279
      %v1303 = vpack.c.bf16 %v1282, %v1281
      %v1304 = vpack.c.bf16 %v1284, %v1283
      %v1305 = vpack.c.bf16 %v1286, %v1285
      %v1306 = vpack.c.bf16 %v1288, %v1287
      %v1307 = vpack.c.bf16 %v1290, %v1289
      %v1308 = vpack.c.bf16 %v1292, %v1291
      %v1309 = vld [vmem:[%s1132 + $0x7] sm:$0xff]
      %v1310 = vld [vmem:[%s1132 + $0xf] sm:$0xff]
      %v1311 = vld [vmem:[%s1132 + $0x27] sm:$0xff]
      %v1312 = vld [vmem:[%s1132 + $0x2f] sm:$0xff]
      %v1313 = vld [vmem:[%s1132 + $0x47] sm:$0xff]
      %v1314 = vld [vmem:[%s1132 + $0x4f] sm:$0xff]
      %v1315 = vld [vmem:[%s1132 + $0x67] sm:$0xff]
      %v1316 = vld [vmem:[%s1132 + $0x6f] sm:$0xff]
      %v1317 = vld [vmem:[%s1132 + $0x87] sm:$0xff]
      %v1318 = vld [vmem:[%s1132 + $0x8f] sm:$0xff]
      %v1319 = vld [vmem:[%s1132 + $0xa7] sm:$0xff]
      %v1320 = vld [vmem:[%s1132 + $0xaf] sm:$0xff]
      %v1321 = vld [vmem:[%s1132 + $0xc7] sm:$0xff]
      %v1322 = vld [vmem:[%s1132 + $0xcf] sm:$0xff]
      %v1323 = vld [vmem:[%s1132 + $0xe7] sm:$0xff]
      %v1324 = vld [vmem:[%s1132 + $0xef] sm:$0xff]
      %v1325 = vld [vmem:[%s1132 + $0x107] sm:$0xff]
      %v1326 = vld [vmem:[%s1132 + $0x10f] sm:$0xff]
      %v1327 = vld [vmem:[%s1132 + $0x127] sm:$0xff]
      %v1328 = vld [vmem:[%s1132 + $0x12f] sm:$0xff]
      %v1329 = vld [vmem:[%s1132 + $0x147] sm:$0xff]
      %v1330 = vld [vmem:[%s1132 + $0x14f] sm:$0xff]
      %v1331 = vld [vmem:[%s1132 + $0x167] sm:$0xff]
      %v1332 = vld [vmem:[%s1132 + $0x16f] sm:$0xff]
      %v1333 = vld [vmem:[%s1132 + $0x187] sm:$0xff]
      %v1334 = vld [vmem:[%s1132 + $0x18f] sm:$0xff]
      %v1335 = vld [vmem:[%s1132 + $0x1a7] sm:$0xff]
      %v1336 = vld [vmem:[%s1132 + $0x1af] sm:$0xff]
      %v1337 = vld [vmem:[%s1132 + $0x1c7] sm:$0xff]
      %v1338 = vld [vmem:[%s1132 + $0x1cf] sm:$0xff]
      %v1339 = vld [vmem:[%s1132 + $0x1e7] sm:$0xff]
      %v1340 = vld [vmem:[%s1132 + $0x1ef] sm:$0xff]
      %v1341 = vpack.c.bf16 %v1310, %v1309
      %v1342 = vpack.c.bf16 %v1312, %v1311
      %v1343 = vpack.c.bf16 %v1314, %v1313
      %v1344 = vpack.c.bf16 %v1316, %v1315
      %v1345 = vpack.c.bf16 %v1318, %v1317
      %v1346 = vpack.c.bf16 %v1320, %v1319
      %v1347 = vpack.c.bf16 %v1322, %v1321
      %v1348 = vpack.c.bf16 %v1324, %v1323
      %v1349 = vpack.c.bf16 %v1326, %v1325
      %v1350 = vpack.c.bf16 %v1328, %v1327
      %v1351 = vpack.c.bf16 %v1330, %v1329
      %v1352 = vpack.c.bf16 %v1332, %v1331
      %v1353 = vpack.c.bf16 %v1334, %v1333
      %v1354 = vpack.c.bf16 %v1336, %v1335
      %v1355 = vpack.c.bf16 %v1338, %v1337
      %v1356 = vpack.c.bf16 %v1340, %v1339
      %v1357 = vld [vmem:[%s1132 + $0x8] sm:$0xff]
      %v1358 = vld [vmem:[%s1132 + $0x10] sm:$0xff]
      %v1359 = vld [vmem:[%s1132 + $0x28] sm:$0xff]
      %v1360 = vld [vmem:[%s1132 + $0x30] sm:$0xff]
      %v1361 = vld [vmem:[%s1132 + $0x48] sm:$0xff]
      %v1362 = vld [vmem:[%s1132 + $0x50] sm:$0xff]
      %v1363 = vld [vmem:[%s1132 + $0x68] sm:$0xff]
      %v1364 = vld [vmem:[%s1132 + $0x70] sm:$0xff]
      %v1365 = vld [vmem:[%s1132 + $0x88] sm:$0xff]
      %v1366 = vld [vmem:[%s1132 + $0x90] sm:$0xff]
      %v1367 = vld [vmem:[%s1132 + $0xa8] sm:$0xff]
      %v1368 = vld [vmem:[%s1132 + $0xb0] sm:$0xff]
      %v1369 = vld [vmem:[%s1132 + $0xc8] sm:$0xff]
      %v1370 = vld [vmem:[%s1132 + $0xd0] sm:$0xff]
      %v1371 = vld [vmem:[%s1132 + $0xe8] sm:$0xff]
      %v1372 = vld [vmem:[%s1132 + $0xf0] sm:$0xff]
      %v1373 = vld [vmem:[%s1132 + $0x108] sm:$0xff]
      %v1374 = vld [vmem:[%s1132 + $0x110] sm:$0xff]
      %v1375 = vld [vmem:[%s1132 + $0x128] sm:$0xff]
      %v1376 = vld [vmem:[%s1132 + $0x130] sm:$0xff]
      %v1377 = vld [vmem:[%s1132 + $0x148] sm:$0xff]
      %v1378 = vld [vmem:[%s1132 + $0x150] sm:$0xff]
      %v1379 = vld [vmem:[%s1132 + $0x168] sm:$0xff]
      %v1380 = vld [vmem:[%s1132 + $0x170] sm:$0xff]
      %v1381 = vld [vmem:[%s1132 + $0x188] sm:$0xff]
      %v1382 = vld [vmem:[%s1132 + $0x190] sm:$0xff]
      %v1383 = vld [vmem:[%s1132 + $0x1a8] sm:$0xff]
      %v1384 = vld [vmem:[%s1132 + $0x1b0] sm:$0xff]
      %v1385 = vld [vmem:[%s1132 + $0x1c8] sm:$0xff]
      %v1386 = vld [vmem:[%s1132 + $0x1d0] sm:$0xff]
      %v1387 = vld [vmem:[%s1132 + $0x1e8] sm:$0xff]
      %v1388 = vld [vmem:[%s1132 + $0x1f0] sm:$0xff]
      %v1389 = vpack.c.bf16 %v1358, %v1357
      %v1390 = vpack.c.bf16 %v1360, %v1359
      %v1391 = vpack.c.bf16 %v1362, %v1361
      %v1392 = vpack.c.bf16 %v1364, %v1363
      %v1393 = vpack.c.bf16 %v1366, %v1365
      %v1394 = vpack.c.bf16 %v1368, %v1367
      %v1395 = vpack.c.bf16 %v1370, %v1369
      %v1396 = vpack.c.bf16 %v1372, %v1371
      %v1397 = vpack.c.bf16 %v1374, %v1373
      %v1398 = vpack.c.bf16 %v1376, %v1375
      %v1399 = vpack.c.bf16 %v1378, %v1377
      %v1400 = vpack.c.bf16 %v1380, %v1379
      %v1401 = vpack.c.bf16 %v1382, %v1381
      %v1402 = vpack.c.bf16 %v1384, %v1383
      %v1403 = vpack.c.bf16 %v1386, %v1385
      %v1404 = vpack.c.bf16 %v1388, %v1387
      %v1405 = vld [vmem:[%s1132 + $0x9] sm:$0xff]
      %v1406 = vld [vmem:[%s1132 + $0x11] sm:$0xff]
      %v1407 = vld [vmem:[%s1132 + $0x29] sm:$0xff]
      %v1408 = vld [vmem:[%s1132 + $0x31] sm:$0xff]
      %v1409 = vld [vmem:[%s1132 + $0x49] sm:$0xff]
      %v1410 = vld [vmem:[%s1132 + $0x51] sm:$0xff]
      %v1411 = vld [vmem:[%s1132 + $0x69] sm:$0xff]
      %v1412 = vld [vmem:[%s1132 + $0x71] sm:$0xff]
      %v1413 = vld [vmem:[%s1132 + $0x89] sm:$0xff]
      %v1414 = vld [vmem:[%s1132 + $0x91] sm:$0xff]
      %v1415 = vld [vmem:[%s1132 + $0xa9] sm:$0xff]
      %v1416 = vld [vmem:[%s1132 + $0xb1] sm:$0xff]
      %v1417 = vld [vmem:[%s1132 + $0xc9] sm:$0xff]
      %v1418 = vld [vmem:[%s1132 + $0xd1] sm:$0xff]
      %v1419 = vld [vmem:[%s1132 + $0xe9] sm:$0xff]
      %v1420 = vld [vmem:[%s1132 + $0xf1] sm:$0xff]
      %v1421 = vld [vmem:[%s1132 + $0x109] sm:$0xff]
      %v1422 = vld [vmem:[%s1132 + $0x111] sm:$0xff]
      %v1423 = vld [vmem:[%s1132 + $0x129] sm:$0xff]
      %v1424 = vld [vmem:[%s1132 + $0x131] sm:$0xff]
      %v1425 = vld [vmem:[%s1132 + $0x149] sm:$0xff]
      %v1426 = vld [vmem:[%s1132 + $0x151] sm:$0xff]
      %v1427 = vld [vmem:[%s1132 + $0x169] sm:$0xff]
      %v1428 = vld [vmem:[%s1132 + $0x171] sm:$0xff]
      %v1429 = vld [vmem:[%s1132 + $0x189] sm:$0xff]
      %v1430 = vld [vmem:[%s1132 + $0x191] sm:$0xff]
      %v1431 = vld [vmem:[%s1132 + $0x1a9] sm:$0xff]
      %v1432 = vld [vmem:[%s1132 + $0x1b1] sm:$0xff]
      %v1433 = vld [vmem:[%s1132 + $0x1c9] sm:$0xff]
      %v1434 = vld [vmem:[%s1132 + $0x1d1] sm:$0xff]
      %v1435 = vld [vmem:[%s1132 + $0x1e9] sm:$0xff]
      %v1436 = vld [vmem:[%s1132 + $0x1f1] sm:$0xff]
      %v1437 = vpack.c.bf16 %v1406, %v1405
      %v1438 = vpack.c.bf16 %v1408, %v1407
      %v1439 = vpack.c.bf16 %v1410, %v1409
      %v1440 = vpack.c.bf16 %v1412, %v1411
      %v1441 = vpack.c.bf16 %v1414, %v1413
      %v1442 = vpack.c.bf16 %v1416, %v1415
      %v1443 = vpack.c.bf16 %v1418, %v1417
      %v1444 = vpack.c.bf16 %v1420, %v1419
      %v1445 = vpack.c.bf16 %v1422, %v1421
      %v1446 = vpack.c.bf16 %v1424, %v1423
      %v1447 = vpack.c.bf16 %v1426, %v1425
      %v1448 = vpack.c.bf16 %v1428, %v1427
      %v1449 = vpack.c.bf16 %v1430, %v1429
      %v1450 = vpack.c.bf16 %v1432, %v1431
      %v1451 = vpack.c.bf16 %v1434, %v1433
      %v1452 = vpack.c.bf16 %v1436, %v1435
      %s1453 = scalar_lea.vmem [#allocation2], 64
      %v1454 = vld [vmem:[%s1453 + $0x7] sm:$0xff]
      %v1455 = vld [vmem:[%s1453 + $0xf] sm:$0xff]
      %v1456 = vld [vmem:[%s1453 + $0x27] sm:$0xff]
      %v1457 = vld [vmem:[%s1453 + $0x2f] sm:$0xff]
      %v1458 = vld [vmem:[%s1453 + $0x47] sm:$0xff]
      %v1459 = vld [vmem:[%s1453 + $0x4f] sm:$0xff]
      %v1460 = vld [vmem:[%s1453 + $0x67] sm:$0xff]
      %v1461 = vld [vmem:[%s1453 + $0x6f] sm:$0xff]
      %v1462 = vld [vmem:[%s1453 + $0x87] sm:$0xff]
      %v1463 = vld [vmem:[%s1453 + $0x8f] sm:$0xff]
      %v1464 = vld [vmem:[%s1453 + $0xa7] sm:$0xff]
      %v1465 = vld [vmem:[%s1453 + $0xaf] sm:$0xff]
      %v1466 = vld [vmem:[%s1453 + $0xc7] sm:$0xff]
      %v1467 = vld [vmem:[%s1453 + $0xcf] sm:$0xff]
      %v1468 = vld [vmem:[%s1453 + $0xe7] sm:$0xff]
      %v1469 = vld [vmem:[%s1453 + $0xef] sm:$0xff]
      %v1470 = vld [vmem:[%s1453 + $0x107] sm:$0xff]
      %v1471 = vld [vmem:[%s1453 + $0x10f] sm:$0xff]
      %v1472 = vld [vmem:[%s1453 + $0x127] sm:$0xff]
      %v1473 = vld [vmem:[%s1453 + $0x12f] sm:$0xff]
      %v1474 = vld [vmem:[%s1453 + $0x147] sm:$0xff]
      %v1475 = vld [vmem:[%s1453 + $0x14f] sm:$0xff]
      %v1476 = vld [vmem:[%s1453 + $0x167] sm:$0xff]
      %v1477 = vld [vmem:[%s1453 + $0x16f] sm:$0xff]
      %v1478 = vld [vmem:[%s1453 + $0x187] sm:$0xff]
      %v1479 = vld [vmem:[%s1453 + $0x18f] sm:$0xff]
      %v1480 = vld [vmem:[%s1453 + $0x1a7] sm:$0xff]
      %v1481 = vld [vmem:[%s1453 + $0x1af] sm:$0xff]
      %v1482 = vld [vmem:[%s1453 + $0x1c7] sm:$0xff]
      %v1483 = vld [vmem:[%s1453 + $0x1cf] sm:$0xff]
      %v1484 = vld [vmem:[%s1453 + $0x1e7] sm:$0xff]
      %v1485 = vld [vmem:[%s1453 + $0x1ef] sm:$0xff]
      %v1486 = vpack.c.bf16 %v1455, %v1454
      %v1487 = vpack.c.bf16 %v1457, %v1456
      %v1488 = vpack.c.bf16 %v1459, %v1458
      %v1489 = vpack.c.bf16 %v1461, %v1460
      %v1490 = vpack.c.bf16 %v1463, %v1462
      %v1491 = vpack.c.bf16 %v1465, %v1464
      %v1492 = vpack.c.bf16 %v1467, %v1466
      %v1493 = vpack.c.bf16 %v1469, %v1468
      %v1494 = vpack.c.bf16 %v1471, %v1470
      %v1495 = vpack.c.bf16 %v1473, %v1472
      %v1496 = vpack.c.bf16 %v1475, %v1474
      %v1497 = vpack.c.bf16 %v1477, %v1476
      %v1498 = vpack.c.bf16 %v1479, %v1478
      %v1499 = vpack.c.bf16 %v1481, %v1480
      %v1500 = vpack.c.bf16 %v1483, %v1482
      %v1501 = vpack.c.bf16 %v1485, %v1484
      %v1502 = vld [vmem:[%s1453 + $0x8] sm:$0xff]
      %v1503 = vld [vmem:[%s1453 + $0x10] sm:$0xff]
      %v1504 = vld [vmem:[%s1453 + $0x28] sm:$0xff]
      %v1505 = vld [vmem:[%s1453 + $0x30] sm:$0xff]
      %v1506 = vld [vmem:[%s1453 + $0x48] sm:$0xff]
      %v1507 = vld [vmem:[%s1453 + $0x50] sm:$0xff]
      %v1508 = vld [vmem:[%s1453 + $0x68] sm:$0xff]
      %v1509 = vld [vmem:[%s1453 + $0x70] sm:$0xff]
      %v1510 = vld [vmem:[%s1453 + $0x88] sm:$0xff]
      %v1511 = vld [vmem:[%s1453 + $0x90] sm:$0xff]
      %v1512 = vld [vmem:[%s1453 + $0xa8] sm:$0xff]
      %v1513 = vld [vmem:[%s1453 + $0xb0] sm:$0xff]
      %v1514 = vld [vmem:[%s1453 + $0xc8] sm:$0xff]
      %v1515 = vld [vmem:[%s1453 + $0xd0] sm:$0xff]
      %v1516 = vld [vmem:[%s1453 + $0xe8] sm:$0xff]
      %v1517 = vld [vmem:[%s1453 + $0xf0] sm:$0xff]
      %v1518 = vld [vmem:[%s1453 + $0x108] sm:$0xff]
      %v1519 = vld [vmem:[%s1453 + $0x110] sm:$0xff]
      %v1520 = vld [vmem:[%s1453 + $0x128] sm:$0xff]
      %v1521 = vld [vmem:[%s1453 + $0x130] sm:$0xff]
      %v1522 = vld [vmem:[%s1453 + $0x148] sm:$0xff]
      %v1523 = vld [vmem:[%s1453 + $0x150] sm:$0xff]
      %v1524 = vld [vmem:[%s1453 + $0x168] sm:$0xff]
      %v1525 = vld [vmem:[%s1453 + $0x170] sm:$0xff]
      %v1526 = vld [vmem:[%s1453 + $0x188] sm:$0xff]
      %v1527 = vld [vmem:[%s1453 + $0x190] sm:$0xff]
      %v1528 = vld [vmem:[%s1453 + $0x1a8] sm:$0xff]
      %v1529 = vld [vmem:[%s1453 + $0x1b0] sm:$0xff]
      %v1530 = vld [vmem:[%s1453 + $0x1c8] sm:$0xff]
      %v1531 = vld [vmem:[%s1453 + $0x1d0] sm:$0xff]
      %v1532 = vld [vmem:[%s1453 + $0x1e8] sm:$0xff]
      %v1533 = vld [vmem:[%s1453 + $0x1f0] sm:$0xff]
      %v1534 = vpack.c.bf16 %v1503, %v1502
      %v1535 = vpack.c.bf16 %v1505, %v1504
      %v1536 = vpack.c.bf16 %v1507, %v1506
      %v1537 = vpack.c.bf16 %v1509, %v1508
      %v1538 = vpack.c.bf16 %v1511, %v1510
      %v1539 = vpack.c.bf16 %v1513, %v1512
      %v1540 = vpack.c.bf16 %v1515, %v1514
      %v1541 = vpack.c.bf16 %v1517, %v1516
      %v1542 = vpack.c.bf16 %v1519, %v1518
      %v1543 = vpack.c.bf16 %v1521, %v1520
      %v1544 = vpack.c.bf16 %v1523, %v1522
      %v1545 = vpack.c.bf16 %v1525, %v1524
      %v1546 = vpack.c.bf16 %v1527, %v1526
      %v1547 = vpack.c.bf16 %v1529, %v1528
      %v1548 = vpack.c.bf16 %v1531, %v1530
      %v1549 = vpack.c.bf16 %v1533, %v1532
      %v1550 = vld [vmem:[%s1453 + $0x9] sm:$0xff]
      %v1551 = vld [vmem:[%s1453 + $0x11] sm:$0xff]
      %v1552 = vld [vmem:[%s1453 + $0x29] sm:$0xff]
      %v1553 = vld [vmem:[%s1453 + $0x31] sm:$0xff]
      %v1554 = vld [vmem:[%s1453 + $0x49] sm:$0xff]
      %v1555 = vld [vmem:[%s1453 + $0x51] sm:$0xff]
      %v1556 = vld [vmem:[%s1453 + $0x69] sm:$0xff]
      %v1557 = vld [vmem:[%s1453 + $0x71] sm:$0xff]
      %v1558 = vld [vmem:[%s1453 + $0x89] sm:$0xff]
      %v1559 = vld [vmem:[%s1453 + $0x91] sm:$0xff]
      %v1560 = vld [vmem:[%s1453 + $0xa9] sm:$0xff]
      %v1561 = vld [vmem:[%s1453 + $0xb1] sm:$0xff]
      %v1562 = vld [vmem:[%s1453 + $0xc9] sm:$0xff]
      %v1563 = vld [vmem:[%s1453 + $0xd1] sm:$0xff]
      %v1564 = vld [vmem:[%s1453 + $0xe9] sm:$0xff]
      %v1565 = vld [vmem:[%s1453 + $0xf1] sm:$0xff]
      %v1566 = vld [vmem:[%s1453 + $0x109] sm:$0xff]
      %v1567 = vld [vmem:[%s1453 + $0x111] sm:$0xff]
      %v1568 = vld [vmem:[%s1453 + $0x129] sm:$0xff]
      %v1569 = vld [vmem:[%s1453 + $0x131] sm:$0xff]
      %v1570 = vld [vmem:[%s1453 + $0x149] sm:$0xff]
      %v1571 = vld [vmem:[%s1453 + $0x151] sm:$0xff]
      %v1572 = vld [vmem:[%s1453 + $0x169] sm:$0xff]
      %v1573 = vld [vmem:[%s1453 + $0x171] sm:$0xff]
      %v1574 = vld [vmem:[%s1453 + $0x189] sm:$0xff]
      %v1575 = vld [vmem:[%s1453 + $0x191] sm:$0xff]
      %v1576 = vld [vmem:[%s1453 + $0x1a9] sm:$0xff]
      %v1577 = vld [vmem:[%s1453 + $0x1b1] sm:$0xff]
      %v1578 = vld [vmem:[%s1453 + $0x1c9] sm:$0xff]
      %v1579 = vld [vmem:[%s1453 + $0x1d1] sm:$0xff]
      %v1580 = vld [vmem:[%s1453 + $0x1e9] sm:$0xff]
      %v1581 = vld [vmem:[%s1453 + $0x1f1] sm:$0xff]
      %v1582 = vpack.c.bf16 %v1551, %v1550
      %v1583 = vpack.c.bf16 %v1553, %v1552
      %v1584 = vpack.c.bf16 %v1555, %v1554
      %v1585 = vpack.c.bf16 %v1557, %v1556
      %v1586 = vpack.c.bf16 %v1559, %v1558
      %v1587 = vpack.c.bf16 %v1561, %v1560
      %v1588 = vpack.c.bf16 %v1563, %v1562
      %v1589 = vpack.c.bf16 %v1565, %v1564
      %v1590 = vpack.c.bf16 %v1567, %v1566
      %v1591 = vpack.c.bf16 %v1569, %v1568
      %v1592 = vpack.c.bf16 %v1571, %v1570
      %v1593 = vpack.c.bf16 %v1573, %v1572
      %v1594 = vpack.c.bf16 %v1575, %v1574
      %v1595 = vpack.c.bf16 %v1577, %v1576
      %v1596 = vpack.c.bf16 %v1579, %v1578
      %v1597 = vpack.c.bf16 %v1581, %v1580
      %v1598 = vld [vmem:[%s5] sm:$0xf]
      %v1599 = vld [vmem:[%s5 + $0x4] sm:$0xf]
      %v1600 = vld [vmem:[%s5 + $0x8] sm:$0xf]
      %v1601 = vld [vmem:[%s5 + $0xc] sm:$0xf]
      %v1602 = vld [vmem:[%s5 + $0x10] sm:$0xf]
      %v1603 = vld [vmem:[%s5 + $0x14] sm:$0xf]
      %v1604 = vld [vmem:[%s5 + $0x18] sm:$0xf]
      %v1605 = vld [vmem:[%s5 + $0x1c] sm:$0xf]
      %v1606 = vld [vmem:[%s5 + $0x20] sm:$0xf]
      %v1607 = vld [vmem:[%s5 + $0x24] sm:$0xf]
      %v1608 = vld [vmem:[%s5 + $0x28] sm:$0xf]
      %v1609 = vld [vmem:[%s5 + $0x2c] sm:$0xf]
      %v1610 = vld [vmem:[%s5 + $0x30] sm:$0xf]
      %v1611 = vld [vmem:[%s5 + $0x34] sm:$0xf]
      %v1612 = vld [vmem:[%s5 + $0x38] sm:$0xf]
      %v1613 = vld [vmem:[%s5 + $0x3c] sm:$0xf]
      %v1614 = vld [vmem:[%s5 + $0x40] sm:$0xf]
      %v1615 = vld [vmem:[%s5 + $0x44] sm:$0xf]
      %v1616 = vld [vmem:[%s5 + $0x48] sm:$0xf]
      %v1617 = vld [vmem:[%s5 + $0x4c] sm:$0xf]
      %v1618 = vld [vmem:[%s5 + $0x50] sm:$0xf]
      %v1619 = vld [vmem:[%s5 + $0x54] sm:$0xf]
      %v1620 = vld [vmem:[%s5 + $0x58] sm:$0xf]
      %v1621 = vld [vmem:[%s5 + $0x5c] sm:$0xf]
      %v1622 = vld [vmem:[%s5 + $0x60] sm:$0xf]
      %v1623 = vld [vmem:[%s5 + $0x64] sm:$0xf]
      %v1624 = vld [vmem:[%s5 + $0x68] sm:$0xf]
      %v1625 = vld [vmem:[%s5 + $0x6c] sm:$0xf]
      %v1626 = vld [vmem:[%s5 + $0x70] sm:$0xf]
      %v1627 = vld [vmem:[%s5 + $0x74] sm:$0xf]
      %v1628 = vld [vmem:[%s5 + $0x78] sm:$0xf]
      %v1629 = vld [vmem:[%s5 + $0x7c] sm:$0xf]
      %v1630 = vld [vmem:[%s5 + $0x80] sm:$0xf]
      %v1631 = vld [vmem:[%s5 + $0x84] sm:$0xf]
      %v1632 = vld [vmem:[%s5 + $0x88] sm:$0xf]
      %v1633 = vld [vmem:[%s5 + $0x8c] sm:$0xf]
      %v1634 = vld [vmem:[%s5 + $0x90] sm:$0xf]
      %v1635 = vld [vmem:[%s5 + $0x94] sm:$0xf]
      %v1636 = vld [vmem:[%s5 + $0x98] sm:$0xf]
      %v1637 = vld [vmem:[%s5 + $0x9c] sm:$0xf]
      %v1638 = vld [vmem:[%s5 + $0xa0] sm:$0xf]
      %v1639 = vld [vmem:[%s5 + $0xa4] sm:$0xf]
      %v1640 = vld [vmem:[%s5 + $0xa8] sm:$0xf]
      %v1641 = vld [vmem:[%s5 + $0xac] sm:$0xf]
      %v1642 = vld [vmem:[%s5 + $0xb0] sm:$0xf]
      %v1643 = vld [vmem:[%s5 + $0xb4] sm:$0xf]
      %v1644 = vld [vmem:[%s5 + $0xb8] sm:$0xf]
      %v1645 = vld [vmem:[%s5 + $0xbc] sm:$0xf]
      %v1646 = vld [vmem:[%s5 + $0xc0] sm:$0xf]
      %v1647 = vld [vmem:[%s5 + $0xc4] sm:$0xf]
      %v1648 = vld [vmem:[%s5 + $0xc8] sm:$0xf]
      %v1649 = vld [vmem:[%s5 + $0xcc] sm:$0xf]
      %v1650 = vld [vmem:[%s5 + $0xd0] sm:$0xf]
      %v1651 = vld [vmem:[%s5 + $0xd4] sm:$0xf]
      %v1652 = vld [vmem:[%s5 + $0xd8] sm:$0xf]
      %v1653 = vld [vmem:[%s5 + $0xdc] sm:$0xf]
      %v1654 = vld [vmem:[%s5 + $0xe0] sm:$0xf]
      %v1655 = vld [vmem:[%s5 + $0xe4] sm:$0xf]
      %v1656 = vld [vmem:[%s5 + $0xe8] sm:$0xf]
      %v1657 = vld [vmem:[%s5 + $0xec] sm:$0xf]
      %v1658 = vld [vmem:[%s5 + $0xf0] sm:$0xf]
      %v1659 = vld [vmem:[%s5 + $0xf4] sm:$0xf]
      %v1660 = vld [vmem:[%s5 + $0xf8] sm:$0xf]
      %v1661 = vld [vmem:[%s5 + $0xfc] sm:$0xf]
      %v1662 = vld [vmem:[%s5 + $0x100] sm:$0xf]
      %v1663 = vld [vmem:[%s5 + $0x104] sm:$0xf]
      %v1664 = vld [vmem:[%s5 + $0x108] sm:$0xf]
      %v1665 = vld [vmem:[%s5 + $0x10c] sm:$0xf]
      %v1666 = vld [vmem:[%s5 + $0x110] sm:$0xf]
      %v1667 = vld [vmem:[%s5 + $0x114] sm:$0xf]
      %v1668 = vld [vmem:[%s5 + $0x118] sm:$0xf]
      %v1669 = vld [vmem:[%s5 + $0x11c] sm:$0xf]
      %v1670 = vld [vmem:[%s5 + $0x120] sm:$0xf]
      %v1671 = vld [vmem:[%s5 + $0x124] sm:$0xf]
      %v1672 = vld [vmem:[%s5 + $0x128] sm:$0xf]
      %v1673 = vld [vmem:[%s5 + $0x12c] sm:$0xf]
      %v1674 = vld [vmem:[%s5 + $0x130] sm:$0xf]
      %v1675 = vld [vmem:[%s5 + $0x134] sm:$0xf]
      %v1676 = vld [vmem:[%s5 + $0x138] sm:$0xf]
      %v1677 = vld [vmem:[%s5 + $0x13c] sm:$0xf]
      %v1678 = vld [vmem:[%s5 + $0x140] sm:$0xf]
      %v1679 = vld [vmem:[%s5 + $0x144] sm:$0xf]
      %v1680 = vld [vmem:[%s5 + $0x148] sm:$0xf]
      %v1681 = vld [vmem:[%s5 + $0x14c] sm:$0xf]
      %v1682 = vld [vmem:[%s5 + $0x150] sm:$0xf]
      %v1683 = vld [vmem:[%s5 + $0x154] sm:$0xf]
      %v1684 = vld [vmem:[%s5 + $0x158] sm:$0xf]
      %v1685 = vld [vmem:[%s5 + $0x15c] sm:$0xf]
      %v1686 = vld [vmem:[%s5 + $0x160] sm:$0xf]
      %v1687 = vld [vmem:[%s5 + $0x164] sm:$0xf]
      %v1688 = vld [vmem:[%s5 + $0x168] sm:$0xf]
      %v1689 = vld [vmem:[%s5 + $0x16c] sm:$0xf]
      %v1690 = vld [vmem:[%s5 + $0x170] sm:$0xf]
      %v1691 = vld [vmem:[%s5 + $0x174] sm:$0xf]
      %v1692 = vld [vmem:[%s5 + $0x178] sm:$0xf]
      %v1693 = vld [vmem:[%s5 + $0x17c] sm:$0xf]
      %v1694 = vld [vmem:[%s5 + $0x180] sm:$0xf]
      %v1695 = vld [vmem:[%s5 + $0x184] sm:$0xf]
      %v1696 = vld [vmem:[%s5 + $0x188] sm:$0xf]
      %v1697 = vld [vmem:[%s5 + $0x18c] sm:$0xf]
      %v1698 = vld [vmem:[%s5 + $0x190] sm:$0xf]
      %v1699 = vld [vmem:[%s5 + $0x194] sm:$0xf]
      %v1700 = vld [vmem:[%s5 + $0x198] sm:$0xf]
      %v1701 = vld [vmem:[%s5 + $0x19c] sm:$0xf]
      %v1702 = vld [vmem:[%s5 + $0x1a0] sm:$0xf]
      %v1703 = vld [vmem:[%s5 + $0x1a4] sm:$0xf]
      %v1704 = vld [vmem:[%s5 + $0x1a8] sm:$0xf]
      %v1705 = vld [vmem:[%s5 + $0x1ac] sm:$0xf]
      %v1706 = vld [vmem:[%s5 + $0x1b0] sm:$0xf]
      %v1707 = vld [vmem:[%s5 + $0x1b4] sm:$0xf]
      %v1708 = vld [vmem:[%s5 + $0x1b8] sm:$0xf]
      %v1709 = vld [vmem:[%s5 + $0x1bc] sm:$0xf]
      %v1710 = vld [vmem:[%s5 + $0x1c0] sm:$0xf]
      %v1711 = vld [vmem:[%s5 + $0x1c4] sm:$0xf]
      %v1712 = vld [vmem:[%s5 + $0x1c8] sm:$0xf]
      %v1713 = vld [vmem:[%s5 + $0x1cc] sm:$0xf]
      %v1714 = vld [vmem:[%s5 + $0x1d0] sm:$0xf]
      %v1715 = vld [vmem:[%s5 + $0x1d4] sm:$0xf]
      %v1716 = vld [vmem:[%s5 + $0x1d8] sm:$0xf]
      %v1717 = vld [vmem:[%s5 + $0x1dc] sm:$0xf]
      %v1718 = vld [vmem:[%s5 + $0x1e0] sm:$0xf]
      %v1719 = vld [vmem:[%s5 + $0x1e4] sm:$0xf]
      %v1720 = vld [vmem:[%s5 + $0x1e8] sm:$0xf]
      %v1721 = vld [vmem:[%s5 + $0x1ec] sm:$0xf]
      %v1722 = vld [vmem:[%s5 + $0x1f0] sm:$0xf]
      %v1723 = vld [vmem:[%s5 + $0x1f4] sm:$0xf]
      %v1724 = vld [vmem:[%s5 + $0x1f8] sm:$0xf]
      %v1725 = vld [vmem:[%s5 + $0x1fc] sm:$0xf]
      %v1726 = vld [vmem:[%s5 + $0x200] sm:$0xf]
      %v1727 = vld [vmem:[%s5 + $0x204] sm:$0xf]
      %v1728 = vld [vmem:[%s5 + $0x208] sm:$0xf]
      %v1729 = vld [vmem:[%s5 + $0x20c] sm:$0xf]
      %v1730 = vld [vmem:[%s5 + $0x210] sm:$0xf]
      %v1731 = vld [vmem:[%s5 + $0x214] sm:$0xf]
      %v1732 = vld [vmem:[%s5 + $0x218] sm:$0xf]
      %v1733 = vld [vmem:[%s5 + $0x21c] sm:$0xf]
      %v1734 = vld [vmem:[%s5 + $0x220] sm:$0xf]
      %v1735 = vld [vmem:[%s5 + $0x224] sm:$0xf]
      %v1736 = vld [vmem:[%s5 + $0x228] sm:$0xf]
      %v1737 = vld [vmem:[%s5 + $0x22c] sm:$0xf]
      %v1738 = vld [vmem:[%s5 + $0x230] sm:$0xf]
      %v1739 = vld [vmem:[%s5 + $0x234] sm:$0xf]
      %v1740 = vld [vmem:[%s5 + $0x238] sm:$0xf]
      %v1741 = vld [vmem:[%s5 + $0x23c] sm:$0xf]
      %v1742 = vld [vmem:[%s6] sm:$0x1]
      %v1744 = vlaneseq
      %v1745 = vshrl.u32 %v1744, 7
      %v1746 = vsub.s32 0, %v1745
      %v1747 = vrot.slane %v1742, %v1746
      %v1893 = vunpack.c.l.b16 %v1598
      %v1894 = vunpack.c.l.b16 %v1599
      %v1895 = vunpack.c.l.b16 %v1600
      %v1896 = vunpack.c.l.b16 %v1601
      %v1897 = vunpack.c.l.b16 %v1602
      %v1898 = vunpack.c.l.b16 %v1603
      %v1899 = vunpack.c.l.b16 %v1604
      %v1900 = vunpack.c.l.b16 %v1605
      %v1901 = vunpack.c.l.b16 %v1606
      %v1902 = vunpack.c.l.b16 %v1607
      %v1903 = vunpack.c.l.b16 %v1608
      %v1904 = vunpack.c.l.b16 %v1609
      %v1905 = vunpack.c.l.b16 %v1610
      %v1906 = vunpack.c.l.b16 %v1611
      %v1907 = vunpack.c.l.b16 %v1612
      %v1908 = vunpack.c.l.b16 %v1613
      %v1909 = vunpack.c.l.b16 %v1614
      %v1910 = vunpack.c.l.b16 %v1615
      %v1911 = vunpack.c.l.b16 %v1616
      %v1912 = vunpack.c.l.b16 %v1617
      %v1913 = vunpack.c.l.b16 %v1618
      %v1914 = vunpack.c.l.b16 %v1619
      %v1915 = vunpack.c.l.b16 %v1620
      %v1916 = vunpack.c.l.b16 %v1621
      %v1917 = vunpack.c.l.b16 %v1622
      %v1918 = vunpack.c.l.b16 %v1623
      %v1919 = vunpack.c.l.b16 %v1624
      %v1920 = vunpack.c.l.b16 %v1625
      %v1921 = vunpack.c.l.b16 %v1626
      %v1922 = vunpack.c.l.b16 %v1627
      %v1923 = vunpack.c.l.b16 %v1628
      %v1924 = vunpack.c.l.b16 %v1629
      %v1925 = vunpack.c.l.b16 %v1630
      %v1926 = vunpack.c.l.b16 %v1631
      %v1927 = vunpack.c.l.b16 %v1632
      %v1928 = vunpack.c.l.b16 %v1633
      %v1929 = vunpack.c.l.b16 %v1634
      %v1930 = vunpack.c.l.b16 %v1635
      %v1931 = vunpack.c.l.b16 %v1636
      %v1932 = vunpack.c.l.b16 %v1637
      %v1933 = vunpack.c.l.b16 %v1638
      %v1934 = vunpack.c.l.b16 %v1639
      %v1935 = vunpack.c.l.b16 %v1640
      %v1936 = vunpack.c.l.b16 %v1641
      %v1937 = vunpack.c.l.b16 %v1642
      %v1938 = vunpack.c.l.b16 %v1643
      %v1939 = vunpack.c.l.b16 %v1644
      %v1940 = vunpack.c.l.b16 %v1645
      %v1941 = vunpack.c.l.b16 %v1646
      %v1942 = vunpack.c.l.b16 %v1647
      %v1943 = vunpack.c.l.b16 %v1648
      %v1944 = vunpack.c.l.b16 %v1649
      %v1945 = vunpack.c.l.b16 %v1650
      %v1946 = vunpack.c.l.b16 %v1651
      %v1947 = vunpack.c.l.b16 %v1652
      %v1948 = vunpack.c.l.b16 %v1653
      %v1949 = vunpack.c.l.b16 %v1654
      %v1950 = vunpack.c.l.b16 %v1655
      %v1951 = vunpack.c.l.b16 %v1656
      %v1952 = vunpack.c.l.b16 %v1657
      %v1953 = vunpack.c.l.b16 %v1658
      %v1954 = vunpack.c.l.b16 %v1659
      %v1955 = vunpack.c.l.b16 %v1660
      %v1956 = vunpack.c.l.b16 %v1661
      %v1957 = vunpack.c.l.b16 %v1662
      %v1958 = vunpack.c.l.b16 %v1663
      %v1959 = vunpack.c.l.b16 %v1664
      %v1960 = vunpack.c.l.b16 %v1665
      %v1961 = vunpack.c.l.b16 %v1666
      %v1962 = vunpack.c.l.b16 %v1667
      %v1963 = vunpack.c.l.b16 %v1668
      %v1964 = vunpack.c.l.b16 %v1669
      %v1965 = vunpack.c.l.b16 %v1670
      %v1966 = vunpack.c.l.b16 %v1671
      %v1967 = vunpack.c.l.b16 %v1672
      %v1968 = vunpack.c.l.b16 %v1673
      %v1969 = vunpack.c.l.b16 %v1674
      %v1970 = vunpack.c.l.b16 %v1675
      %v1971 = vunpack.c.l.b16 %v1676
      %v1972 = vunpack.c.l.b16 %v1677
      %v1973 = vunpack.c.l.b16 %v1678
      %v1974 = vunpack.c.l.b16 %v1679
      %v1975 = vunpack.c.l.b16 %v1680
      %v1976 = vunpack.c.l.b16 %v1681
      %v1977 = vunpack.c.l.b16 %v1682
      %v1978 = vunpack.c.l.b16 %v1683
      %v1979 = vunpack.c.l.b16 %v1684
      %v1980 = vunpack.c.l.b16 %v1685
      %v1981 = vunpack.c.l.b16 %v1686
      %v1982 = vunpack.c.l.b16 %v1687
      %v1983 = vunpack.c.l.b16 %v1688
      %v1984 = vunpack.c.l.b16 %v1689
      %v1985 = vunpack.c.l.b16 %v1690
      %v1986 = vunpack.c.l.b16 %v1691
      %v1987 = vunpack.c.l.b16 %v1692
      %v1988 = vunpack.c.l.b16 %v1693
      %v1989 = vunpack.c.l.b16 %v1694
      %v1990 = vunpack.c.l.b16 %v1695
      %v1991 = vunpack.c.l.b16 %v1696
      %v1992 = vunpack.c.l.b16 %v1697
      %v1993 = vunpack.c.l.b16 %v1698
      %v1994 = vunpack.c.l.b16 %v1699
      %v1995 = vunpack.c.l.b16 %v1700
      %v1996 = vunpack.c.l.b16 %v1701
      %v1997 = vunpack.c.l.b16 %v1702
      %v1998 = vunpack.c.l.b16 %v1703
      %v1999 = vunpack.c.l.b16 %v1704
      %v2000 = vunpack.c.l.b16 %v1705
      %v2001 = vunpack.c.l.b16 %v1706
      %v2002 = vunpack.c.l.b16 %v1707
      %v2003 = vunpack.c.l.b16 %v1708
      %v2004 = vunpack.c.l.b16 %v1709
      %v2005 = vunpack.c.l.b16 %v1710
      %v2006 = vunpack.c.l.b16 %v1711
      %v2007 = vunpack.c.l.b16 %v1712
      %v2008 = vunpack.c.l.b16 %v1713
      %v2009 = vunpack.c.l.b16 %v1714
      %v2010 = vunpack.c.l.b16 %v1715
      %v2011 = vunpack.c.l.b16 %v1716
      %v2012 = vunpack.c.l.b16 %v1717
      %v2013 = vunpack.c.l.b16 %v1718
      %v2014 = vunpack.c.l.b16 %v1719
      %v2015 = vunpack.c.l.b16 %v1720
      %v2016 = vunpack.c.l.b16 %v1721
      %v2017 = vunpack.c.l.b16 %v1722
      %v2018 = vunpack.c.l.b16 %v1723
      %v2019 = vunpack.c.l.b16 %v1724
      %v2020 = vunpack.c.l.b16 %v1725
      %v2021 = vunpack.c.l.b16 %v1726
      %v2022 = vunpack.c.l.b16 %v1727
      %v2023 = vunpack.c.l.b16 %v1728
      %v2024 = vunpack.c.l.b16 %v1729
      %v2025 = vunpack.c.l.b16 %v1730
      %v2026 = vunpack.c.l.b16 %v1731
      %v2027 = vunpack.c.l.b16 %v1732
      %v2028 = vunpack.c.l.b16 %v1733
      %v2029 = vunpack.c.l.b16 %v1734
      %v2030 = vunpack.c.l.b16 %v1735
      %v2031 = vunpack.c.l.b16 %v1736
      %v2032 = vunpack.c.l.b16 %v1737
      %v2033 = vunpack.c.l.b16 %v1738
      %v2034 = vunpack.c.l.b16 %v1739
      %v2035 = vunpack.c.l.b16 %v1740
      %v2036 = vunpack.c.l.b16 %v1741
      %v2037 = vpack.c.b16 %v1894, %v1893
      %v2038 = vpack.c.b16 %v1896, %v1895
      %v2039 = vpack.c.b16 %v1898, %v1897
      %v2040 = vpack.c.b16 %v1900, %v1899
      %v2041 = vpack.c.b16 %v1902, %v1901
      %v2042 = vpack.c.b16 %v1904, %v1903
      %v2043 = vpack.c.b16 %v1906, %v1905
      %v2044 = vpack.c.b16 %v1908, %v1907
      %v2045 = vpack.c.b16 %v1910, %v1909
      %v2046 = vpack.c.b16 %v1912, %v1911
      %v2047 = vpack.c.b16 %v1914, %v1913
      %v2048 = vpack.c.b16 %v1916, %v1915
      %v2049 = vpack.c.b16 %v1918, %v1917
      %v2050 = vpack.c.b16 %v1920, %v1919
      %v2051 = vpack.c.b16 %v1922, %v1921
      %v2052 = vpack.c.b16 %v1924, %v1923
      %v2053 = vpack.c.b16 %v1926, %v1925
      %v2054 = vpack.c.b16 %v1928, %v1927
      %v2055 = vpack.c.b16 %v1930, %v1929
      %v2056 = vpack.c.b16 %v1932, %v1931
      %v2057 = vpack.c.b16 %v1934, %v1933
      %v2058 = vpack.c.b16 %v1936, %v1935
      %v2059 = vpack.c.b16 %v1938, %v1937
      %v2060 = vpack.c.b16 %v1940, %v1939
      %v2061 = vpack.c.b16 %v1942, %v1941
      %v2062 = vpack.c.b16 %v1944, %v1943
      %v2063 = vpack.c.b16 %v1946, %v1945
      %v2064 = vpack.c.b16 %v1948, %v1947
      %v2065 = vpack.c.b16 %v1950, %v1949
      %v2066 = vpack.c.b16 %v1952, %v1951
      %v2067 = vpack.c.b16 %v1954, %v1953
      %v2068 = vpack.c.b16 %v1956, %v1955
      %v2069 = vpack.c.b16 %v1958, %v1957
      %v2070 = vpack.c.b16 %v1960, %v1959
      %v2071 = vpack.c.b16 %v1962, %v1961
      %v2072 = vpack.c.b16 %v1964, %v1963
      %v2073 = vpack.c.b16 %v1966, %v1965
      %v2074 = vpack.c.b16 %v1968, %v1967
      %v2075 = vpack.c.b16 %v1970, %v1969
      %v2076 = vpack.c.b16 %v1972, %v1971
      %v2077 = vpack.c.b16 %v1974, %v1973
      %v2078 = vpack.c.b16 %v1976, %v1975
      %v2079 = vpack.c.b16 %v1978, %v1977
      %v2080 = vpack.c.b16 %v1980, %v1979
      %v2081 = vpack.c.b16 %v1982, %v1981
      %v2082 = vpack.c.b16 %v1984, %v1983
      %v2083 = vpack.c.b16 %v1986, %v1985
      %v2084 = vpack.c.b16 %v1988, %v1987
      %v2085 = vpack.c.b16 %v1990, %v1989
      %v2086 = vpack.c.b16 %v1992, %v1991
      %v2087 = vpack.c.b16 %v1994, %v1993
      %v2088 = vpack.c.b16 %v1996, %v1995
      %v2089 = vpack.c.b16 %v1998, %v1997
      %v2090 = vpack.c.b16 %v2000, %v1999
      %v2091 = vpack.c.b16 %v2002, %v2001
      %v2092 = vpack.c.b16 %v2004, %v2003
      %v2093 = vpack.c.b16 %v2006, %v2005
      %v2094 = vpack.c.b16 %v2008, %v2007
      %v2095 = vpack.c.b16 %v2010, %v2009
      %v2096 = vpack.c.b16 %v2012, %v2011
      %v2097 = vpack.c.b16 %v2014, %v2013
      %v2098 = vpack.c.b16 %v2016, %v2015
      %v2099 = vpack.c.b16 %v2018, %v2017
      %v2100 = vpack.c.b16 %v2020, %v2019
      %v2101 = vpack.c.b16 %v2022, %v2021
      %v2102 = vpack.c.b16 %v2024, %v2023
      %v2103 = vpack.c.b16 %v2026, %v2025
      %v2104 = vpack.c.b16 %v2028, %v2027
      %v2105 = vpack.c.b16 %v2030, %v2029
      %v2106 = vpack.c.b16 %v2032, %v2031
      %v2107 = vpack.c.b16 %v2034, %v2033
      %v2108 = vpack.c.b16 %v2036, %v2035
      %2181 = vmatprep.subr.bf16.mxu0 0
      %2182 = vmatpush1.bf16.msra.mxu0 %v2044
      %2183 = vmatprep.subr.bf16.mxu0 0
      %2184 = vmatpush1.bf16.msra.mxu0 %v2043
      %2185 = vmatprep.subr.bf16.mxu0 0
      %2186 = vmatpush1.bf16.msra.mxu0 %v2042
      %2187 = vmatprep.subr.bf16.mxu0 0
      %2188 = vmatpush1.bf16.msra.mxu0 %v2041
      %2189 = vmatprep.subr.bf16.mxu0 0
      %2190 = vmatpush1.bf16.msra.mxu0 %v2040
      %2191 = vmatprep.subr.bf16.mxu0 0
      %2192 = vmatpush1.bf16.msra.mxu0 %v2039
      %2193 = vmatprep.subr.bf16.mxu0 0
      %2194 = vmatpush1.bf16.msra.mxu0 %v2038
      %2195 = vmatprep.subr.bf16.mxu0 0
      %2196 = vmatpush1.bf16.msra.mxu0 %v2037
      %2197 = vmatprep.subr.bf16.mxu0 0
      %2198 = vmatpush2.bf16.msra.mxu0 %v2052
      %2199 = vmatprep.subr.bf16.mxu0 0
      %2200 = vmatpush2.bf16.msra.mxu0 %v2051
      %2201 = vmatprep.subr.bf16.mxu0 0
      %2202 = vmatpush2.bf16.msra.mxu0 %v2050
      %2203 = vmatprep.subr.bf16.mxu0 0
      %2204 = vmatpush2.bf16.msra.mxu0 %v2049
      %2205 = vmatprep.subr.bf16.mxu0 0
      %2206 = vmatpush2.bf16.msra.mxu0 %v2048
      %2207 = vmatprep.subr.bf16.mxu0 0
      %2208 = vmatpush2.bf16.msra.mxu0 %v2047
      %2209 = vmatprep.subr.bf16.mxu0 0
      %2210 = vmatpush2.bf16.msra.mxu0 %v2046
      %2211 = vmatprep.subr.bf16.mxu0 0
      %2212 = vmatpush2.bf16.msra.mxu0 %v2045
      %2213 = vmatprep.mubr.bf16.mxu0 %v1245
      %2214 = vmatmul.mubr.bf16.gmra.mxu0 %v1197
      %v2215 = vpop.f32.mrf.mxu0
      %v2216 = vadd.f32 %v1747, %v2215
      %v2217 = vpop.f32.mrf.mxu0
      %v2218 = vpop.f32.mrf.mxu0
      %v2219 = vadd.f32 %v1747, %v2218
      %v2220 = vpop.f32.mrf.mxu0
      %2221 = vmatprep.mubr.bf16.mxu0 %v1246
      %2222 = vmatmul.mubr.bf16.gmra.mxu0 %v1198
      %v2223 = vpop.f32.mrf.mxu0
      %v2224 = vadd.f32 %v1747, %v2223
      %v2225 = vpop.f32.mrf.mxu0
      %v2226 = vpop.f32.mrf.mxu0
      %v2227 = vadd.f32 %v1747, %v2226
      %v2228 = vpop.f32.mrf.mxu0
      %2229 = vmatprep.mubr.bf16.mxu0 %v1247
      %2230 = vmatmul.mubr.bf16.gmra.mxu0 %v1199
      %v2231 = vpop.f32.mrf.mxu0
      %v2232 = vadd.f32 %v1747, %v2231
      %v2233 = vpop.f32.mrf.mxu0
      %v2234 = vpop.f32.mrf.mxu0
      %v2235 = vadd.f32 %v1747, %v2234
      %v2236 = vpop.f32.mrf.mxu0
      %2237 = vmatprep.mubr.bf16.mxu0 %v1248
      %2238 = vmatmul.mubr.bf16.gmra.mxu0 %v1200
      %v2239 = vpop.f32.mrf.mxu0
      %v2240 = vadd.f32 %v1747, %v2239
      %v2241 = vpop.f32.mrf.mxu0
      %v2242 = vpop.f32.mrf.mxu0
      %v2243 = vadd.f32 %v1747, %v2242
      %v2244 = vpop.f32.mrf.mxu0
      %2245 = vmatprep.mubr.bf16.mxu0 %v1249
      %2246 = vmatmul.mubr.bf16.gmra.mxu0 %v1201
      %v2247 = vpop.f32.mrf.mxu0
      %v2248 = vadd.f32 %v1747, %v2247
      %v2249 = vpop.f32.mrf.mxu0
      %v2250 = vpop.f32.mrf.mxu0
      %v2251 = vadd.f32 %v1747, %v2250
      %v2252 = vpop.f32.mrf.mxu0
      %2253 = vmatprep.mubr.bf16.mxu0 %v1250
      %2254 = vmatmul.mubr.bf16.gmra.mxu0 %v1202
      %v2255 = vpop.f32.mrf.mxu0
      %v2256 = vadd.f32 %v1747, %v2255
      %v2257 = vpop.f32.mrf.mxu0
      %v2258 = vpop.f32.mrf.mxu0
      %v2259 = vadd.f32 %v1747, %v2258
      %v2260 = vpop.f32.mrf.mxu0
      %2261 = vmatprep.mubr.bf16.mxu0 %v1251
      %2262 = vmatmul.mubr.bf16.gmra.mxu0 %v1203
      %v2263 = vpop.f32.mrf.mxu0
      %v2264 = vadd.f32 %v1747, %v2263
      %v2265 = vpop.f32.mrf.mxu0
      %v2266 = vpop.f32.mrf.mxu0
      %v2267 = vadd.f32 %v1747, %v2266
      %v2268 = vpop.f32.mrf.mxu0
      %2269 = vmatprep.mubr.bf16.mxu0 %v1252
      %2270 = vmatmul.mubr.bf16.gmra.mxu0 %v1204
      %v2271 = vpop.f32.mrf.mxu0
      %v2272 = vadd.f32 %v1747, %v2271
      %v2273 = vpop.f32.mrf.mxu0
      %v2274 = vpop.f32.mrf.mxu0
      %v2275 = vadd.f32 %v1747, %v2274
      %v2276 = vpop.f32.mrf.mxu0
      %2277 = vmatprep.mubr.bf16.mxu0 %v1253
      %2278 = vmatmul.mubr.bf16.gmra.mxu0 %v1205
      %v2279 = vpop.f32.mrf.mxu0
      %v2280 = vadd.f32 %v1747, %v2279
      %v2281 = vpop.f32.mrf.mxu0
      %v2282 = vpop.f32.mrf.mxu0
      %v2283 = vadd.f32 %v1747, %v2282
      %v2284 = vpop.f32.mrf.mxu0
      %2285 = vmatprep.mubr.bf16.mxu0 %v1254
      %2286 = vmatmul.mubr.bf16.gmra.mxu0 %v1206
      %v2287 = vpop.f32.mrf.mxu0
      %v2288 = vadd.f32 %v1747, %v2287
      %v2289 = vpop.f32.mrf.mxu0
      %v2290 = vpop.f32.mrf.mxu0
      %v2291 = vadd.f32 %v1747, %v2290
      %v2292 = vpop.f32.mrf.mxu0
      %2293 = vmatprep.mubr.bf16.mxu0 %v1255
      %2294 = vmatmul.mubr.bf16.gmra.mxu0 %v1207
      %v2295 = vpop.f32.mrf.mxu0
      %v2296 = vadd.f32 %v1747, %v2295
      %v2297 = vpop.f32.mrf.mxu0
      %v2298 = vpop.f32.mrf.mxu0
      %v2299 = vadd.f32 %v1747, %v2298
      %v2300 = vpop.f32.mrf.mxu0
      %2301 = vmatprep.mubr.bf16.mxu0 %v1256
      %2302 = vmatmul.mubr.bf16.gmra.mxu0 %v1208
      %v2303 = vpop.f32.mrf.mxu0
      %v2304 = vadd.f32 %v1747, %v2303
      %v2305 = vpop.f32.mrf.mxu0
      %v2306 = vpop.f32.mrf.mxu0
      %v2307 = vadd.f32 %v1747, %v2306
      %v2308 = vpop.f32.mrf.mxu0
      %2309 = vmatprep.mubr.bf16.mxu0 %v1257
      %2310 = vmatmul.mubr.bf16.gmra.mxu0 %v1209
      %v2311 = vpop.f32.mrf.mxu0
      %v2312 = vadd.f32 %v1747, %v2311
      %v2313 = vpop.f32.mrf.mxu0
      %v2314 = vpop.f32.mrf.mxu0
      %v2315 = vadd.f32 %v1747, %v2314
      %v2316 = vpop.f32.mrf.mxu0
      %2317 = vmatprep.mubr.bf16.mxu0 %v1258
      %2318 = vmatmul.mubr.bf16.gmra.mxu0 %v1210
      %v2319 = vpop.f32.mrf.mxu0
      %v2320 = vadd.f32 %v1747, %v2319
      %v2321 = vpop.f32.mrf.mxu0
      %v2322 = vpop.f32.mrf.mxu0
      %v2323 = vadd.f32 %v1747, %v2322
      %v2324 = vpop.f32.mrf.mxu0
      %2325 = vmatprep.mubr.bf16.mxu0 %v1259
      %2326 = vmatmul.mubr.bf16.gmra.mxu0 %v1211
      %v2327 = vpop.f32.mrf.mxu0
      %v2328 = vadd.f32 %v1747, %v2327
      %v2329 = vpop.f32.mrf.mxu0
      %v2330 = vpop.f32.mrf.mxu0
      %v2331 = vadd.f32 %v1747, %v2330
      %v2332 = vpop.f32.mrf.mxu0
      %2333 = vmatprep.mubr.bf16.mxu0 %v1260
      %2334 = vmatmul.mubr.bf16.gmra.mxu0 %v1212
      %v2335 = vpop.f32.mrf.mxu0
      %v2336 = vadd.f32 %v1747, %v2335
      %v2337 = vpop.f32.mrf.mxu0
      %v2338 = vpop.f32.mrf.mxu0
      %v2339 = vadd.f32 %v1747, %v2338
      %v2340 = vpop.f32.mrf.mxu0
      %2341 = vdwg.mxu0
      %2342 = vmatprep.subr.bf16.mxu0 0
      %2343 = vmatpush1.bf16.msra.mxu0 %v2060
      %2344 = vmatprep.subr.bf16.mxu0 0
      %2345 = vmatpush1.bf16.msra.mxu0 %v2059
      %2346 = vmatprep.subr.bf16.mxu0 0
      %2347 = vmatpush1.bf16.msra.mxu0 %v2058
      %2348 = vmatprep.subr.bf16.mxu0 0
      %2349 = vmatpush1.bf16.msra.mxu0 %v2057
      %2350 = vmatprep.subr.bf16.mxu0 0
      %2351 = vmatpush1.bf16.msra.mxu0 %v2056
      %2352 = vmatprep.subr.bf16.mxu0 0
      %2353 = vmatpush1.bf16.msra.mxu0 %v2055
      %2354 = vmatprep.subr.bf16.mxu0 0
      %2355 = vmatpush1.bf16.msra.mxu0 %v2054
      %2356 = vmatprep.subr.bf16.mxu0 0
      %2357 = vmatpush1.bf16.msra.mxu0 %v2053
      %2358 = vmatprep.subr.bf16.mxu0 0
      %2359 = vmatpush2.bf16.msra.mxu0 %v2068
      %2360 = vmatprep.subr.bf16.mxu0 0
      %2361 = vmatpush2.bf16.msra.mxu0 %v2067
      %2362 = vmatprep.subr.bf16.mxu0 0
      %2363 = vmatpush2.bf16.msra.mxu0 %v2066
      %2364 = vmatprep.subr.bf16.mxu0 0
      %2365 = vmatpush2.bf16.msra.mxu0 %v2065
      %2366 = vmatprep.subr.bf16.mxu0 0
      %2367 = vmatpush2.bf16.msra.mxu0 %v2064
      %2368 = vmatprep.subr.bf16.mxu0 0
      %2369 = vmatpush2.bf16.msra.mxu0 %v2063
      %2370 = vmatprep.subr.bf16.mxu0 0
      %2371 = vmatpush2.bf16.msra.mxu0 %v2062
      %2372 = vmatprep.subr.bf16.mxu0 0
      %2373 = vmatpush2.bf16.msra.mxu0 %v2061
      %2374 = vmatprep.mubr.bf16.mxu0 %v1341
      %2375 = vmatmul.mubr.bf16.gmra.mxu0 %v1293
      %v2376 = vpop.f32.mrf.mxu0
      %v2377 = vadd.f32 %v2216, %v2376
      %v2378 = vpop.f32.mrf.mxu0
      %v2379 = vpop.f32.mrf.mxu0
      %v2380 = vadd.f32 %v2219, %v2379
      %v2381 = vpop.f32.mrf.mxu0
      %2382 = vmatprep.mubr.bf16.mxu0 %v1342
      %2383 = vmatmul.mubr.bf16.gmra.mxu0 %v1294
      %v2384 = vpop.f32.mrf.mxu0
      %v2385 = vadd.f32 %v2224, %v2384
      %v2386 = vpop.f32.mrf.mxu0
      %v2387 = vpop.f32.mrf.mxu0
      %v2388 = vadd.f32 %v2227, %v2387
      %v2389 = vpop.f32.mrf.mxu0
      %2390 = vmatprep.mubr.bf16.mxu0 %v1343
      %2391 = vmatmul.mubr.bf16.gmra.mxu0 %v1295
      %v2392 = vpop.f32.mrf.mxu0
      %v2393 = vadd.f32 %v2232, %v2392
      %v2394 = vpop.f32.mrf.mxu0
      %v2395 = vpop.f32.mrf.mxu0
      %v2396 = vadd.f32 %v2235, %v2395
      %v2397 = vpop.f32.mrf.mxu0
      %2398 = vmatprep.mubr.bf16.mxu0 %v1344
      %2399 = vmatmul.mubr.bf16.gmra.mxu0 %v1296
      %v2400 = vpop.f32.mrf.mxu0
      %v2401 = vadd.f32 %v2240, %v2400
      %v2402 = vpop.f32.mrf.mxu0
      %v2403 = vpop.f32.mrf.mxu0
      %v2404 = vadd.f32 %v2243, %v2403
      %v2405 = vpop.f32.mrf.mxu0
      %2406 = vmatprep.mubr.bf16.mxu0 %v1345
      %2407 = vmatmul.mubr.bf16.gmra.mxu0 %v1297
      %v2408 = vpop.f32.mrf.mxu0
      %v2409 = vadd.f32 %v2248, %v2408
      %v2410 = vpop.f32.mrf.mxu0
      %v2411 = vpop.f32.mrf.mxu0
      %v2412 = vadd.f32 %v2251, %v2411
      %v2413 = vpop.f32.mrf.mxu0
      %2414 = vmatprep.mubr.bf16.mxu0 %v1346
      %2415 = vmatmul.mubr.bf16.gmra.mxu0 %v1298
      %v2416 = vpop.f32.mrf.mxu0
      %v2417 = vadd.f32 %v2256, %v2416
      %v2418 = vpop.f32.mrf.mxu0
      %v2419 = vpop.f32.mrf.mxu0
      %v2420 = vadd.f32 %v2259, %v2419
      %v2421 = vpop.f32.mrf.mxu0
      %2422 = vmatprep.mubr.bf16.mxu0 %v1347
      %2423 = vmatmul.mubr.bf16.gmra.mxu0 %v1299
      %v2424 = vpop.f32.mrf.mxu0
      %v2425 = vadd.f32 %v2264, %v2424
      %v2426 = vpop.f32.mrf.mxu0
      %v2427 = vpop.f32.mrf.mxu0
      %v2428 = vadd.f32 %v2267, %v2427
      %v2429 = vpop.f32.mrf.mxu0
      %2430 = vmatprep.mubr.bf16.mxu0 %v1348
      %2431 = vmatmul.mubr.bf16.gmra.mxu0 %v1300
      %v2432 = vpop.f32.mrf.mxu0
      %v2433 = vadd.f32 %v2272, %v2432
      %v2434 = vpop.f32.mrf.mxu0
      %v2435 = vpop.f32.mrf.mxu0
      %v2436 = vadd.f32 %v2275, %v2435
      %v2437 = vpop.f32.mrf.mxu0
      %2438 = vmatprep.mubr.bf16.mxu0 %v1349
      %2439 = vmatmul.mubr.bf16.gmra.mxu0 %v1301
      %v2440 = vpop.f32.mrf.mxu0
      %v2441 = vadd.f32 %v2280, %v2440
      %v2442 = vpop.f32.mrf.mxu0
      %v2443 = vpop.f32.mrf.mxu0
      %v2444 = vadd.f32 %v2283, %v2443
      %v2445 = vpop.f32.mrf.mxu0
      %2446 = vmatprep.mubr.bf16.mxu0 %v1350
      %2447 = vmatmul.mubr.bf16.gmra.mxu0 %v1302
      %v2448 = vpop.f32.mrf.mxu0
      %v2449 = vadd.f32 %v2288, %v2448
      %v2450 = vpop.f32.mrf.mxu0
      %v2451 = vpop.f32.mrf.mxu0
      %v2452 = vadd.f32 %v2291, %v2451
      %v2453 = vpop.f32.mrf.mxu0
      %2454 = vmatprep.mubr.bf16.mxu0 %v1351
      %2455 = vmatmul.mubr.bf16.gmra.mxu0 %v1303
      %v2456 = vpop.f32.mrf.mxu0
      %v2457 = vadd.f32 %v2296, %v2456
      %v2458 = vpop.f32.mrf.mxu0
      %v2459 = vpop.f32.mrf.mxu0
      %v2460 = vadd.f32 %v2299, %v2459
      %v2461 = vpop.f32.mrf.mxu0
      %2462 = vmatprep.mubr.bf16.mxu0 %v1352
      %2463 = vmatmul.mubr.bf16.gmra.mxu0 %v1304
      %v2464 = vpop.f32.mrf.mxu0
      %v2465 = vadd.f32 %v2304, %v2464
      %v2466 = vpop.f32.mrf.mxu0
      %v2467 = vpop.f32.mrf.mxu0
      %v2468 = vadd.f32 %v2307, %v2467
      %v2469 = vpop.f32.mrf.mxu0
      %2470 = vmatprep.mubr.bf16.mxu0 %v1353
      %2471 = vmatmul.mubr.bf16.gmra.mxu0 %v1305
      %v2472 = vpop.f32.mrf.mxu0
      %v2473 = vadd.f32 %v2312, %v2472
      %v2474 = vpop.f32.mrf.mxu0
      %v2475 = vpop.f32.mrf.mxu0
      %v2476 = vadd.f32 %v2315, %v2475
      %v2477 = vpop.f32.mrf.mxu0
      %2478 = vmatprep.mubr.bf16.mxu0 %v1354
      %2479 = vmatmul.mubr.bf16.gmra.mxu0 %v1306
      %v2480 = vpop.f32.mrf.mxu0
      %v2481 = vadd.f32 %v2320, %v2480
      %v2482 = vpop.f32.mrf.mxu0
      %v2483 = vpop.f32.mrf.mxu0
      %v2484 = vadd.f32 %v2323, %v2483
      %v2485 = vpop.f32.mrf.mxu0
      %2486 = vmatprep.mubr.bf16.mxu0 %v1355
      %2487 = vmatmul.mubr.bf16.gmra.mxu0 %v1307
      %v2488 = vpop.f32.mrf.mxu0
      %v2489 = vadd.f32 %v2328, %v2488
      %v2490 = vpop.f32.mrf.mxu0
      %v2491 = vpop.f32.mrf.mxu0
      %v2492 = vadd.f32 %v2331, %v2491
      %v2493 = vpop.f32.mrf.mxu0
      %2494 = vmatprep.mubr.bf16.mxu0 %v1356
      %2495 = vmatmul.mubr.bf16.gmra.mxu0 %v1308
      %v2496 = vpop.f32.mrf.mxu0
      %v2497 = vadd.f32 %v2336, %v2496
      %v2498 = vpop.f32.mrf.mxu0
      %v2499 = vpop.f32.mrf.mxu0
      %v2500 = vadd.f32 %v2339, %v2499
      %v2501 = vpop.f32.mrf.mxu0
      %2502 = vdwg.mxu0
      %2503 = vmatprep.subr.bf16.mxu0 0
      %2504 = vmatpush1.bf16.msra.mxu0 %v2076
      %2505 = vmatprep.subr.bf16.mxu0 0
      %2506 = vmatpush1.bf16.msra.mxu0 %v2075
      %2507 = vmatprep.subr.bf16.mxu0 0
      %2508 = vmatpush1.bf16.msra.mxu0 %v2074
      %2509 = vmatprep.subr.bf16.mxu0 0
      %2510 = vmatpush1.bf16.msra.mxu0 %v2073
      %2511 = vmatprep.subr.bf16.mxu0 0
      %2512 = vmatpush1.bf16.msra.mxu0 %v2072
      %2513 = vmatprep.subr.bf16.mxu0 0
      %2514 = vmatpush1.bf16.msra.mxu0 %v2071
      %2515 = vmatprep.subr.bf16.mxu0 0
      %2516 = vmatpush1.bf16.msra.mxu0 %v2070
      %2517 = vmatprep.subr.bf16.mxu0 0
      %2518 = vmatpush1.bf16.msra.mxu0 %v2069
      %2519 = vmatprep.subr.bf16.mxu0 0
      %2520 = vmatpush2.bf16.msra.mxu0 %v2084
      %2521 = vmatprep.subr.bf16.mxu0 0
      %2522 = vmatpush2.bf16.msra.mxu0 %v2083
      %2523 = vmatprep.subr.bf16.mxu0 0
      %2524 = vmatpush2.bf16.msra.mxu0 %v2082
      %2525 = vmatprep.subr.bf16.mxu0 0
      %2526 = vmatpush2.bf16.msra.mxu0 %v2081
      %2527 = vmatprep.subr.bf16.mxu0 0
      %2528 = vmatpush2.bf16.msra.mxu0 %v2080
      %2529 = vmatprep.subr.bf16.mxu0 0
      %2530 = vmatpush2.bf16.msra.mxu0 %v2079
      %2531 = vmatprep.subr.bf16.mxu0 0
      %2532 = vmatpush2.bf16.msra.mxu0 %v2078
      %2533 = vmatprep.subr.bf16.mxu0 0
      %2534 = vmatpush2.bf16.msra.mxu0 %v2077
      %2535 = vmatprep.mubr.bf16.mxu0 %v1437
      %2536 = vmatmul.mubr.bf16.gmra.mxu0 %v1389
      %v2537 = vpop.f32.mrf.mxu0
      %v2538 = vadd.f32 %v2377, %v2537
      %v2539 = vpop.f32.mrf.mxu0
      %v2540 = vpop.f32.mrf.mxu0
      %v2541 = vadd.f32 %v2380, %v2540
      %v2542 = vpop.f32.mrf.mxu0
      %2543 = vmatprep.mubr.bf16.mxu0 %v1438
      %2544 = vmatmul.mubr.bf16.gmra.mxu0 %v1390
      %v2545 = vpop.f32.mrf.mxu0
      %v2546 = vadd.f32 %v2385, %v2545
      %v2547 = vpop.f32.mrf.mxu0
      %v2548 = vpop.f32.mrf.mxu0
      %v2549 = vadd.f32 %v2388, %v2548
      %v2550 = vpop.f32.mrf.mxu0
      %2551 = vmatprep.mubr.bf16.mxu0 %v1439
      %2552 = vmatmul.mubr.bf16.gmra.mxu0 %v1391
      %v2553 = vpop.f32.mrf.mxu0
      %v2554 = vadd.f32 %v2393, %v2553
      %v2555 = vpop.f32.mrf.mxu0
      %v2556 = vpop.f32.mrf.mxu0
      %v2557 = vadd.f32 %v2396, %v2556
      %v2558 = vpop.f32.mrf.mxu0
      %2559 = vmatprep.mubr.bf16.mxu0 %v1440
      %2560 = vmatmul.mubr.bf16.gmra.mxu0 %v1392
      %v2561 = vpop.f32.mrf.mxu0
      %v2562 = vadd.f32 %v2401, %v2561
      %v2563 = vpop.f32.mrf.mxu0
      %v2564 = vpop.f32.mrf.mxu0
      %v2565 = vadd.f32 %v2404, %v2564
      %v2566 = vpop.f32.mrf.mxu0
      %2567 = vmatprep.mubr.bf16.mxu0 %v1441
      %2568 = vmatmul.mubr.bf16.gmra.mxu0 %v1393
      %v2569 = vpop.f32.mrf.mxu0
      %v2570 = vadd.f32 %v2409, %v2569
      %v2571 = vpop.f32.mrf.mxu0
      %v2572 = vpop.f32.mrf.mxu0
      %v2573 = vadd.f32 %v2412, %v2572
      %v2574 = vpop.f32.mrf.mxu0
      %2575 = vmatprep.mubr.bf16.mxu0 %v1442
      %2576 = vmatmul.mubr.bf16.gmra.mxu0 %v1394
      %v2577 = vpop.f32.mrf.mxu0
      %v2578 = vadd.f32 %v2417, %v2577
      %v2579 = vpop.f32.mrf.mxu0
      %v2580 = vpop.f32.mrf.mxu0
      %v2581 = vadd.f32 %v2420, %v2580
      %v2582 = vpop.f32.mrf.mxu0
      %2583 = vmatprep.mubr.bf16.mxu0 %v1443
      %2584 = vmatmul.mubr.bf16.gmra.mxu0 %v1395
      %v2585 = vpop.f32.mrf.mxu0
      %v2586 = vadd.f32 %v2425, %v2585
      %v2587 = vpop.f32.mrf.mxu0
      %v2588 = vpop.f32.mrf.mxu0
      %v2589 = vadd.f32 %v2428, %v2588
      %v2590 = vpop.f32.mrf.mxu0
      %2591 = vmatprep.mubr.bf16.mxu0 %v1444
      %2592 = vmatmul.mubr.bf16.gmra.mxu0 %v1396
      %v2593 = vpop.f32.mrf.mxu0
      %v2594 = vadd.f32 %v2433, %v2593
      %v2595 = vpop.f32.mrf.mxu0
      %v2596 = vpop.f32.mrf.mxu0
      %v2597 = vadd.f32 %v2436, %v2596
      %v2598 = vpop.f32.mrf.mxu0
      %2599 = vmatprep.mubr.bf16.mxu0 %v1445
      %2600 = vmatmul.mubr.bf16.gmra.mxu0 %v1397
      %v2601 = vpop.f32.mrf.mxu0
      %v2602 = vadd.f32 %v2441, %v2601
      %v2603 = vpop.f32.mrf.mxu0
      %v2604 = vpop.f32.mrf.mxu0
      %v2605 = vadd.f32 %v2444, %v2604
      %v2606 = vpop.f32.mrf.mxu0
      %2607 = vmatprep.mubr.bf16.mxu0 %v1446
      %2608 = vmatmul.mubr.bf16.gmra.mxu0 %v1398
      %v2609 = vpop.f32.mrf.mxu0
      %v2610 = vadd.f32 %v2449, %v2609
      %v2611 = vpop.f32.mrf.mxu0
      %v2612 = vpop.f32.mrf.mxu0
      %v2613 = vadd.f32 %v2452, %v2612
      %v2614 = vpop.f32.mrf.mxu0
      %2615 = vmatprep.mubr.bf16.mxu0 %v1447
      %2616 = vmatmul.mubr.bf16.gmra.mxu0 %v1399
      %v2617 = vpop.f32.mrf.mxu0
      %v2618 = vadd.f32 %v2457, %v2617
      %v2619 = vpop.f32.mrf.mxu0
      %v2620 = vpop.f32.mrf.mxu0
      %v2621 = vadd.f32 %v2460, %v2620
      %v2622 = vpop.f32.mrf.mxu0
      %2623 = vmatprep.mubr.bf16.mxu0 %v1448
      %2624 = vmatmul.mubr.bf16.gmra.mxu0 %v1400
      %v2625 = vpop.f32.mrf.mxu0
      %v2626 = vadd.f32 %v2465, %v2625
      %v2627 = vpop.f32.mrf.mxu0
      %v2628 = vpop.f32.mrf.mxu0
      %v2629 = vadd.f32 %v2468, %v2628
      %v2630 = vpop.f32.mrf.mxu0
      %2631 = vmatprep.mubr.bf16.mxu0 %v1449
      %2632 = vmatmul.mubr.bf16.gmra.mxu0 %v1401
      %v2633 = vpop.f32.mrf.mxu0
      %v2634 = vadd.f32 %v2473, %v2633
      %v2635 = vpop.f32.mrf.mxu0
      %v2636 = vpop.f32.mrf.mxu0
      %v2637 = vadd.f32 %v2476, %v2636
      %v2638 = vpop.f32.mrf.mxu0
      %2639 = vmatprep.mubr.bf16.mxu0 %v1450
      %2640 = vmatmul.mubr.bf16.gmra.mxu0 %v1402
      %v2641 = vpop.f32.mrf.mxu0
      %v2642 = vadd.f32 %v2481, %v2641
      %v2643 = vpop.f32.mrf.mxu0
      %v2644 = vpop.f32.mrf.mxu0
      %v2645 = vadd.f32 %v2484, %v2644
      %v2646 = vpop.f32.mrf.mxu0
      %2647 = vmatprep.mubr.bf16.mxu0 %v1451
      %2648 = vmatmul.mubr.bf16.gmra.mxu0 %v1403
      %v2649 = vpop.f32.mrf.mxu0
      %v2650 = vadd.f32 %v2489, %v2649
      %v2651 = vpop.f32.mrf.mxu0
      %v2652 = vpop.f32.mrf.mxu0
      %v2653 = vadd.f32 %v2492, %v2652
      %v2654 = vpop.f32.mrf.mxu0
      %2655 = vmatprep.mubr.bf16.mxu0 %v1452
      %2656 = vmatmul.mubr.bf16.gmra.mxu0 %v1404
      %v2657 = vpop.f32.mrf.mxu0
      %v2658 = vadd.f32 %v2497, %v2657
      %v2659 = vpop.f32.mrf.mxu0
      %v2660 = vpop.f32.mrf.mxu0
      %v2661 = vadd.f32 %v2500, %v2660
      %v2662 = vpop.f32.mrf.mxu0
      %2663 = vdwg.mxu0
      %2664 = vmatprep.subr.bf16.mxu0 0
      %2665 = vmatpush1.bf16.msra.mxu0 %v2092
      %2666 = vmatprep.subr.bf16.mxu0 0
      %2667 = vmatpush1.bf16.msra.mxu0 %v2091
      %2668 = vmatprep.subr.bf16.mxu0 0
      %2669 = vmatpush1.bf16.msra.mxu0 %v2090
      %2670 = vmatprep.subr.bf16.mxu0 0
      %2671 = vmatpush1.bf16.msra.mxu0 %v2089
      %2672 = vmatprep.subr.bf16.mxu0 0
      %2673 = vmatpush1.bf16.msra.mxu0 %v2088
      %2674 = vmatprep.subr.bf16.mxu0 0
      %2675 = vmatpush1.bf16.msra.mxu0 %v2087
      %2676 = vmatprep.subr.bf16.mxu0 0
      %2677 = vmatpush1.bf16.msra.mxu0 %v2086
      %2678 = vmatprep.subr.bf16.mxu0 0
      %2679 = vmatpush1.bf16.msra.mxu0 %v2085
      %2680 = vmatprep.subr.bf16.mxu0 0
      %2681 = vmatpush2.bf16.msra.mxu0 %v2100
      %2682 = vmatprep.subr.bf16.mxu0 0
      %2683 = vmatpush2.bf16.msra.mxu0 %v2099
      %2684 = vmatprep.subr.bf16.mxu0 0
      %2685 = vmatpush2.bf16.msra.mxu0 %v2098
      %2686 = vmatprep.subr.bf16.mxu0 0
      %2687 = vmatpush2.bf16.msra.mxu0 %v2097
      %2688 = vmatprep.subr.bf16.mxu0 0
      %2689 = vmatpush2.bf16.msra.mxu0 %v2096
      %2690 = vmatprep.subr.bf16.mxu0 0
      %2691 = vmatpush2.bf16.msra.mxu0 %v2095
      %2692 = vmatprep.subr.bf16.mxu0 0
      %2693 = vmatpush2.bf16.msra.mxu0 %v2094
      %2694 = vmatprep.subr.bf16.mxu0 0
      %2695 = vmatpush2.bf16.msra.mxu0 %v2093
      %2696 = vmatprep.mubr.bf16.mxu0 %v1534
      %2697 = vmatmul.mubr.bf16.gmra.mxu0 %v1486
      %v2698 = vpop.f32.mrf.mxu0
      %v2699 = vadd.f32 %v2538, %v2698
      %v2700 = vpop.f32.mrf.mxu0
      %v2701 = vpop.f32.mrf.mxu0
      %v2702 = vadd.f32 %v2541, %v2701
      %v2703 = vpop.f32.mrf.mxu0
      %2704 = vmatprep.mubr.bf16.mxu0 %v1535
      %2705 = vmatmul.mubr.bf16.gmra.mxu0 %v1487
      %v2706 = vpop.f32.mrf.mxu0
      %v2707 = vadd.f32 %v2546, %v2706
      %v2708 = vpop.f32.mrf.mxu0
      %v2709 = vpop.f32.mrf.mxu0
      %v2710 = vadd.f32 %v2549, %v2709
      %v2711 = vpop.f32.mrf.mxu0
      %2712 = vmatprep.mubr.bf16.mxu0 %v1536
      %2713 = vmatmul.mubr.bf16.gmra.mxu0 %v1488
      %v2714 = vpop.f32.mrf.mxu0
      %v2715 = vadd.f32 %v2554, %v2714
      %v2716 = vpop.f32.mrf.mxu0
      %v2717 = vpop.f32.mrf.mxu0
      %v2718 = vadd.f32 %v2557, %v2717
      %v2719 = vpop.f32.mrf.mxu0
      %2720 = vmatprep.mubr.bf16.mxu0 %v1537
      %2721 = vmatmul.mubr.bf16.gmra.mxu0 %v1489
      %v2722 = vpop.f32.mrf.mxu0
      %v2723 = vadd.f32 %v2562, %v2722
      %v2724 = vpop.f32.mrf.mxu0
      %v2725 = vpop.f32.mrf.mxu0
      %v2726 = vadd.f32 %v2565, %v2725
      %v2727 = vpop.f32.mrf.mxu0
      %2728 = vmatprep.mubr.bf16.mxu0 %v1538
      %2729 = vmatmul.mubr.bf16.gmra.mxu0 %v1490
      %v2730 = vpop.f32.mrf.mxu0
      %v2731 = vadd.f32 %v2570, %v2730
      %v2732 = vpop.f32.mrf.mxu0
      %v2733 = vpop.f32.mrf.mxu0
      %v2734 = vadd.f32 %v2573, %v2733
      %v2735 = vpop.f32.mrf.mxu0
      %2736 = vmatprep.mubr.bf16.mxu0 %v1539
      %2737 = vmatmul.mubr.bf16.gmra.mxu0 %v1491
      %v2738 = vpop.f32.mrf.mxu0
      %v2739 = vadd.f32 %v2578, %v2738
      %v2740 = vpop.f32.mrf.mxu0
      %v2741 = vpop.f32.mrf.mxu0
      %v2742 = vadd.f32 %v2581, %v2741
      %v2743 = vpop.f32.mrf.mxu0
      %2744 = vmatprep.mubr.bf16.mxu0 %v1540
      %2745 = vmatmul.mubr.bf16.gmra.mxu0 %v1492
      %v2746 = vpop.f32.mrf.mxu0
      %v2747 = vadd.f32 %v2586, %v2746
      %v2748 = vpop.f32.mrf.mxu0
      %v2749 = vpop.f32.mrf.mxu0
      %v2750 = vadd.f32 %v2589, %v2749
      %v2751 = vpop.f32.mrf.mxu0
      %2752 = vmatprep.mubr.bf16.mxu0 %v1541
      %2753 = vmatmul.mubr.bf16.gmra.mxu0 %v1493
      %v2754 = vpop.f32.mrf.mxu0
      %v2755 = vadd.f32 %v2594, %v2754
      %v2756 = vpop.f32.mrf.mxu0
      %v2757 = vpop.f32.mrf.mxu0
      %v2758 = vadd.f32 %v2597, %v2757
      %v2759 = vpop.f32.mrf.mxu0
      %2760 = vmatprep.mubr.bf16.mxu0 %v1542
      %2761 = vmatmul.mubr.bf16.gmra.mxu0 %v1494
      %v2762 = vpop.f32.mrf.mxu0
      %v2763 = vadd.f32 %v2602, %v2762
      %v2764 = vpop.f32.mrf.mxu0
      %v2765 = vpop.f32.mrf.mxu0
      %v2766 = vadd.f32 %v2605, %v2765
      %v2767 = vpop.f32.mrf.mxu0
      %2768 = vmatprep.mubr.bf16.mxu0 %v1543
      %2769 = vmatmul.mubr.bf16.gmra.mxu0 %v1495
      %v2770 = vpop.f32.mrf.mxu0
      %v2771 = vadd.f32 %v2610, %v2770
      %v2772 = vpop.f32.mrf.mxu0
      %v2773 = vpop.f32.mrf.mxu0
      %v2774 = vadd.f32 %v2613, %v2773
      %v2775 = vpop.f32.mrf.mxu0
      %2776 = vmatprep.mubr.bf16.mxu0 %v1544
      %2777 = vmatmul.mubr.bf16.gmra.mxu0 %v1496
      %v2778 = vpop.f32.mrf.mxu0
      %v2779 = vadd.f32 %v2618, %v2778
      %v2780 = vpop.f32.mrf.mxu0
      %v2781 = vpop.f32.mrf.mxu0
      %v2782 = vadd.f32 %v2621, %v2781
      %v2783 = vpop.f32.mrf.mxu0
      %2784 = vmatprep.mubr.bf16.mxu0 %v1545
      %2785 = vmatmul.mubr.bf16.gmra.mxu0 %v1497
      %v2786 = vpop.f32.mrf.mxu0
      %v2787 = vadd.f32 %v2626, %v2786
      %v2788 = vpop.f32.mrf.mxu0
      %v2789 = vpop.f32.mrf.mxu0
      %v2790 = vadd.f32 %v2629, %v2789
      %v2791 = vpop.f32.mrf.mxu0
      %2792 = vmatprep.mubr.bf16.mxu0 %v1546
      %2793 = vmatmul.mubr.bf16.gmra.mxu0 %v1498
      %v2794 = vpop.f32.mrf.mxu0
      %v2795 = vadd.f32 %v2634, %v2794
      %v2796 = vpop.f32.mrf.mxu0
      %v2797 = vpop.f32.mrf.mxu0
      %v2798 = vadd.f32 %v2637, %v2797
      %v2799 = vpop.f32.mrf.mxu0
      %2800 = vmatprep.mubr.bf16.mxu0 %v1547
      %2801 = vmatmul.mubr.bf16.gmra.mxu0 %v1499
      %v2802 = vpop.f32.mrf.mxu0
      %v2803 = vadd.f32 %v2642, %v2802
      %v2804 = vpop.f32.mrf.mxu0
      %v2805 = vpop.f32.mrf.mxu0
      %v2806 = vadd.f32 %v2645, %v2805
      %v2807 = vpop.f32.mrf.mxu0
      %2808 = vmatprep.mubr.bf16.mxu0 %v1548
      %2809 = vmatmul.mubr.bf16.gmra.mxu0 %v1500
      %v2810 = vpop.f32.mrf.mxu0
      %v2811 = vadd.f32 %v2650, %v2810
      %v2812 = vpop.f32.mrf.mxu0
      %v2813 = vpop.f32.mrf.mxu0
      %v2814 = vadd.f32 %v2653, %v2813
      %v2815 = vpop.f32.mrf.mxu0
      %2816 = vmatprep.mubr.bf16.mxu0 %v1549
      %2817 = vmatmul.mubr.bf16.gmra.mxu0 %v1501
      %v2818 = vpop.f32.mrf.mxu0
      %v2819 = vadd.f32 %v2658, %v2818
      %v2820 = vpop.f32.mrf.mxu0
      %v2821 = vpop.f32.mrf.mxu0
      %v2822 = vadd.f32 %v2661, %v2821
      %v2823 = vpop.f32.mrf.mxu0
      %2824 = vdwg.mxu0
      %2825 = vmatprep.subr.bf16.mxu0 0
      %2826 = vmatpush1.bf16.msra.mxu0 %v2108
      %2827 = vmatprep.subr.bf16.mxu0 0
      %2828 = vmatpush1.bf16.msra.mxu0 %v2107
      %2829 = vmatprep.subr.bf16.mxu0 0
      %2830 = vmatpush1.bf16.msra.mxu0 %v2106
      %2831 = vmatprep.subr.bf16.mxu0 0
      %2832 = vmatpush1.bf16.msra.mxu0 %v2105
      %2833 = vmatprep.subr.bf16.mxu0 0
      %2834 = vmatpush1.bf16.msra.mxu0 %v2104
      %2835 = vmatprep.subr.bf16.mxu0 0
      %2836 = vmatpush1.bf16.msra.mxu0 %v2103
      %2837 = vmatprep.subr.bf16.mxu0 0
      %2838 = vmatpush1.bf16.msra.mxu0 %v2102
      %2839 = vmatprep.subr.bf16.mxu0 0
      %2840 = vmatpush1.bf16.msra.mxu0 %v2101
      %2841 = vmatprep.subr.bf16.mxu0 0
      %2842 = vmatpush2.bf16.msra.mxu0 0
      %2843 = vmatprep.subr.bf16.mxu0 0
      %2844 = vmatpush2.bf16.msra.mxu0 0
      %2845 = vmatprep.subr.bf16.mxu0 0
      %2846 = vmatpush2.bf16.msra.mxu0 0
      %2847 = vmatprep.subr.bf16.mxu0 0
      %2848 = vmatpush2.bf16.msra.mxu0 0
      %2849 = vmatprep.subr.bf16.mxu0 0
      %2850 = vmatpush2.bf16.msra.mxu0 0
      %2851 = vmatprep.subr.bf16.mxu0 0
      %2852 = vmatpush2.bf16.msra.mxu0 0
      %2853 = vmatprep.subr.bf16.mxu0 0
      %2854 = vmatpush2.bf16.msra.mxu0 0
      %2855 = vmatprep.subr.bf16.mxu0 0
      %2856 = vmatpush2.bf16.msra.mxu0 0
      %2857 = vmatprep.mubr.bf16.mxu0 0
      %2858 = vmatmul.mubr.bf16.gmra.mxu0 %v1582
      %v2859 = vpop.f32.mrf.mxu0
      %v2860 = vadd.f32 %v2699, %v2859
      %v2861 = vpop.f32.mrf.mxu0
      %v2862 = vpop.f32.mrf.mxu0
      %v2863 = vadd.f32 %v2702, %v2862
      %v2864 = vpop.f32.mrf.mxu0
      %2865 = vmatprep.mubr.bf16.mxu0 0
      %2866 = vmatmul.mubr.bf16.gmra.mxu0 %v1583
      %v2867 = vpop.f32.mrf.mxu0
      %v2868 = vadd.f32 %v2707, %v2867
      %v2869 = vpop.f32.mrf.mxu0
      %v2870 = vpop.f32.mrf.mxu0
      %v2871 = vadd.f32 %v2710, %v2870
      %v2872 = vpop.f32.mrf.mxu0
      %2873 = vmatprep.mubr.bf16.mxu0 0
      %2874 = vmatmul.mubr.bf16.gmra.mxu0 %v1584
      %v2875 = vpop.f32.mrf.mxu0
      %v2876 = vadd.f32 %v2715, %v2875
      %v2877 = vpop.f32.mrf.mxu0
      %v2878 = vpop.f32.mrf.mxu0
      %v2879 = vadd.f32 %v2718, %v2878
      %v2880 = vpop.f32.mrf.mxu0
      %2881 = vmatprep.mubr.bf16.mxu0 0
      %2882 = vmatmul.mubr.bf16.gmra.mxu0 %v1585
      %v2883 = vpop.f32.mrf.mxu0
      %v2884 = vadd.f32 %v2723, %v2883
      %v2885 = vpop.f32.mrf.mxu0
      %v2886 = vpop.f32.mrf.mxu0
      %v2887 = vadd.f32 %v2726, %v2886
      %v2888 = vpop.f32.mrf.mxu0
      %2889 = vmatprep.mubr.bf16.mxu0 0
      %2890 = vmatmul.mubr.bf16.gmra.mxu0 %v1586
      %v2891 = vpop.f32.mrf.mxu0
      %v2892 = vadd.f32 %v2731, %v2891
      %v2893 = vpop.f32.mrf.mxu0
      %v2894 = vpop.f32.mrf.mxu0
      %v2895 = vadd.f32 %v2734, %v2894
      %v2896 = vpop.f32.mrf.mxu0
      %2897 = vmatprep.mubr.bf16.mxu0 0
      %2898 = vmatmul.mubr.bf16.gmra.mxu0 %v1587
      %v2899 = vpop.f32.mrf.mxu0
      %v2900 = vadd.f32 %v2739, %v2899
      %v2901 = vpop.f32.mrf.mxu0
      %v2902 = vpop.f32.mrf.mxu0
      %v2903 = vadd.f32 %v2742, %v2902
      %v2904 = vpop.f32.mrf.mxu0
      %2905 = vmatprep.mubr.bf16.mxu0 0
      %2906 = vmatmul.mubr.bf16.gmra.mxu0 %v1588
      %v2907 = vpop.f32.mrf.mxu0
      %v2908 = vadd.f32 %v2747, %v2907
      %v2909 = vpop.f32.mrf.mxu0
      %v2910 = vpop.f32.mrf.mxu0
      %v2911 = vadd.f32 %v2750, %v2910
      %v2912 = vpop.f32.mrf.mxu0
      %2913 = vmatprep.mubr.bf16.mxu0 0
      %2914 = vmatmul.mubr.bf16.gmra.mxu0 %v1589
      %v2915 = vpop.f32.mrf.mxu0
      %v2916 = vadd.f32 %v2755, %v2915
      %v2917 = vpop.f32.mrf.mxu0
      %v2918 = vpop.f32.mrf.mxu0
      %v2919 = vadd.f32 %v2758, %v2918
      %v2920 = vpop.f32.mrf.mxu0
      %2921 = vmatprep.mubr.bf16.mxu0 0
      %2922 = vmatmul.mubr.bf16.gmra.mxu0 %v1590
      %v2923 = vpop.f32.mrf.mxu0
      %v2924 = vadd.f32 %v2763, %v2923
      %v2925 = vpop.f32.mrf.mxu0
      %v2926 = vpop.f32.mrf.mxu0
      %v2927 = vadd.f32 %v2766, %v2926
      %v2928 = vpop.f32.mrf.mxu0
      %2929 = vmatprep.mubr.bf16.mxu0 0
      %2930 = vmatmul.mubr.bf16.gmra.mxu0 %v1591
      %v2931 = vpop.f32.mrf.mxu0
      %v2932 = vadd.f32 %v2771, %v2931
      %v2933 = vpop.f32.mrf.mxu0
      %v2934 = vpop.f32.mrf.mxu0
      %v2935 = vadd.f32 %v2774, %v2934
      %v2936 = vpop.f32.mrf.mxu0
      %2937 = vmatprep.mubr.bf16.mxu0 0
      %2938 = vmatmul.mubr.bf16.gmra.mxu0 %v1592
      %v2939 = vpop.f32.mrf.mxu0
      %v2940 = vadd.f32 %v2779, %v2939
      %v2941 = vpop.f32.mrf.mxu0
      %v2942 = vpop.f32.mrf.mxu0
      %v2943 = vadd.f32 %v2782, %v2942
      %v2944 = vpop.f32.mrf.mxu0
      %2945 = vmatprep.mubr.bf16.mxu0 0
      %2946 = vmatmul.mubr.bf16.gmra.mxu0 %v1593
      %v2947 = vpop.f32.mrf.mxu0
      %v2948 = vadd.f32 %v2787, %v2947
      %v2949 = vpop.f32.mrf.mxu0
      %v2950 = vpop.f32.mrf.mxu0
      %v2951 = vadd.f32 %v2790, %v2950
      %v2952 = vpop.f32.mrf.mxu0
      %2953 = vmatprep.mubr.bf16.mxu0 0
      %2954 = vmatmul.mubr.bf16.gmra.mxu0 %v1594
      %v2955 = vpop.f32.mrf.mxu0
      %v2956 = vadd.f32 %v2795, %v2955
      %v2957 = vpop.f32.mrf.mxu0
      %v2958 = vpop.f32.mrf.mxu0
      %v2959 = vadd.f32 %v2798, %v2958
      %v2960 = vpop.f32.mrf.mxu0
      %2961 = vmatprep.mubr.bf16.mxu0 0
      %2962 = vmatmul.mubr.bf16.gmra.mxu0 %v1595
      %v2963 = vpop.f32.mrf.mxu0
      %v2964 = vadd.f32 %v2803, %v2963
      %v2965 = vpop.f32.mrf.mxu0
      %v2966 = vpop.f32.mrf.mxu0
      %v2967 = vadd.f32 %v2806, %v2966
      %v2968 = vpop.f32.mrf.mxu0
      %2969 = vmatprep.mubr.bf16.mxu0 0
      %2970 = vmatmul.mubr.bf16.gmra.mxu0 %v1596
      %v2971 = vpop.f32.mrf.mxu0
      %v2972 = vadd.f32 %v2811, %v2971
      %v2973 = vpop.f32.mrf.mxu0
      %v2974 = vpop.f32.mrf.mxu0
      %v2975 = vadd.f32 %v2814, %v2974
      %v2976 = vpop.f32.mrf.mxu0
      %2977 = vmatprep.mubr.bf16.mxu0 0
      %2978 = vmatmul.mubr.bf16.gmra.mxu0 %v1597
      %v2979 = vpop.f32.mrf.mxu0
      %v2980 = vadd.f32 %v2819, %v2979
      %v2981 = vpop.f32.mrf.mxu0
      %v2982 = vpop.f32.mrf.mxu0
      %v2983 = vadd.f32 %v2822, %v2982
      %v2984 = vpop.f32.mrf.mxu0
      %2985 = vdwg.mxu0
      %v2986 = vmax.f32 %v2860, 0.0
      %v2987 = vmax.f32 %v2863, 0.0
      %v2988 = vmax.f32 %v2868, 0.0
      %v2989 = vmax.f32 %v2871, 0.0
      %v2990 = vmax.f32 %v2876, 0.0
      %v2991 = vmax.f32 %v2879, 0.0
      %v2992 = vmax.f32 %v2884, 0.0
      %v2993 = vmax.f32 %v2887, 0.0
      %v2994 = vmax.f32 %v2892, 0.0
      %v2995 = vmax.f32 %v2895, 0.0
      %v2996 = vmax.f32 %v2900, 0.0
      %v2997 = vmax.f32 %v2903, 0.0
      %v2998 = vmax.f32 %v2908, 0.0
      %v2999 = vmax.f32 %v2911, 0.0
      %v3000 = vmax.f32 %v2916, 0.0
      %v3001 = vmax.f32 %v2919, 0.0
      %v3002 = vmax.f32 %v2924, 0.0
      %v3003 = vmax.f32 %v2927, 0.0
      %v3004 = vmax.f32 %v2932, 0.0
      %v3005 = vmax.f32 %v2935, 0.0
      %v3006 = vmax.f32 %v2940, 0.0
      %v3007 = vmax.f32 %v2943, 0.0
      %v3008 = vmax.f32 %v2948, 0.0
      %v3009 = vmax.f32 %v2951, 0.0
      %v3010 = vmax.f32 %v2956, 0.0
      %v3011 = vmax.f32 %v2959, 0.0
      %v3012 = vmax.f32 %v2964, 0.0
      %v3013 = vmax.f32 %v2967, 0.0
      %v3014 = vmax.f32 %v2972, 0.0
      %v3015 = vmax.f32 %v2975, 0.0
      %v3016 = vmax.f32 %v2980, 0.0
      %v3017 = vmax.f32 %v2983, 0.0
      %v3018 = vld [vmem:[%s7] sm:$0x1]
      %v3020 = vlaneseq
      %v3021 = vshrl.u32 %v3020, 7
      %v3022 = vsub.s32 0, %v3021
      %v3023 = vrot.slane %v3018, %v3022
      %v3025 = vmul.f32 %v2986, %v3023
      %v3026 = vmul.f32 %v2987, %v3023
      %v3027 = vmul.f32 %v2988, %v3023
      %v3028 = vmul.f32 %v2989, %v3023
      %v3029 = vmul.f32 %v2990, %v3023
      %v3030 = vmul.f32 %v2991, %v3023
      %v3031 = vmul.f32 %v2992, %v3023
      %v3032 = vmul.f32 %v2993, %v3023
      %v3033 = vmul.f32 %v2994, %v3023
      %v3034 = vmul.f32 %v2995, %v3023
      %v3035 = vmul.f32 %v2996, %v3023
      %v3036 = vmul.f32 %v2997, %v3023
      %v3037 = vmul.f32 %v2998, %v3023
      %v3038 = vmul.f32 %v2999, %v3023
      %v3039 = vmul.f32 %v3000, %v3023
      %v3040 = vmul.f32 %v3001, %v3023
      %v3041 = vmul.f32 %v3002, %v3023
      %v3042 = vmul.f32 %v3003, %v3023
      %v3043 = vmul.f32 %v3004, %v3023
      %v3044 = vmul.f32 %v3005, %v3023
      %v3045 = vmul.f32 %v3006, %v3023
      %v3046 = vmul.f32 %v3007, %v3023
      %v3047 = vmul.f32 %v3008, %v3023
      %v3048 = vmul.f32 %v3009, %v3023
      %v3049 = vmul.f32 %v3010, %v3023
      %v3050 = vmul.f32 %v3011, %v3023
      %v3051 = vmul.f32 %v3012, %v3023
      %v3052 = vmul.f32 %v3013, %v3023
      %v3053 = vmul.f32 %v3014, %v3023
      %v3054 = vmul.f32 %v3015, %v3023
      %v3055 = vmul.f32 %v3016, %v3023
      %v3056 = vmul.f32 %v3017, %v3023
      %3057 = vadd.xlane.f32.xlu0 %v3025
      %v3058 = vpop.xlane.xlu0 %3057
      %3059 = vadd.xlane.f32.xlu0 %v3026
      %v3060 = vpop.xlane.xlu0 %3059
      %3061 = vadd.xlane.f32.xlu0 %v3027
      %v3062 = vpop.xlane.xlu0 %3061
      %3063 = vadd.xlane.f32.xlu0 %v3028
      %v3064 = vpop.xlane.xlu0 %3063
      %3065 = vadd.xlane.f32.xlu0 %v3029
      %v3066 = vpop.xlane.xlu0 %3065
      %3067 = vadd.xlane.f32.xlu0 %v3030
      %v3068 = vpop.xlane.xlu0 %3067
      %3069 = vadd.xlane.f32.xlu0 %v3031
      %v3070 = vpop.xlane.xlu0 %3069
      %3071 = vadd.xlane.f32.xlu0 %v3032
      %v3072 = vpop.xlane.xlu0 %3071
      %3073 = vadd.xlane.f32.xlu0 %v3033
      %v3074 = vpop.xlane.xlu0 %3073
      %3075 = vadd.xlane.f32.xlu0 %v3034
      %v3076 = vpop.xlane.xlu0 %3075
      %3077 = vadd.xlane.f32.xlu0 %v3035
      %v3078 = vpop.xlane.xlu0 %3077
      %3079 = vadd.xlane.f32.xlu0 %v3036
      %v3080 = vpop.xlane.xlu0 %3079
      %3081 = vadd.xlane.f32.xlu0 %v3037
      %v3082 = vpop.xlane.xlu0 %3081
      %3083 = vadd.xlane.f32.xlu0 %v3038
      %v3084 = vpop.xlane.xlu0 %3083
      %3085 = vadd.xlane.f32.xlu0 %v3039
      %v3086 = vpop.xlane.xlu0 %3085
      %3087 = vadd.xlane.f32.xlu0 %v3040
      %v3088 = vpop.xlane.xlu0 %3087
      %3089 = vadd.xlane.f32.xlu0 %v3041
      %v3090 = vpop.xlane.xlu0 %3089
      %3091 = vadd.xlane.f32.xlu0 %v3042
      %v3092 = vpop.xlane.xlu0 %3091
      %3093 = vadd.xlane.f32.xlu0 %v3043
      %v3094 = vpop.xlane.xlu0 %3093
      %3095 = vadd.xlane.f32.xlu0 %v3044
      %v3096 = vpop.xlane.xlu0 %3095
      %3097 = vadd.xlane.f32.xlu0 %v3045
      %v3098 = vpop.xlane.xlu0 %3097
      %3099 = vadd.xlane.f32.xlu0 %v3046
      %v3100 = vpop.xlane.xlu0 %3099
      %3101 = vadd.xlane.f32.xlu0 %v3047
      %v3102 = vpop.xlane.xlu0 %3101
      %3103 = vadd.xlane.f32.xlu0 %v3048
      %v3104 = vpop.xlane.xlu0 %3103
      %3105 = vadd.xlane.f32.xlu0 %v3049
      %v3106 = vpop.xlane.xlu0 %3105
      %3107 = vadd.xlane.f32.xlu0 %v3050
      %v3108 = vpop.xlane.xlu0 %3107
      %3109 = vadd.xlane.f32.xlu0 %v3051
      %v3110 = vpop.xlane.xlu0 %3109
      %3111 = vadd.xlane.f32.xlu0 %v3052
      %v3112 = vpop.xlane.xlu0 %3111
      %3113 = vadd.xlane.f32.xlu0 %v3053
      %v3114 = vpop.xlane.xlu0 %3113
      %3115 = vadd.xlane.f32.xlu0 %v3054
      %v3116 = vpop.xlane.xlu0 %3115
      %3117 = vadd.xlane.f32.xlu0 %v3055
      %v3118 = vpop.xlane.xlu0 %3117
      %3119 = vadd.xlane.f32.xlu0 %v3056
      %v3120 = vpop.xlane.xlu0 %3119
      %v3121 = vld [vmem:[#allocation3] sm:$0x1]
      %v3123 = vlaneseq
      %v3124 = vshrl.u32 %v3123, 7
      %v3125 = vsub.s32 0, %v3124
      %v3126 = vrot.slane %v3121, %v3125
      %v3128 = vadd.f32 %v3058, %v3126
      %v3129 = vadd.f32 %v3060, %v3126
      %v3130 = vadd.f32 %v3062, %v3126
      %v3131 = vadd.f32 %v3064, %v3126
      %v3132 = vadd.f32 %v3066, %v3126
      %v3133 = vadd.f32 %v3068, %v3126
      %v3134 = vadd.f32 %v3070, %v3126
      %v3135 = vadd.f32 %v3072, %v3126
      %v3136 = vadd.f32 %v3074, %v3126
      %v3137 = vadd.f32 %v3076, %v3126
      %v3138 = vadd.f32 %v3078, %v3126
      %v3139 = vadd.f32 %v3080, %v3126
      %v3140 = vadd.f32 %v3082, %v3126
      %v3141 = vadd.f32 %v3084, %v3126
      %v3142 = vadd.f32 %v3086, %v3126
      %v3143 = vadd.f32 %v3088, %v3126
      %v3144 = vadd.f32 %v3090, %v3126
      %v3145 = vadd.f32 %v3092, %v3126
      %v3146 = vadd.f32 %v3094, %v3126
      %v3147 = vadd.f32 %v3096, %v3126
      %v3148 = vadd.f32 %v3098, %v3126
      %v3149 = vadd.f32 %v3100, %v3126
      %v3150 = vadd.f32 %v3102, %v3126
      %v3151 = vadd.f32 %v3104, %v3126
      %v3152 = vadd.f32 %v3106, %v3126
      %v3153 = vadd.f32 %v3108, %v3126
      %v3154 = vadd.f32 %v3110, %v3126
      %v3155 = vadd.f32 %v3112, %v3126
      %v3156 = vadd.f32 %v3114, %v3126
      %v3157 = vadd.f32 %v3116, %v3126
      %v3158 = vadd.f32 %v3118, %v3126
      %v3159 = vadd.f32 %v3120, %v3126
      %v3160 = vmax.f32 %v3128, 0.0
      %v3161 = vmax.f32 %v3129, 0.0
      %v3162 = vmax.f32 %v3130, 0.0
      %v3163 = vmax.f32 %v3131, 0.0
      %v3164 = vmax.f32 %v3132, 0.0
      %v3165 = vmax.f32 %v3133, 0.0
      %v3166 = vmax.f32 %v3134, 0.0
      %v3167 = vmax.f32 %v3135, 0.0
      %v3168 = vmax.f32 %v3136, 0.0
      %v3169 = vmax.f32 %v3137, 0.0
      %v3170 = vmax.f32 %v3138, 0.0
      %v3171 = vmax.f32 %v3139, 0.0
      %v3172 = vmax.f32 %v3140, 0.0
      %v3173 = vmax.f32 %v3141, 0.0
      %v3174 = vmax.f32 %v3142, 0.0
      %v3175 = vmax.f32 %v3143, 0.0
      %v3176 = vmax.f32 %v3144, 0.0
      %v3177 = vmax.f32 %v3145, 0.0
      %v3178 = vmax.f32 %v3146, 0.0
      %v3179 = vmax.f32 %v3147, 0.0
      %v3180 = vmax.f32 %v3148, 0.0
      %v3181 = vmax.f32 %v3149, 0.0
      %v3182 = vmax.f32 %v3150, 0.0
      %v3183 = vmax.f32 %v3151, 0.0
      %v3184 = vmax.f32 %v3152, 0.0
      %v3185 = vmax.f32 %v3153, 0.0
      %v3186 = vmax.f32 %v3154, 0.0
      %v3187 = vmax.f32 %v3155, 0.0
      %v3188 = vmax.f32 %v3156, 0.0
      %v3189 = vmax.f32 %v3157, 0.0
      %v3190 = vmax.f32 %v3158, 0.0
      %v3191 = vmax.f32 %v3159, 0.0
      %v3192 = vld [vmem:[%s9] sm:$0xff]
      %v3193 = vld [vmem:[%s9 + $0x8] sm:$0xff]
      %v3194 = vld [vmem:[%s9 + $0x10] sm:$0xff]
      %v3195 = vld [vmem:[%s9 + $0x18] sm:$0xff]
      %v3196 = vld [vmem:[%s9 + $0x20] sm:$0xff]
      %v3197 = vld [vmem:[%s9 + $0x28] sm:$0xff]
      %v3198 = vld [vmem:[%s9 + $0x30] sm:$0xff]
      %v3199 = vld [vmem:[%s9 + $0x38] sm:$0xff]
      %v3200 = vld [vmem:[%s9 + $0x40] sm:$0xff]
      %v3201 = vld [vmem:[%s9 + $0x48] sm:$0xff]
      %v3202 = vld [vmem:[%s9 + $0x50] sm:$0xff]
      %v3203 = vld [vmem:[%s9 + $0x58] sm:$0xff]
      %v3204 = vld [vmem:[%s9 + $0x60] sm:$0xff]
      %v3205 = vld [vmem:[%s9 + $0x68] sm:$0xff]
      %v3206 = vld [vmem:[%s9 + $0x70] sm:$0xff]
      %v3207 = vld [vmem:[%s9 + $0x78] sm:$0xff]
      %v3208 = vld [vmem:[%s9 + $0x80] sm:$0xff]
      %v3209 = vld [vmem:[%s9 + $0x88] sm:$0xff]
      %v3210 = vld [vmem:[%s9 + $0x90] sm:$0xff]
      %v3211 = vld [vmem:[%s9 + $0x98] sm:$0xff]
      %v3212 = vld [vmem:[%s9 + $0xa0] sm:$0xff]
      %v3213 = vld [vmem:[%s9 + $0xa8] sm:$0xff]
      %v3214 = vld [vmem:[%s9 + $0xb0] sm:$0xff]
      %v3215 = vld [vmem:[%s9 + $0xb8] sm:$0xff]
      %v3216 = vld [vmem:[%s9 + $0xc0] sm:$0xff]
      %v3217 = vld [vmem:[%s9 + $0xc8] sm:$0xff]
      %v3218 = vld [vmem:[%s9 + $0xd0] sm:$0xff]
      %v3219 = vld [vmem:[%s9 + $0xd8] sm:$0xff]
      %v3220 = vld [vmem:[%s9 + $0xe0] sm:$0xff]
      %v3221 = vld [vmem:[%s9 + $0xe8] sm:$0xff]
      %v3222 = vld [vmem:[%s9 + $0xf0] sm:$0xff]
      %v3223 = vld [vmem:[%s9 + $0xf8] sm:$0xff]
      %v3224 = vmul.f32 %v3160, %v3192
      %v3225 = vmul.f32 %v3161, %v3193
      %v3226 = vmul.f32 %v3162, %v3194
      %v3227 = vmul.f32 %v3163, %v3195
      %v3228 = vmul.f32 %v3164, %v3196
      %v3229 = vmul.f32 %v3165, %v3197
      %v3230 = vmul.f32 %v3166, %v3198
      %v3231 = vmul.f32 %v3167, %v3199
      %v3232 = vmul.f32 %v3168, %v3200
      %v3233 = vmul.f32 %v3169, %v3201
      %v3234 = vmul.f32 %v3170, %v3202
      %v3235 = vmul.f32 %v3171, %v3203
      %v3236 = vmul.f32 %v3172, %v3204
      %v3237 = vmul.f32 %v3173, %v3205
      %v3238 = vmul.f32 %v3174, %v3206
      %v3239 = vmul.f32 %v3175, %v3207
      %v3240 = vmul.f32 %v3176, %v3208
      %v3241 = vmul.f32 %v3177, %v3209
      %v3242 = vmul.f32 %v3178, %v3210
      %v3243 = vmul.f32 %v3179, %v3211
      %v3244 = vmul.f32 %v3180, %v3212
      %v3245 = vmul.f32 %v3181, %v3213
      %v3246 = vmul.f32 %v3182, %v3214
      %v3247 = vmul.f32 %v3183, %v3215
      %v3248 = vmul.f32 %v3184, %v3216
      %v3249 = vmul.f32 %v3185, %v3217
      %v3250 = vmul.f32 %v3186, %v3218
      %v3251 = vmul.f32 %v3187, %v3219
      %v3252 = vmul.f32 %v3188, %v3220
      %v3253 = vmul.f32 %v3189, %v3221
      %v3254 = vmul.f32 %v3190, %v3222
      %v3255 = vmul.f32 %v3191, %v3223
      %vm3256 = vcmask 7168
      %v3257 = vsel %vm3256, %v3224, 0.0
      %v3258 = vsel %vm3256, %v3225, 0.0
      %v3259 = vadd.f32 %v3257, %v3258
      %v3260 = vsel %vm3256, %v3226, 0.0
      %v3261 = vadd.f32 %v3259, %v3260
      %v3262 = vsel %vm3256, %v3227, 0.0
      %v3263 = vadd.f32 %v3261, %v3262
      %v3264 = vsel %vm3256, %v3228, 0.0
      %v3265 = vadd.f32 %v3263, %v3264
      %v3266 = vsel %vm3256, %v3229, 0.0
      %v3267 = vadd.f32 %v3265, %v3266
      %v3268 = vsel %vm3256, %v3230, 0.0
      %v3269 = vadd.f32 %v3267, %v3268
      %v3270 = vsel %vm3256, %v3231, 0.0
      %v3271 = vadd.f32 %v3269, %v3270
      %v3272 = vsel %vm3256, %v3232, 0.0
      %v3273 = vadd.f32 %v3271, %v3272
      %v3274 = vsel %vm3256, %v3233, 0.0
      %v3275 = vadd.f32 %v3273, %v3274
      %v3276 = vsel %vm3256, %v3234, 0.0
      %v3277 = vadd.f32 %v3275, %v3276
      %v3278 = vsel %vm3256, %v3235, 0.0
      %v3279 = vadd.f32 %v3277, %v3278
      %v3280 = vsel %vm3256, %v3236, 0.0
      %v3281 = vadd.f32 %v3279, %v3280
      %v3282 = vsel %vm3256, %v3237, 0.0
      %v3283 = vadd.f32 %v3281, %v3282
      %v3284 = vsel %vm3256, %v3238, 0.0
      %v3285 = vadd.f32 %v3283, %v3284
      %v3286 = vsel %vm3256, %v3239, 0.0
      %v3287 = vadd.f32 %v3285, %v3286
      %v3288 = vsel %vm3256, %v3240, 0.0
      %v3289 = vadd.f32 %v3287, %v3288
      %v3290 = vsel %vm3256, %v3241, 0.0
      %v3291 = vadd.f32 %v3289, %v3290
      %v3292 = vsel %vm3256, %v3242, 0.0
      %v3293 = vadd.f32 %v3291, %v3292
      %v3294 = vsel %vm3256, %v3243, 0.0
      %v3295 = vadd.f32 %v3293, %v3294
      %v3296 = vsel %vm3256, %v3244, 0.0
      %v3297 = vadd.f32 %v3295, %v3296
      %v3298 = vsel %vm3256, %v3245, 0.0
      %v3299 = vadd.f32 %v3297, %v3298
      %v3300 = vsel %vm3256, %v3246, 0.0
      %v3301 = vadd.f32 %v3299, %v3300
      %v3302 = vsel %vm3256, %v3247, 0.0
      %v3303 = vadd.f32 %v3301, %v3302
      %v3304 = vsel %vm3256, %v3248, 0.0
      %v3305 = vadd.f32 %v3303, %v3304
      %v3306 = vsel %vm3256, %v3249, 0.0
      %v3307 = vadd.f32 %v3305, %v3306
      %v3308 = vsel %vm3256, %v3250, 0.0
      %v3309 = vadd.f32 %v3307, %v3308
      %v3310 = vsel %vm3256, %v3251, 0.0
      %v3311 = vadd.f32 %v3309, %v3310
      %v3312 = vsel %vm3256, %v3252, 0.0
      %v3313 = vadd.f32 %v3311, %v3312
      %v3314 = vsel %vm3256, %v3253, 0.0
      %v3315 = vadd.f32 %v3313, %v3314
      %v3316 = vsel %vm3256, %v3254, 0.0
      %v3317 = vadd.f32 %v3315, %v3316
      %v3318 = vsel %vm3256, %v3255, 0.0
      %v3319 = vadd.f32 %v3317, %v3318
      %v3320 = vrot.slane %v3319, 4
      %v3321 = vadd.f32 %v3319, %v3320
      %v3322 = vrot.slane %v3321, 2
      %v3323 = vadd.f32 %v3321, %v3322
      %v3324 = vrot.slane %v3323, 1
      %v3325 = vadd.f32 %v3323, %v3324
      %v3326 = vld [vmem:[#allocation4] sm:$0x1]
      %v3327 = vadd.f32 %v3325, %v3326
      %vm3328 = vcmask 0
      %3329 = vst.msk [vmem:[%s386] sm:$0x1] %vm3328, %v3327
      %p3330 = scmp.lt.s32.totalorder %s26, 1
      %s3331 = scalar_select %p3330, %s26, 1
      %s3332 = scalar_lea.vmem %s11, %s3331
      // Predicated region
      $region65: #{value_forward.1} parent=63 // pred_check
        %p3333 = pneg %p280
      $region66: #{value_forward.1} parent=63 // pred_check_branch
        %3335 = sbr.rel (%p3333) target = $region68
      $region67: #{value_forward.1} parent=63 // pred_region
        _
      $region68: #{value_forward.1} parent=63 // pred_fallthru
        _
    $region64: #{value_forward.1} parent=5 // pred_fallthru
      _
    %p3336 = scmp.le.s32.totalorder 2, %s21
    // Predicated region
    $region69: #{value_forward.1} parent=5 // pred_check
      %p3337 = pneg %p3336
    $region70: #{value_forward.1} parent=5 // pred_check_branch
      %3339 = sbr.rel (%p3337) target = $region72
    $region71: #{value_forward.1} parent=5 // pred_region
      %s3340 = ssub.s32 %s21, 2
      // Predicated region
      $region73: #{value_forward.1} parent=71 // pred_check
        %p3341 = pneg %p286
      $region74: #{value_forward.1} parent=71 // pred_check_branch
        %3343 = sbr.rel (%p3341) target = $region76
      $region75: #{value_forward.1} parent=71 // pred_region
        %p3344 = scmp.lt.s32.totalorder %s27, 1
        %s3345 = scalar_select %p3344, %s27, 1
        %s3346 = scalar_lea.vmem %s11, %s3345
      $region76: #{value_forward.1} parent=71 // pred_fallthru
        _
    $region72: #{value_forward.1} parent=5 // pred_fallthru
      _
  $region6: #{value_forward.1} parent=0 // loop_footer
    %s25 = sadd.s32 1, %s21
  $region7: #{value_forward.1} parent=0 // loop_footer_branch
    %20 = sbr.rel target = $region3
  $region8: #{value_forward.1} parent=0 // loop_exit
    _

</llo_original>
